<compile_context>
chip_gen: v5e
topology: v5e:2x2
jax: 0.10.0
libtpu: 0.0.40
codegen_flags: <defaults>
</compile_context>

<pallas_src>
import functools

import jax
import jax.numpy as jnp
from jax.experimental import pallas as pl
from jax.experimental.pallas import tpu as pltpu


# ----------------------------- fused Pallas kernel -------------------------- #

def _fused_bottleneck_kernel(H, W, has_proj,
                             x_ref, w1_ref, b1_ref, w2_ref, b2_ref,
                             w3_ref, b3_ref, *rest):
    """Full bottleneck block for one image; all intermediates stay on-chip."""
    if has_proj:
        wsc_ref, bsc_ref, o_ref = rest
    else:
        (o_ref,) = rest

    hw = H * W
    x = x_ref[0].astype(jnp.float32)                       # (H*W, Cin)

    # conv1 (1x1, BN scale pre-folded into w1) + bias + ReLU
    h1 = jnp.dot(x, w1_ref[...], preferred_element_type=jnp.float32)
    h1 = jnp.maximum(h1 + b1_ref[...], 0.0)                # (H*W, Cm)
    cm = h1.shape[1]

    # conv2 (3x3, pad=1) as 9 shifted taps of h1 held on-chip (no HBM im2col).
    # tap(dy,dx)[m] = h1[m + (dy-1)*W + (dx-1)] if the source pixel is inside
    # the image, else 0.  Vertical out-of-range rows fall into the zero fill of
    # the shift; horizontal wrap-around across rows is removed by a column mask.
    col = jax.lax.broadcasted_iota(jnp.int32, (hw, 1), 0) % W   # hoisted once
    taps = []
    for dy in range(3):
        for dx in range(3):
            off = (dy - 1) * W + (dx - 1)
            if off > 0:
                shifted = jnp.concatenate(
                    [h1[off:, :], jnp.zeros((off, cm), jnp.float32)], axis=0)
            elif off < 0:
                shifted = jnp.concatenate(
                    [jnp.zeros((-off, cm), jnp.float32), h1[:off, :]], axis=0)
            else:
                shifted = h1
            ok = ((col + (dx - 1)) >= 0) & ((col + (dx - 1)) < W)
            taps.append(jnp.where(ok, shifted, 0.0))
    # One big-K matmul feeds the MXU better than 9 tiny K=Cm matmuls.
    patches = jnp.concatenate(taps, axis=1)                # (H*W, 9*Cm)
    h2 = jnp.dot(patches, w2_ref[...], preferred_element_type=jnp.float32)
    h2 = jnp.maximum(h2 + b2_ref[...], 0.0)                # (H*W, Cm)

    # conv3 (1x1) + bias
    main = jnp.dot(h2, w3_ref[...], preferred_element_type=jnp.float32)
    main = main + b3_ref[...]                              # (H*W, Cout)

    # shortcut (projection or identity) + residual add + ReLU, all in f32.
    if has_proj:
        sc = jnp.dot(x, wsc_ref[...], preferred_element_type=jnp.float32)
        sc = sc + bsc_ref[...]
    else:
        sc = x                                             # Cin == Cout here
    # Note: for real ResNet widths (Cout >= 128) this store is lane-dense.
    o_ref[0] = jnp.maximum(main + sc, 0.0).astype(o_ref.dtype)


# ------------------------------ pallas_call wrapper ------------------------- #

def _fused_block_call(x_rows, kp, H, W, has_proj):
    """x_rows: (N, H*W, Cin) NHWC-flattened input; returns (N, H*W, Cout)."""
    n, hw, cin = x_rows.shape
    cout = kp["w3"].shape[1]

    def row_spec(c):
        return pl.BlockSpec((1, hw, c), lambda b: (b, 0, 0))

    def full_spec(arr):
        return pl.BlockSpec(arr.shape, lambda b, nd=arr.ndim: (0,) * nd)

    operands = [x_rows, kp["w1"], kp["b1"], kp["w2"], kp["b2"],
                kp["w3"], kp["b3"]]
    in_specs = [row_spec(cin),
                full_spec(kp["w1"]), full_spec(kp["b1"]),
                full_spec(kp["w2"]), full_spec(kp["b2"]),
                full_spec(kp["w3"]), full_spec(kp["b3"])]
    if has_proj:
        operands += [kp["wsc"], kp["bsc"]]
        in_specs += [full_spec(kp["wsc"]), full_spec(kp["bsc"])]

    kernel = functools.partial(_fused_bottleneck_kernel, H, W, has_proj)
    return pl.pallas_call(
        kernel,
        out_shape=jax.ShapeDtypeStruct((n, hw, cout), x_rows.dtype),
        grid=(n,),                               # one image per grid step
        in_specs=in_specs,
        out_specs=row_spec(cout),
        compiler_params=pltpu.CompilerParams(
            # parallel batch axis -> v7x's two TensorCores split the grid;
            # explicit VMEM budget is safe on 64 MiB (v7x) and 128 MiB chips.
            dimension_semantics=("parallel",),
            vmem_limit_bytes=32 * 1024 * 1024),
    )(*operands)


@functools.partial(jax.jit, static_argnames=("stride",))
def residual_block_forward(x_nchw, kp, stride=1):
    """Bottleneck residual block forward; input/output are NCHW like PyTorch."""
    n, cin, h, w = x_nchw.shape
    x = jnp.transpose(x_nchw, (0, 2, 3, 1)).reshape(n, h * w, cin)   # NHWC rows
    has_proj = "wsc" in kp
    cout = kp["w3"].shape[1]

    out_rows = _fused_block_call(x, kp, h, w, has_proj)    # (N, H*W, Cout)
    out = out_rows.reshape(n, h, w, cout)
    if stride != 1:
        # 1x1 convs / BN / add / ReLU commute with spatial subsampling, and a
        # stride-s 3x3 conv equals the stride-1 conv sampled at (s*i, s*j), so
        # subsampling the full-resolution block output is exact.
        out = out[:, ::stride, ::stride, :]
    return jnp.transpose(out, (0, 3, 1, 2))                # back to NCHW


# --------------------------- parameter construction ------------------------- #

def make_params(key, in_channels, out_channels, stride, expansion=4, eps=1e-5):
    cm = out_channels
    cout = expansion * out_channels
    need_proj = (stride != 1) or (in_channels != cout)
    ks = jax.random.split(key, 8)

    # PyTorch-layout conv weights (O, I, kh, kw), deterministic synthetic init.
    w1_t = 0.3 * jax.random.normal(ks[0], (cm, in_channels, 1, 1), jnp.float32)
    w2_t = 0.2 * jax.random.normal(ks[1], (cm, cm, 3, 3), jnp.float32)
    w3_t = 0.3 * jax.random.normal(ks[2], (cout, cm, 1, 1), jnp.float32)
    wsc_t = (0.3 * jax.random.normal(ks[3], (cout, in_channels, 1, 1), jnp.float32)
             if need_proj else None)

    def bn_params(k, c):
        a, b, c_, d = jax.random.split(k, 4)
        gamma = 1.0 + 0.1 * jax.random.normal(a, (c,), jnp.float32)
        beta = 0.1 * jax.random.normal(b, (c,), jnp.float32)
        mean = 0.05 * jax.random.normal(c_, (c,), jnp.float32)
        var = 1.0 + 0.1 * jax.random.uniform(d, (c,), jnp.float32)
        return gamma, beta, mean, var

    bn1 = bn_params(ks[4], cm)
    bn2 = bn_params(ks[5], cm)
    bn3 = bn_params(ks[6], cout)
    bnsc = bn_params(ks[7], cout) if need_proj else None

    def fold(bn):
        g, b, m, v = bn
        scale = g / jnp.sqrt(v + eps)
        bias = b - m * scale
        return scale, bias

    s1, b1 = fold(bn1)
    s2, b2 = fold(bn2)
    s3, b3 = fold(bn3)

    # BN scale is folded into the output-channel columns of every conv weight;
    # only the bias survives into the kernel (one fewer VPU mul + broadcast).
    kp = {
        "w1": jnp.transpose(w1_t[:, :, 0, 0]) * s1[None, :],              # (Cin, Cm)
        "b1": b1[None, :],
        "w2": (jnp.transpose(w2_t, (2, 3, 1, 0)).reshape(9 * cm, cm)
               * s2[None, :]),                                            # (9*Cm, Cm)
        "b2": b2[None, :],
        "w3": jnp.transpose(w3_t[:, :, 0, 0]) * s3[None, :],              # (Cm, Cout)
        "b3": b3[None, :],
    }
    if need_proj:
        ssc, bsc = fold(bnsc)
        kp["wsc"] = jnp.transpose(wsc_t[:, :, 0, 0]) * ssc[None, :]       # (Cin, Cout)
        kp["bsc"] = bsc[None, :]

    torch_p = {"w1": w1_t, "w2": w2_t, "w3": w3_t, "wsc": wsc_t,
               "bn1": bn1, "bn2": bn2, "bn3": bn3, "bnsc": bnsc}
    return kp, torch_p


# --------------------------- pure-JAX reference ------------------------------ #

def reference_forward(x, tp, stride, eps=1e-5):
    def bn(y, p):
        g, b, m, v = p
        return ((y - m[None, :, None, None]) / jnp.sqrt(v + eps)[None, :, None, None]
                * g[None, :, None, None] + b[None, :, None, None])

    def conv(y, w, s, pad):
        return jax.lax.conv_general_dilated(
            y, w, (s, s), [(pad, pad), (pad, pad)],
            dimension_numbers=("NCHW", "OIHW", "NCHW"),
            precision=jax.lax.Precision.HIGHEST)

    h = jax.nn.relu(bn(conv(x, tp["w1"], 1, 0), tp["bn1"]))
    h = jax.nn.relu(bn(conv(h, tp["w2"], stride, 1), tp["bn2"]))
    h = bn(conv(h, tp["w3"], 1, 0), tp["bn3"])
    if tp["wsc"] is not None:
        sc = bn(conv(x, tp["wsc"], stride, 0), tp["bnsc"])
    else:
        sc = x
    return jax.nn.relu(h + sc)


# ----------------------------------- main ------------------------------------ #

if __name__ == "__main__":
    key = jax.random.PRNGKey(0)
    k_x, k_p, k_x2, k_p2, k_x3, k_p3 = jax.random.split(key, 6)

    # Case 1: projection shortcut (Cin != expansion*out_channels), stride 1.
    N, Cin, H, W = 2, 4, 16, 16
    out_channels, stride = 4, 1                  # block output channels = 16
    x = jax.random.normal(k_x, (N, Cin, H, W), jnp.float32)
    kp, tp = make_params(k_p, Cin, out_channels, stride)
    out = jax.block_until_ready(residual_block_forward(x, kp, stride=stride))
    ref = reference_forward(x, tp, stride)
    assert out.shape == ref.shape, (out.shape, ref.shape)
    assert bool(jnp.allclose(out, ref, rtol=2e-2, atol=2e-2)), "case1 mismatch"

    # Case 2: identity shortcut (Cin == expansion*out_channels), stride 1.
    x2 = jax.random.normal(k_x2, (2, 16, 16, 16), jnp.float32)
    kp2, tp2 = make_params(k_p2, 16, 4, 1)
    out2 = jax.block_until_ready(residual_block_forward(x2, kp2, stride=1))
    ref2 = reference_forward(x2, tp2, 1)
    assert out2.shape == ref2.shape, (out2.shape, ref2.shape)
    assert bool(jnp.allclose(out2, ref2, rtol=2e-2, atol=2e-2)), "case2 mismatch"

    # Case 3: projection shortcut with stride 2.
    x3 = jax.random.normal(k_x3, (2, 4, 16, 16), jnp.float32)
    kp3, tp3 = make_params(k_p3, 4, 4, 2)
    out3 = jax.block_until_ready(residual_block_forward(x3, kp3, stride=2))
    ref3 = reference_forward(x3, tp3, 2)
    assert out3.shape == ref3.shape, (out3.shape, ref3.shape)
    assert bool(jnp.allclose(out3, ref3, rtol=2e-2, atol=2e-2)), "case3 mismatch"

    print("KERNEL_OK")
</pallas_src>

<mosaic_0001>
module attributes {stable_mosaic.version = 11 : i64} {
  func.func @_fused_bottleneck_kernel(%arg0: i32, %arg1: memref<1x256x4xf32, #tpu.memory_space<vmem>>, %arg2: memref<4x4xf32, #tpu.memory_space<vmem>>, %arg3: memref<1x4xf32, #tpu.memory_space<vmem>>, %arg4: memref<36x4xf32, #tpu.memory_space<vmem>>, %arg5: memref<1x4xf32, #tpu.memory_space<vmem>>, %arg6: memref<4x16xf32, #tpu.memory_space<vmem>>, %arg7: memref<1x16xf32, #tpu.memory_space<vmem>>, %arg8: memref<4x16xf32, #tpu.memory_space<vmem>>, %arg9: memref<1x16xf32, #tpu.memory_space<vmem>>, %arg10: memref<1x256x16xf32, #tpu.memory_space<vmem>>) attributes {dimension_semantics = [#tpu.dimension_semantics<parallel>], iteration_bounds = array<i64: 2>, scalar_prefetch = 0 : i64, scratch_operands = 0 : i64, tpu.core_type = #tpu.core_type<tc>, window_params = [{transform_indices = @transform_0, window_bounds = array<i64: 1, 256, 4>}, {pipeline_mode = #tpu.pipeline_mode<synchronous>, transform_indices = @transform_1, window_bounds = array<i64: 4, 4>}, {pipeline_mode = #tpu.pipeline_mode<synchronous>, transform_indices = @transform_2, window_bounds = array<i64: 1, 4>}, {pipeline_mode = #tpu.pipeline_mode<synchronous>, transform_indices = @transform_3, window_bounds = array<i64: 36, 4>}, {pipeline_mode = #tpu.pipeline_mode<synchronous>, transform_indices = @transform_4, window_bounds = array<i64: 1, 4>}, {pipeline_mode = #tpu.pipeline_mode<synchronous>, transform_indices = @transform_5, window_bounds = array<i64: 4, 16>}, {pipeline_mode = #tpu.pipeline_mode<synchronous>, transform_indices = @transform_6, window_bounds = array<i64: 1, 16>}, {pipeline_mode = #tpu.pipeline_mode<synchronous>, transform_indices = @transform_7, window_bounds = array<i64: 4, 16>}, {pipeline_mode = #tpu.pipeline_mode<synchronous>, transform_indices = @transform_8, window_bounds = array<i64: 1, 16>}, {transform_indices = @transform_9, window_bounds = array<i64: 1, 256, 16>}]} {
    %c0 = arith.constant 0 : index
    %c0_0 = arith.constant 0 : index
    %c0_1 = arith.constant 0 : index
    %0 = vector.load %arg1[%c0, %c0_0, %c0_1] : memref<1x256x4xf32, #tpu.memory_space<vmem>>, vector<1x256x4xf32>
    %1 = vector.shape_cast %0 : vector<1x256x4xf32> to vector<256x4xf32>
    %c0_2 = arith.constant 0 : index
    %c0_3 = arith.constant 0 : index
    %2 = vector.load %arg2[%c0_2, %c0_3] : memref<4x4xf32, #tpu.memory_space<vmem>>, vector<4x4xf32>
    %cst = arith.constant dense<0.000000e+00> : vector<256x4xf32>
    %3 = tpu.matmul %1, %2, %cst {dimension_numbers = #tpu.dot_dimension_numbers<[1], [0], [0], [1], [0, 0, 1, 1], [], []>} : vector<256x4xf32>, vector<4x4xf32>, vector<256x4xf32> -> vector<256x4xf32>
    %c0_4 = arith.constant 0 : index
    %c0_5 = arith.constant 0 : index
    %4 = vector.load %arg3[%c0_4, %c0_5] : memref<1x4xf32, #tpu.memory_space<vmem>>, vector<1x4xf32>
    %5 = vector.broadcast %4 : vector<1x4xf32> to vector<256x4xf32>
    %6 = arith.addf %3, %5 : vector<256x4xf32>
    %cst_6 = arith.constant 0.000000e+00 : f32
    %7 = vector.broadcast %cst_6 : f32 to vector<256x4xf32>
    %8 = arith.maximumf %6, %7 : vector<256x4xf32>
    %9 = tpu.iota {dimensions = array<i32: 0>} : vector<256x1xi32>
    %c16_i32 = arith.constant 16 : i32
    %c0_i32 = arith.constant 0 : i32
    %10 = arith.cmpi eq, %c16_i32, %c0_i32 : i32
    %c1_i32 = arith.constant 1 : i32
    %11 = arith.select %10, %c1_i32, %c16_i32 : i32
    %12 = vector.broadcast %11 : i32 to vector<256x1xi32>
    %13 = arith.remsi %9, %12 : vector<256x1xi32>
    %c0_i32_7 = arith.constant 0 : i32
    %14 = vector.broadcast %c0_i32_7 : i32 to vector<256x1xi32>
    %15 = arith.cmpi ne, %13, %14 : vector<256x1xi32>
    %c0_i32_8 = arith.constant 0 : i32
    %16 = vector.broadcast %c0_i32_8 : i32 to vector<256x1xi32>
    %17 = arith.cmpi slt, %13, %16 : vector<256x1xi32>
    %c0_i32_9 = arith.constant 0 : i32
    %18 = arith.cmpi slt, %11, %c0_i32_9 : i32
    %19 = vector.broadcast %18 : i1 to vector<256x1xi1>
    %20 = vector.broadcast %19 : vector<256x1xi1> to vector<256x1xi1>
    %21 = arith.xori %17, %20 : vector<256x1xi1>
    %22 = arith.andi %21, %15 : vector<256x1xi1>
    %23 = vector.broadcast %11 : i32 to vector<256x1xi32>
    %24 = arith.addi %13, %23 : vector<256x1xi32>
    %25 = arith.select %22, %24, %13 : vector<256x1xi1>, vector<256x1xi32>
    %cst_10 = arith.constant 0.000000e+00 : f32
    %26 = vector.broadcast %cst_10 : f32 to vector<17x4xf32>
    %27 = vector.extract_strided_slice %8 {offsets = [0, 0], sizes = [239, 4], strides = [1, 1]} : vector<256x4xf32> to vector<239x4xf32>
    %28 = tpu.concatenate %26, %27 in 0 : vector<17x4xf32>, vector<239x4xf32> -> vector<256x4xf32>
    %c-1_i32 = arith.constant -1 : i32
    %29 = vector.broadcast %c-1_i32 : i32 to vector<256x1xi32>
    %30 = arith.addi %25, %29 : vector<256x1xi32>
    %c0_i32_11 = arith.constant 0 : i32
    %31 = vector.broadcast %c0_i32_11 : i32 to vector<256x1xi32>
    %32 = arith.cmpi sge, %30, %31 : vector<256x1xi32>
    %c-1_i32_12 = arith.constant -1 : i32
    %33 = vector.broadcast %c-1_i32_12 : i32 to vector<256x1xi32>
    %34 = arith.addi %25, %33 : vector<256x1xi32>
    %c16_i32_13 = arith.constant 16 : i32
    %35 = vector.broadcast %c16_i32_13 : i32 to vector<256x1xi32>
    %36 = arith.cmpi slt, %34, %35 : vector<256x1xi32>
    %37 = arith.andi %32, %36 : vector<256x1xi1>
    %cst_14 = arith.constant 0.000000e+00 : f32
    %38 = vector.shape_cast %37 : vector<256x1xi1> to vector<256x1xi1>
    %39 = vector.broadcast %38 : vector<256x1xi1> to vector<256x4xi1>
    %40 = vector.broadcast %cst_14 : f32 to vector<256x4xf32>
    %41 = arith.select %39, %28, %40 : vector<256x4xi1>, vector<256x4xf32>
    %cst_15 = arith.constant 0.000000e+00 : f32
    %42 = vector.broadcast %cst_15 : f32 to vector<16x4xf32>
    %43 = vector.extract_strided_slice %8 {offsets = [0, 0], sizes = [240, 4], strides = [1, 1]} : vector<256x4xf32> to vector<240x4xf32>
    %44 = tpu.concatenate %42, %43 in 0 : vector<16x4xf32>, vector<240x4xf32> -> vector<256x4xf32>
    %c0_i32_16 = arith.constant 0 : i32
    %45 = vector.broadcast %c0_i32_16 : i32 to vector<256x1xi32>
    %46 = arith.addi %25, %45 : vector<256x1xi32>
    %c0_i32_17 = arith.constant 0 : i32
    %47 = vector.broadcast %c0_i32_17 : i32 to vector<256x1xi32>
    %48 = arith.cmpi sge, %46, %47 : vector<256x1xi32>
    %c0_i32_18 = arith.constant 0 : i32
    %49 = vector.broadcast %c0_i32_18 : i32 to vector<256x1xi32>
    %50 = arith.addi %25, %49 : vector<256x1xi32>
    %c16_i32_19 = arith.constant 16 : i32
    %51 = vector.broadcast %c16_i32_19 : i32 to vector<256x1xi32>
    %52 = arith.cmpi slt, %50, %51 : vector<256x1xi32>
    %53 = arith.andi %48, %52 : vector<256x1xi1>
    %cst_20 = arith.constant 0.000000e+00 : f32
    %54 = vector.shape_cast %53 : vector<256x1xi1> to vector<256x1xi1>
    %55 = vector.broadcast %54 : vector<256x1xi1> to vector<256x4xi1>
    %56 = vector.broadcast %cst_20 : f32 to vector<256x4xf32>
    %57 = arith.select %55, %44, %56 : vector<256x4xi1>, vector<256x4xf32>
    %cst_21 = arith.constant 0.000000e+00 : f32
    %58 = vector.broadcast %cst_21 : f32 to vector<15x4xf32>
    %59 = vector.extract_strided_slice %8 {offsets = [0, 0], sizes = [241, 4], strides = [1, 1]} : vector<256x4xf32> to vector<241x4xf32>
    %60 = tpu.concatenate %58, %59 in 0 : vector<15x4xf32>, vector<241x4xf32> -> vector<256x4xf32>
    %c1_i32_22 = arith.constant 1 : i32
    %61 = vector.broadcast %c1_i32_22 : i32 to vector<256x1xi32>
    %62 = arith.addi %25, %61 : vector<256x1xi32>
    %c0_i32_23 = arith.constant 0 : i32
    %63 = vector.broadcast %c0_i32_23 : i32 to vector<256x1xi32>
    %64 = arith.cmpi sge, %62, %63 : vector<256x1xi32>
    %c1_i32_24 = arith.constant 1 : i32
    %65 = vector.broadcast %c1_i32_24 : i32 to vector<256x1xi32>
    %66 = arith.addi %25, %65 : vector<256x1xi32>
    %c16_i32_25 = arith.constant 16 : i32
    %67 = vector.broadcast %c16_i32_25 : i32 to vector<256x1xi32>
    %68 = arith.cmpi slt, %66, %67 : vector<256x1xi32>
    %69 = arith.andi %64, %68 : vector<256x1xi1>
    %cst_26 = arith.constant 0.000000e+00 : f32
    %70 = vector.shape_cast %69 : vector<256x1xi1> to vector<256x1xi1>
    %71 = vector.broadcast %70 : vector<256x1xi1> to vector<256x4xi1>
    %72 = vector.broadcast %cst_26 : f32 to vector<256x4xf32>
    %73 = arith.select %71, %60, %72 : vector<256x4xi1>, vector<256x4xf32>
    %cst_27 = arith.constant 0.000000e+00 : f32
    %74 = vector.broadcast %cst_27 : f32 to vector<1x4xf32>
    %75 = vector.extract_strided_slice %8 {offsets = [0, 0], sizes = [255, 4], strides = [1, 1]} : vector<256x4xf32> to vector<255x4xf32>
    %76 = tpu.concatenate %74, %75 in 0 : vector<1x4xf32>, vector<255x4xf32> -> vector<256x4xf32>
    %c-1_i32_28 = arith.constant -1 : i32
    %77 = vector.broadcast %c-1_i32_28 : i32 to vector<256x1xi32>
    %78 = arith.addi %25, %77 : vector<256x1xi32>
    %c0_i32_29 = arith.constant 0 : i32
    %79 = vector.broadcast %c0_i32_29 : i32 to vector<256x1xi32>
    %80 = arith.cmpi sge, %78, %79 : vector<256x1xi32>
    %c-1_i32_30 = arith.constant -1 : i32
    %81 = vector.broadcast %c-1_i32_30 : i32 to vector<256x1xi32>
    %82 = arith.addi %25, %81 : vector<256x1xi32>
    %c16_i32_31 = arith.constant 16 : i32
    %83 = vector.broadcast %c16_i32_31 : i32 to vector<256x1xi32>
    %84 = arith.cmpi slt, %82, %83 : vector<256x1xi32>
    %85 = arith.andi %80, %84 : vector<256x1xi1>
    %cst_32 = arith.constant 0.000000e+00 : f32
    %86 = vector.shape_cast %85 : vector<256x1xi1> to vector<256x1xi1>
    %87 = vector.broadcast %86 : vector<256x1xi1> to vector<256x4xi1>
    %88 = vector.broadcast %cst_32 : f32 to vector<256x4xf32>
    %89 = arith.select %87, %76, %88 : vector<256x4xi1>, vector<256x4xf32>
    %c0_i32_33 = arith.constant 0 : i32
    %90 = vector.broadcast %c0_i32_33 : i32 to vector<256x1xi32>
    %91 = arith.addi %25, %90 : vector<256x1xi32>
    %c0_i32_34 = arith.constant 0 : i32
    %92 = vector.broadcast %c0_i32_34 : i32 to vector<256x1xi32>
    %93 = arith.cmpi sge, %91, %92 : vector<256x1xi32>
    %c0_i32_35 = arith.constant 0 : i32
    %94 = vector.broadcast %c0_i32_35 : i32 to vector<256x1xi32>
    %95 = arith.addi %25, %94 : vector<256x1xi32>
    %c16_i32_36 = arith.constant 16 : i32
    %96 = vector.broadcast %c16_i32_36 : i32 to vector<256x1xi32>
    %97 = arith.cmpi slt, %95, %96 : vector<256x1xi32>
    %98 = arith.andi %93, %97 : vector<256x1xi1>
    %cst_37 = arith.constant 0.000000e+00 : f32
    %99 = vector.shape_cast %98 : vector<256x1xi1> to vector<256x1xi1>
    %100 = vector.broadcast %99 : vector<256x1xi1> to vector<256x4xi1>
    %101 = vector.broadcast %cst_37 : f32 to vector<256x4xf32>
    %102 = arith.select %100, %8, %101 : vector<256x4xi1>, vector<256x4xf32>
    %103 = vector.extract_strided_slice %8 {offsets = [1, 0], sizes = [255, 4], strides = [1, 1]} : vector<256x4xf32> to vector<255x4xf32>
    %cst_38 = arith.constant 0.000000e+00 : f32
    %104 = vector.broadcast %cst_38 : f32 to vector<1x4xf32>
    %105 = tpu.concatenate %103, %104 in 0 : vector<255x4xf32>, vector<1x4xf32> -> vector<256x4xf32>
    %c1_i32_39 = arith.constant 1 : i32
    %106 = vector.broadcast %c1_i32_39 : i32 to vector<256x1xi32>
    %107 = arith.addi %25, %106 : vector<256x1xi32>
    %c0_i32_40 = arith.constant 0 : i32
    %108 = vector.broadcast %c0_i32_40 : i32 to vector<256x1xi32>
    %109 = arith.cmpi sge, %107, %108 : vector<256x1xi32>
    %c1_i32_41 = arith.constant 1 : i32
    %110 = vector.broadcast %c1_i32_41 : i32 to vector<256x1xi32>
    %111 = arith.addi %25, %110 : vector<256x1xi32>
    %c16_i32_42 = arith.constant 16 : i32
    %112 = vector.broadcast %c16_i32_42 : i32 to vector<256x1xi32>
    %113 = arith.cmpi slt, %111, %112 : vector<256x1xi32>
    %114 = arith.andi %109, %113 : vector<256x1xi1>
    %cst_43 = arith.constant 0.000000e+00 : f32
    %115 = vector.shape_cast %114 : vector<256x1xi1> to vector<256x1xi1>
    %116 = vector.broadcast %115 : vector<256x1xi1> to vector<256x4xi1>
    %117 = vector.broadcast %cst_43 : f32 to vector<256x4xf32>
    %118 = arith.select %116, %105, %117 : vector<256x4xi1>, vector<256x4xf32>
    %119 = vector.extract_strided_slice %8 {offsets = [15, 0], sizes = [241, 4], strides = [1, 1]} : vector<256x4xf32> to vector<241x4xf32>
    %cst_44 = arith.constant 0.000000e+00 : f32
    %120 = vector.broadcast %cst_44 : f32 to vector<15x4xf32>
    %121 = tpu.concatenate %119, %120 in 0 : vector<241x4xf32>, vector<15x4xf32> -> vector<256x4xf32>
    %c-1_i32_45 = arith.constant -1 : i32
    %122 = vector.broadcast %c-1_i32_45 : i32 to vector<256x1xi32>
    %123 = arith.addi %25, %122 : vector<256x1xi32>
    %c0_i32_46 = arith.constant 0 : i32
    %124 = vector.broadcast %c0_i32_46 : i32 to vector<256x1xi32>
    %125 = arith.cmpi sge, %123, %124 : vector<256x1xi32>
    %c-1_i32_47 = arith.constant -1 : i32
    %126 = vector.broadcast %c-1_i32_47 : i32 to vector<256x1xi32>
    %127 = arith.addi %25, %126 : vector<256x1xi32>
    %c16_i32_48 = arith.constant 16 : i32
    %128 = vector.broadcast %c16_i32_48 : i32 to vector<256x1xi32>
    %129 = arith.cmpi slt, %127, %128 : vector<256x1xi32>
    %130 = arith.andi %125, %129 : vector<256x1xi1>
    %cst_49 = arith.constant 0.000000e+00 : f32
    %131 = vector.shape_cast %130 : vector<256x1xi1> to vector<256x1xi1>
    %132 = vector.broadcast %131 : vector<256x1xi1> to vector<256x4xi1>
    %133 = vector.broadcast %cst_49 : f32 to vector<256x4xf32>
    %134 = arith.select %132, %121, %133 : vector<256x4xi1>, vector<256x4xf32>
    %135 = vector.extract_strided_slice %8 {offsets = [16, 0], sizes = [240, 4], strides = [1, 1]} : vector<256x4xf32> to vector<240x4xf32>
    %cst_50 = arith.constant 0.000000e+00 : f32
    %136 = vector.broadcast %cst_50 : f32 to vector<16x4xf32>
    %137 = tpu.concatenate %135, %136 in 0 : vector<240x4xf32>, vector<16x4xf32> -> vector<256x4xf32>
    %c0_i32_51 = arith.constant 0 : i32
    %138 = vector.broadcast %c0_i32_51 : i32 to vector<256x1xi32>
    %139 = arith.addi %25, %138 : vector<256x1xi32>
    %c0_i32_52 = arith.constant 0 : i32
    %140 = vector.broadcast %c0_i32_52 : i32 to vector<256x1xi32>
    %141 = arith.cmpi sge, %139, %140 : vector<256x1xi32>
    %c0_i32_53 = arith.constant 0 : i32
    %142 = vector.broadcast %c0_i32_53 : i32 to vector<256x1xi32>
    %143 = arith.addi %25, %142 : vector<256x1xi32>
    %c16_i32_54 = arith.constant 16 : i32
    %144 = vector.broadcast %c16_i32_54 : i32 to vector<256x1xi32>
    %145 = arith.cmpi slt, %143, %144 : vector<256x1xi32>
    %146 = arith.andi %141, %145 : vector<256x1xi1>
    %cst_55 = arith.constant 0.000000e+00 : f32
    %147 = vector.shape_cast %146 : vector<256x1xi1> to vector<256x1xi1>
    %148 = vector.broadcast %147 : vector<256x1xi1> to vector<256x4xi1>
    %149 = vector.broadcast %cst_55 : f32 to vector<256x4xf32>
    %150 = arith.select %148, %137, %149 : vector<256x4xi1>, vector<256x4xf32>
    %151 = vector.extract_strided_slice %8 {offsets = [17, 0], sizes = [239, 4], strides = [1, 1]} : vector<256x4xf32> to vector<239x4xf32>
    %cst_56 = arith.constant 0.000000e+00 : f32
    %152 = vector.broadcast %cst_56 : f32 to vector<17x4xf32>
    %153 = tpu.concatenate %151, %152 in 0 : vector<239x4xf32>, vector<17x4xf32> -> vector<256x4xf32>
    %c1_i32_57 = arith.constant 1 : i32
    %154 = vector.broadcast %c1_i32_57 : i32 to vector<256x1xi32>
    %155 = arith.addi %25, %154 : vector<256x1xi32>
    %c0_i32_58 = arith.constant 0 : i32
    %156 = vector.broadcast %c0_i32_58 : i32 to vector<256x1xi32>
    %157 = arith.cmpi sge, %155, %156 : vector<256x1xi32>
    %c1_i32_59 = arith.constant 1 : i32
    %158 = vector.broadcast %c1_i32_59 : i32 to vector<256x1xi32>
    %159 = arith.addi %25, %158 : vector<256x1xi32>
    %c16_i32_60 = arith.constant 16 : i32
    %160 = vector.broadcast %c16_i32_60 : i32 to vector<256x1xi32>
    %161 = arith.cmpi slt, %159, %160 : vector<256x1xi32>
    %162 = arith.andi %157, %161 : vector<256x1xi1>
    %cst_61 = arith.constant 0.000000e+00 : f32
    %163 = vector.shape_cast %162 : vector<256x1xi1> to vector<256x1xi1>
    %164 = vector.broadcast %163 : vector<256x1xi1> to vector<256x4xi1>
    %165 = vector.broadcast %cst_61 : f32 to vector<256x4xf32>
    %166 = arith.select %164, %153, %165 : vector<256x4xi1>, vector<256x4xf32>
    %167 = tpu.concatenate %41, %57, %73, %89, %102, %118, %134, %150, %166 in 1 : vector<256x4xf32>, vector<256x4xf32>, vector<256x4xf32>, vector<256x4xf32>, vector<256x4xf32>, vector<256x4xf32>, vector<256x4xf32>, vector<256x4xf32>, vector<256x4xf32> -> vector<256x36xf32>
    %c0_62 = arith.constant 0 : index
    %c0_63 = arith.constant 0 : index
    %168 = vector.load %arg4[%c0_62, %c0_63] : memref<36x4xf32, #tpu.memory_space<vmem>>, vector<36x4xf32>
    %cst_64 = arith.constant dense<0.000000e+00> : vector<256x4xf32>
    %169 = tpu.matmul %167, %168, %cst_64 {dimension_numbers = #tpu.dot_dimension_numbers<[1], [0], [0], [1], [0, 0, 1, 1], [], []>} : vector<256x36xf32>, vector<36x4xf32>, vector<256x4xf32> -> vector<256x4xf32>
    %c0_65 = arith.constant 0 : index
    %c0_66 = arith.constant 0 : index
    %170 = vector.load %arg5[%c0_65, %c0_66] : memref<1x4xf32, #tpu.memory_space<vmem>>, vector<1x4xf32>
    %171 = vector.broadcast %170 : vector<1x4xf32> to vector<256x4xf32>
    %172 = arith.addf %169, %171 : vector<256x4xf32>
    %cst_67 = arith.constant 0.000000e+00 : f32
    %173 = vector.broadcast %cst_67 : f32 to vector<256x4xf32>
    %174 = arith.maximumf %172, %173 : vector<256x4xf32>
    %c0_68 = arith.constant 0 : index
    %c0_69 = arith.constant 0 : index
    %175 = vector.load %arg6[%c0_68, %c0_69] : memref<4x16xf32, #tpu.memory_space<vmem>>, vector<4x16xf32>
    %cst_70 = arith.constant dense<0.000000e+00> : vector<256x16xf32>
    %176 = tpu.matmul %174, %175, %cst_70 {dimension_numbers = #tpu.dot_dimension_numbers<[1], [0], [0], [1], [0, 0, 1, 1], [], []>} : vector<256x4xf32>, vector<4x16xf32>, vector<256x16xf32> -> vector<256x16xf32>
    %c0_71 = arith.constant 0 : index
    %c0_72 = arith.constant 0 : index
    %177 = vector.load %arg7[%c0_71, %c0_72] : memref<1x16xf32, #tpu.memory_space<vmem>>, vector<1x16xf32>
    %178 = vector.broadcast %177 : vector<1x16xf32> to vector<256x16xf32>
    %179 = arith.addf %176, %178 : vector<256x16xf32>
    %c0_73 = arith.constant 0 : index
    %c0_74 = arith.constant 0 : index
    %180 = vector.load %arg8[%c0_73, %c0_74] : memref<4x16xf32, #tpu.memory_space<vmem>>, vector<4x16xf32>
    %cst_75 = arith.constant dense<0.000000e+00> : vector<256x16xf32>
    %181 = tpu.matmul %1, %180, %cst_75 {dimension_numbers = #tpu.dot_dimension_numbers<[1], [0], [0], [1], [0, 0, 1, 1], [], []>} : vector<256x4xf32>, vector<4x16xf32>, vector<256x16xf32> -> vector<256x16xf32>
    %c0_76 = arith.constant 0 : index
    %c0_77 = arith.constant 0 : index
    %182 = vector.load %arg9[%c0_76, %c0_77] : memref<1x16xf32, #tpu.memory_space<vmem>>, vector<1x16xf32>
    %183 = vector.broadcast %182 : vector<1x16xf32> to vector<256x16xf32>
    %184 = arith.addf %181, %183 : vector<256x16xf32>
    %185 = arith.addf %179, %184 : vector<256x16xf32>
    %cst_78 = arith.constant 0.000000e+00 : f32
    %186 = vector.broadcast %cst_78 : f32 to vector<256x16xf32>
    %187 = arith.maximumf %185, %186 : vector<256x16xf32>
    %c0_79 = arith.constant 0 : index
    %c0_80 = arith.constant 0 : index
    %c0_81 = arith.constant 0 : index
    %188 = vector.load %arg10[%c0_79, %c0_80, %c0_81] : memref<1x256x16xf32, #tpu.memory_space<vmem>>, vector<1x256x16xf32>
    %189 = vector.shape_cast %188 : vector<1x256x16xf32> to vector<256x16xf32>
    %190 = vector.shape_cast %187 : vector<256x16xf32> to vector<1x256x16xf32>
    tpu.vector_store %arg10[%c0_79, %c0_80, %c0_81], %190 {strides = array<i32>} : memref<1x256x16xf32, #tpu.memory_space<vmem>>, vector<1x256x16xf32>,
    return
  }
  func.func @transform_0(%arg0: i32) -> (i32, i32, i32) {
    %c0_i32 = arith.constant 0 : i32
    %c0_i32_0 = arith.constant 0 : i32
    %c0_i32_1 = arith.constant 0 : i32
    return %arg0, %c0_i32, %c0_i32_0 : i32, i32, i32
  }
  func.func @transform_1(%arg0: i32) -> (i32, i32) {
    %c0_i32 = arith.constant 0 : i32
    %c0_i32_0 = arith.constant 0 : i32
    %c0_i32_1 = arith.constant 0 : i32
    return %c0_i32, %c0_i32_0 : i32, i32
  }
  func.func @transform_2(%arg0: i32) -> (i32, i32) {
    %c0_i32 = arith.constant 0 : i32
    %c0_i32_0 = arith.constant 0 : i32
    %c0_i32_1 = arith.constant 0 : i32
    return %c0_i32, %c0_i32_0 : i32, i32
  }
  func.func @transform_3(%arg0: i32) -> (i32, i32) {
    %c0_i32 = arith.constant 0 : i32
    %c0_i32_0 = arith.constant 0 : i32
    %c0_i32_1 = arith.constant 0 : i32
    return %c0_i32, %c0_i32_0 : i32, i32
  }
  func.func @transform_4(%arg0: i32) -> (i32, i32) {
    %c0_i32 = arith.constant 0 : i32
    %c0_i32_0 = arith.constant 0 : i32
    %c0_i32_1 = arith.constant 0 : i32
    return %c0_i32, %c0_i32_0 : i32, i32
  }
  func.func @transform_5(%arg0: i32) -> (i32, i32) {
    %c0_i32 = arith.constant 0 : i32
    %c0_i32_0 = arith.constant 0 : i32
    %c0_i32_1 = arith.constant 0 : i32
    return %c0_i32, %c0_i32_0 : i32, i32
  }
  func.func @transform_6(%arg0: i32) -> (i32, i32) {
    %c0_i32 = arith.constant 0 : i32
    %c0_i32_0 = arith.constant 0 : i32
    %c0_i32_1 = arith.constant 0 : i32
    return %c0_i32, %c0_i32_0 : i32, i32
  }
  func.func @transform_7(%arg0: i32) -> (i32, i32) {
    %c0_i32 = arith.constant 0 : i32
    %c0_i32_0 = arith.constant 0 : i32
    %c0_i32_1 = arith.constant 0 : i32
    return %c0_i32, %c0_i32_0 : i32, i32
  }
  func.func @transform_8(%arg0: i32) -> (i32, i32) {
    %c0_i32 = arith.constant 0 : i32
    %c0_i32_0 = arith.constant 0 : i32
    %c0_i32_1 = arith.constant 0 : i32
    return %c0_i32, %c0_i32_0 : i32, i32
  }
  func.func @transform_9(%arg0: i32) -> (i32, i32, i32) {
    %c0_i32 = arith.constant 0 : i32
    %c0_i32_0 = arith.constant 0 : i32
    %c0_i32_1 = arith.constant 0 : i32
    return %arg0, %c0_i32, %c0_i32_0 : i32, i32, i32
  }
}

</mosaic_0001>

<llo_original>
// kernel: residual_block_forward.1
$region0: #{residual_block_forward.1}
  #allocation0 [shape = 'u32[]', space=smem, size = 0x4, offset = 0x4, fixed_abs, tag = 'smem constant byte address 0x4 - core index']
  #allocation1 [shape = 'u32[72,128]{1,0:T(1,128)}', space=vmem, size = 0x9000, scoped, tag = 'internal scratch']
  %s0 = inlined_call_operand.vmem [shape: f32[2,256,4], index: 0, kind: input, shape index: {}]
  %s1 = inlined_call_operand.vmem [shape: f32[4,4], index: 1, kind: input, shape index: {}]
  %s2 = inlined_call_operand.vmem [shape: f32[1,4], index: 2, kind: input, shape index: {}]
  %s3 = inlined_call_operand.vmem [shape: f32[36,4], index: 3, kind: input, shape index: {}]
  %s4 = inlined_call_operand.vmem [shape: f32[1,4], index: 4, kind: input, shape index: {}]
  %s5 = inlined_call_operand.vmem [shape: f32[4,16], index: 5, kind: input, shape index: {}]
  %s6 = inlined_call_operand.vmem [shape: f32[1,16], index: 6, kind: input, shape index: {}]
  %s7 = inlined_call_operand.vmem [shape: f32[4,16], index: 7, kind: input, shape index: {}]
  %s8 = inlined_call_operand.vmem [shape: f32[1,16], index: 8, kind: input, shape index: {}]
  %s9 = inlined_call_operand.vmem [shape: f32[2,256,16], index: 9, kind: output, shape index: {}]
  %s10 = sld [smem:[#allocation0]]
  $region69: #{residual_block_forward.1} parent=0
    _
  %s12 = ssub.s32 1, %s10
  %s13 = scalar_select 0, %s12, %s10
  loop: start=0, step=1, limit=4
  $region2: #{residual_block_forward.1} parent=0 // loop_pre_header
    _
  $region3: #{residual_block_forward.1} parent=0 // loop_header
    %s15 = sphi 0, %s19
    %p16 = scmp.ge.s32.totalorder %s15, 4
    %s25 = sphi 0, %s27
    %s28 = sphi 0, %s25
    %s29 = sphi 0, %s28
    %s45 = sphi 0, %s29
    %s49 = sphi 0, %s49
    %s51 = sphi 0, %s49
    %s52 = sphi 0, %s51
    %s66 = sphi 0, %s52
    %s70 = sphi 0, %s70
    %s72 = sphi 0, %s70
    %s73 = sphi 0, %s72
    %s87 = sphi 0, %s73
    %s91 = sphi 0, %s91
    %s93 = sphi 0, %s91
    %s94 = sphi 0, %s93
    %s108 = sphi 0, %s94
    %s112 = sphi 0, %s112
    %s114 = sphi 0, %s112
    %s115 = sphi 0, %s114
    %s129 = sphi 0, %s115
    %s133 = sphi 0, %s133
    %s135 = sphi 0, %s133
    %s136 = sphi 0, %s135
    %s150 = sphi 0, %s136
    %s154 = sphi 0, %s154
    %s156 = sphi 0, %s154
    %s157 = sphi 0, %s156
    %s171 = sphi 0, %s157
    %s175 = sphi 0, %s175
    %s177 = sphi 0, %s175
    %s178 = sphi 0, %s177
    %s192 = sphi 0, %s178
    %s196 = sphi 0, %s196
    %s198 = sphi 0, %s196
    %s199 = sphi 0, %s198
    %s213 = sphi 0, %s199
    %s219 = sphi 0, %s221
    %s222 = sphi 0, %s219
    %s223 = sphi 0, %s222
    %s239 = sphi 0, %s223
  $region4: #{residual_block_forward.1} parent=0 // loop_header_branch
    %18 = sbr.rel (%p16) target = $region8
  $region5: #{residual_block_forward.1} parent=0 // loop_body
    %s20 = ssub.s32 %s15, 1
    %s21 = ssub.s32 %s15, 2
    %s22 = sadd.s32 %s15, 1
    %s23 = ssub.s32 %s15, %s22
    %p24 = scmp.eq.s32.totalorder %s23, 0
    %s26 = sadd.s32 %s25, 1
    %s27 = scalar_select %p24, %s25, %s26
    %p30 = pneg %p24
    %p31 = scmp.eq.s32.totalorder %s15, 1
    %p32 = por %p30, %p31
    %p33 = scmp.ne.s32.totalorder %s25, %s28
    %p34 = scmp.eq.s32.totalorder %s15, 0
    %p35 = por %p33, %p34
    %p36 = scmp.ne.s32.totalorder %s25, %s28
    %p37 = scmp.eq.s32.totalorder %s20, 1
    %p38 = por %p36, %p37
    %p39 = scmp.ne.s32.totalorder %s28, %s29
    %p40 = scmp.eq.s32.totalorder %s20, 0
    %p41 = por %p39, %p40
    %p42 = scmp.ne.s32.totalorder %s28, %s29
    %p43 = scmp.eq.s32.totalorder %s21, 1
    %p44 = por %p42, %p43
    %p46 = scmp.ne.s32.totalorder %s29, %s45
    %p47 = scmp.eq.s32.totalorder %s21, 0
    %p48 = por %p46, %p47
    %s50 = sadd.s32 %s49, 1
    %p53 = scmp.eq.s32.totalorder %s15, 1
    %p54 = scmp.ne.s32.totalorder %s49, %s51
    %p55 = scmp.eq.s32.totalorder %s15, 0
    %p56 = por %p54, %p55
    %p57 = scmp.ne.s32.totalorder %s49, %s51
    %p58 = scmp.eq.s32.totalorder %s20, 1
    %p59 = por %p57, %p58
    %p60 = scmp.ne.s32.totalorder %s51, %s52
    %p61 = scmp.eq.s32.totalorder %s20, 0
    %p62 = por %p60, %p61
    %p63 = scmp.ne.s32.totalorder %s51, %s52
    %p64 = scmp.eq.s32.totalorder %s21, 1
    %p65 = por %p63, %p64
    %p67 = scmp.ne.s32.totalorder %s52, %s66
    %p68 = scmp.eq.s32.totalorder %s21, 0
    %p69 = por %p67, %p68
    %s71 = sadd.s32 %s70, 1
    %p74 = scmp.eq.s32.totalorder %s15, 1
    %p75 = scmp.ne.s32.totalorder %s70, %s72
    %p76 = scmp.eq.s32.totalorder %s15, 0
    %p77 = por %p75, %p76
    %p78 = scmp.ne.s32.totalorder %s70, %s72
    %p79 = scmp.eq.s32.totalorder %s20, 1
    %p80 = por %p78, %p79
    %p81 = scmp.ne.s32.totalorder %s72, %s73
    %p82 = scmp.eq.s32.totalorder %s20, 0
    %p83 = por %p81, %p82
    %p84 = scmp.ne.s32.totalorder %s72, %s73
    %p85 = scmp.eq.s32.totalorder %s21, 1
    %p86 = por %p84, %p85
    %p88 = scmp.ne.s32.totalorder %s73, %s87
    %p89 = scmp.eq.s32.totalorder %s21, 0
    %p90 = por %p88, %p89
    %s92 = sadd.s32 %s91, 1
    %p95 = scmp.eq.s32.totalorder %s15, 1
    %p96 = scmp.ne.s32.totalorder %s91, %s93
    %p97 = scmp.eq.s32.totalorder %s15, 0
    %p98 = por %p96, %p97
    %p99 = scmp.ne.s32.totalorder %s91, %s93
    %p100 = scmp.eq.s32.totalorder %s20, 1
    %p101 = por %p99, %p100
    %p102 = scmp.ne.s32.totalorder %s93, %s94
    %p103 = scmp.eq.s32.totalorder %s20, 0
    %p104 = por %p102, %p103
    %p105 = scmp.ne.s32.totalorder %s93, %s94
    %p106 = scmp.eq.s32.totalorder %s21, 1
    %p107 = por %p105, %p106
    %p109 = scmp.ne.s32.totalorder %s94, %s108
    %p110 = scmp.eq.s32.totalorder %s21, 0
    %p111 = por %p109, %p110
    %s113 = sadd.s32 %s112, 1
    %p116 = scmp.eq.s32.totalorder %s15, 1
    %p117 = scmp.ne.s32.totalorder %s112, %s114
    %p118 = scmp.eq.s32.totalorder %s15, 0
    %p119 = por %p117, %p118
    %p120 = scmp.ne.s32.totalorder %s112, %s114
    %p121 = scmp.eq.s32.totalorder %s20, 1
    %p122 = por %p120, %p121
    %p123 = scmp.ne.s32.totalorder %s114, %s115
    %p124 = scmp.eq.s32.totalorder %s20, 0
    %p125 = por %p123, %p124
    %p126 = scmp.ne.s32.totalorder %s114, %s115
    %p127 = scmp.eq.s32.totalorder %s21, 1
    %p128 = por %p126, %p127
    %p130 = scmp.ne.s32.totalorder %s115, %s129
    %p131 = scmp.eq.s32.totalorder %s21, 0
    %p132 = por %p130, %p131
    %s134 = sadd.s32 %s133, 1
    %p137 = scmp.eq.s32.totalorder %s15, 1
    %p138 = scmp.ne.s32.totalorder %s133, %s135
    %p139 = scmp.eq.s32.totalorder %s15, 0
    %p140 = por %p138, %p139
    %p141 = scmp.ne.s32.totalorder %s133, %s135
    %p142 = scmp.eq.s32.totalorder %s20, 1
    %p143 = por %p141, %p142
    %p144 = scmp.ne.s32.totalorder %s135, %s136
    %p145 = scmp.eq.s32.totalorder %s20, 0
    %p146 = por %p144, %p145
    %p147 = scmp.ne.s32.totalorder %s135, %s136
    %p148 = scmp.eq.s32.totalorder %s21, 1
    %p149 = por %p147, %p148
    %p151 = scmp.ne.s32.totalorder %s136, %s150
    %p152 = scmp.eq.s32.totalorder %s21, 0
    %p153 = por %p151, %p152
    %s155 = sadd.s32 %s154, 1
    %p158 = scmp.eq.s32.totalorder %s15, 1
    %p159 = scmp.ne.s32.totalorder %s154, %s156
    %p160 = scmp.eq.s32.totalorder %s15, 0
    %p161 = por %p159, %p160
    %p162 = scmp.ne.s32.totalorder %s154, %s156
    %p163 = scmp.eq.s32.totalorder %s20, 1
    %p164 = por %p162, %p163
    %p165 = scmp.ne.s32.totalorder %s156, %s157
    %p166 = scmp.eq.s32.totalorder %s20, 0
    %p167 = por %p165, %p166
    %p168 = scmp.ne.s32.totalorder %s156, %s157
    %p169 = scmp.eq.s32.totalorder %s21, 1
    %p170 = por %p168, %p169
    %p172 = scmp.ne.s32.totalorder %s157, %s171
    %p173 = scmp.eq.s32.totalorder %s21, 0
    %p174 = por %p172, %p173
    %s176 = sadd.s32 %s175, 1
    %p179 = scmp.eq.s32.totalorder %s15, 1
    %p180 = scmp.ne.s32.totalorder %s175, %s177
    %p181 = scmp.eq.s32.totalorder %s15, 0
    %p182 = por %p180, %p181
    %p183 = scmp.ne.s32.totalorder %s175, %s177
    %p184 = scmp.eq.s32.totalorder %s20, 1
    %p185 = por %p183, %p184
    %p186 = scmp.ne.s32.totalorder %s177, %s178
    %p187 = scmp.eq.s32.totalorder %s20, 0
    %p188 = por %p186, %p187
    %p189 = scmp.ne.s32.totalorder %s177, %s178
    %p190 = scmp.eq.s32.totalorder %s21, 1
    %p191 = por %p189, %p190
    %p193 = scmp.ne.s32.totalorder %s178, %s192
    %p194 = scmp.eq.s32.totalorder %s21, 0
    %p195 = por %p193, %p194
    %s197 = sadd.s32 %s196, 1
    %p200 = scmp.eq.s32.totalorder %s15, 1
    %p201 = scmp.ne.s32.totalorder %s196, %s198
    %p202 = scmp.eq.s32.totalorder %s15, 0
    %p203 = por %p201, %p202
    %p204 = scmp.ne.s32.totalorder %s196, %s198
    %p205 = scmp.eq.s32.totalorder %s20, 1
    %p206 = por %p204, %p205
    %p207 = scmp.ne.s32.totalorder %s198, %s199
    %p208 = scmp.eq.s32.totalorder %s20, 0
    %p209 = por %p207, %p208
    %p210 = scmp.ne.s32.totalorder %s198, %s199
    %p211 = scmp.eq.s32.totalorder %s21, 1
    %p212 = por %p210, %p211
    %p214 = scmp.ne.s32.totalorder %s199, %s213
    %p215 = scmp.eq.s32.totalorder %s21, 0
    %p216 = por %p214, %p215
    %s217 = ssub.s32 %s15, %s22
    %p218 = scmp.eq.s32.totalorder %s217, 0
    %s220 = sadd.s32 %s219, 1
    %s221 = scalar_select %p218, %s219, %s220
    %p224 = pneg %p218
    %p225 = scmp.eq.s32.totalorder %s15, 1
    %p226 = por %p224, %p225
    %p227 = scmp.ne.s32.totalorder %s219, %s222
    %p228 = scmp.eq.s32.totalorder %s15, 0
    %p229 = por %p227, %p228
    %p230 = scmp.ne.s32.totalorder %s219, %s222
    %p231 = scmp.eq.s32.totalorder %s20, 1
    %p232 = por %p230, %p231
    %p233 = scmp.ne.s32.totalorder %s222, %s223
    %p234 = scmp.eq.s32.totalorder %s20, 0
    %p235 = por %p233, %p234
    %p236 = scmp.ne.s32.totalorder %s222, %s223
    %p237 = scmp.eq.s32.totalorder %s21, 1
    %p238 = por %p236, %p237
    %p240 = scmp.ne.s32.totalorder %s223, %s239
    %p241 = scmp.eq.s32.totalorder %s21, 0
    %p242 = por %p240, %p241
    %p243 = scmp.le.s32.totalorder 1, %s15
    %p244 = scmp.lt.s32.totalorder %s15, 3
    %p245 = pnand %p243, %p244
    %p246 = pneg %p245
    // Predicated region
    $region9: #{residual_block_forward.1} parent=5 // pred_check
      _
    $region10: #{residual_block_forward.1} parent=5 // pred_check_branch
      %248 = sbr.rel (%p245) target = $region12
    $region11: #{residual_block_forward.1} parent=5 // pred_region
      %s249 = ssub.s32 %s15, 1
      // Predicated region
      $region13: #{residual_block_forward.1} parent=11 // pred_check
        %p250 = pneg %p62
      $region14: #{residual_block_forward.1} parent=11 // pred_check_branch
        %252 = sbr.rel (%p250) target = $region16
      $region15: #{residual_block_forward.1} parent=11 // pred_region
        _
      $region16: #{residual_block_forward.1} parent=11 // pred_fallthru
        _
      // Predicated region
      $region17: #{residual_block_forward.1} parent=11 // pred_check
        %p253 = pneg %p83
      $region18: #{residual_block_forward.1} parent=11 // pred_check_branch
        %255 = sbr.rel (%p253) target = $region20
      $region19: #{residual_block_forward.1} parent=11 // pred_region
        _
      $region20: #{residual_block_forward.1} parent=11 // pred_fallthru
        _
      // Predicated region
      $region21: #{residual_block_forward.1} parent=11 // pred_check
        %p256 = pneg %p104
      $region22: #{residual_block_forward.1} parent=11 // pred_check_branch
        %258 = sbr.rel (%p256) target = $region24
      $region23: #{residual_block_forward.1} parent=11 // pred_region
        _
      $region24: #{residual_block_forward.1} parent=11 // pred_fallthru
        _
      // Predicated region
      $region25: #{residual_block_forward.1} parent=11 // pred_check
        %p259 = pneg %p125
      $region26: #{residual_block_forward.1} parent=11 // pred_check_branch
        %261 = sbr.rel (%p259) target = $region28
      $region27: #{residual_block_forward.1} parent=11 // pred_region
        _
      $region28: #{residual_block_forward.1} parent=11 // pred_fallthru
        _
      // Predicated region
      $region29: #{residual_block_forward.1} parent=11 // pred_check
        %p262 = pneg %p146
      $region30: #{residual_block_forward.1} parent=11 // pred_check_branch
        %264 = sbr.rel (%p262) target = $region32
      $region31: #{residual_block_forward.1} parent=11 // pred_region
        _
      $region32: #{residual_block_forward.1} parent=11 // pred_fallthru
        _
      // Predicated region
      $region33: #{residual_block_forward.1} parent=11 // pred_check
        %p265 = pneg %p167
      $region34: #{residual_block_forward.1} parent=11 // pred_check_branch
        %267 = sbr.rel (%p265) target = $region36
      $region35: #{residual_block_forward.1} parent=11 // pred_region
        _
      $region36: #{residual_block_forward.1} parent=11 // pred_fallthru
        _
      // Predicated region
      $region37: #{residual_block_forward.1} parent=11 // pred_check
        %p268 = pneg %p188
      $region38: #{residual_block_forward.1} parent=11 // pred_check_branch
        %270 = sbr.rel (%p268) target = $region40
      $region39: #{residual_block_forward.1} parent=11 // pred_region
        _
      $region40: #{residual_block_forward.1} parent=11 // pred_fallthru
        _
      // Predicated region
      $region41: #{residual_block_forward.1} parent=11 // pred_check
        %p271 = pneg %p209
      $region42: #{residual_block_forward.1} parent=11 // pred_check_branch
        %273 = sbr.rel (%p271) target = $region44
      $region43: #{residual_block_forward.1} parent=11 // pred_region
        _
      $region44: #{residual_block_forward.1} parent=11 // pred_fallthru
        _
    $region12: #{residual_block_forward.1} parent=5 // pred_fallthru
      _
    %p274 = scmp.lt.s32.totalorder %s15, 2
    // Predicated region
    $region45: #{residual_block_forward.1} parent=5 // pred_check
      %p275 = pneg %p274
    $region46: #{residual_block_forward.1} parent=5 // pred_check_branch
      %277 = sbr.rel (%p275) target = $region48
    $region47: #{residual_block_forward.1} parent=5 // pred_region
      // Predicated region
      $region49: #{residual_block_forward.1} parent=47 // pred_check
        %p278 = pneg %p35
      $region50: #{residual_block_forward.1} parent=47 // pred_check_branch
        %280 = sbr.rel (%p278) target = $region52
      $region51: #{residual_block_forward.1} parent=47 // pred_region
        %p281 = scmp.lt.s32.totalorder %s15, 1
        %s282 = scalar_select %p281, %s15, 1
        %s283 = smul.addr %s282, 32
        %s284 = smul.addr %s283, 8
        %s285 = scalar_lea.vmem %s0, %s284
      $region52: #{residual_block_forward.1} parent=47 // pred_fallthru
        _
    $region48: #{residual_block_forward.1} parent=5 // pred_fallthru
      _
    %p286 = scmp.le.s32.totalorder 1, %s15
    %p287 = scmp.lt.s32.totalorder %s15, 3
    %p288 = pnand %p286, %p287
    %p289 = pneg %p288
    // Predicated region
    $region53: #{residual_block_forward.1} parent=5 // pred_check
      _
    $region54: #{residual_block_forward.1} parent=5 // pred_check_branch
      %291 = sbr.rel (%p288) target = $region56
    $region55: #{residual_block_forward.1} parent=5 // pred_region
      %s292 = ssub.s32 %s15, 1
      %p293 = scmp.lt.s32.totalorder %s20, 1
      %s294 = scalar_select %p293, %s20, 1
      %s295 = smul.addr %s294, 32
      %s296 = smul.addr %s295, 8
      %s297 = scalar_lea.vmem %s0, %s296
      %p298 = pneg %p41
      %p299 = pneg %p38
      %p300 = pneg %p62
      %p301 = pneg %p59
      %p302 = pneg %p83
      %p303 = pneg %p80
      %p304 = pneg %p104
      %p305 = pneg %p101
      %p306 = pneg %p125
      %p307 = pneg %p122
      %p308 = pneg %p146
      %p309 = pneg %p143
      %p310 = pneg %p167
      %p311 = pneg %p164
      %p312 = pneg %p188
      %p313 = pneg %p185
      %p314 = pneg %p209
      %p315 = pneg %p206
      %p316 = pneg %p235
      %p317 = pneg %p232
      %p318 = scmp.lt.s32.totalorder %s20, 1
      %s319 = scalar_select %p318, %s20, 1
      %s320 = smul.addr %s319, 32
      %s321 = smul.addr %s320, 8
      %s322 = scalar_lea.vmem %s9, %s321
      %p323 = scmp.lt.s32.totalorder %s20, 1
      %s324 = scalar_select %p323, %s20, 1
      %s325 = smul.addr %s324, 32
      %s326 = smul.addr %s325, 8
      %s327 = scalar_lea.vmem %s0, %s326
      %p328 = scmp.lt.s32.totalorder %s20, 1
      %s329 = scalar_select %p328, %s20, 1
      %s330 = smul.addr %s329, 32
      %s331 = smul.addr %s330, 8
      %s332 = scalar_lea.vmem %s9, %s331
      %v333 = vld [vmem:[%s327] sm:$0xff]
      %v334 = vld [vmem:[%s327 + $0x8] sm:$0xff]
      %v335 = vld [vmem:[%s327 + $0x10] sm:$0xff]
      %v336 = vld [vmem:[%s327 + $0x18] sm:$0xff]
      %v337 = vld [vmem:[%s327 + $0x20] sm:$0xff]
      %v338 = vld [vmem:[%s327 + $0x28] sm:$0xff]
      %v339 = vld [vmem:[%s327 + $0x30] sm:$0xff]
      %v340 = vld [vmem:[%s327 + $0x38] sm:$0xff]
      %v341 = vld [vmem:[%s327 + $0x40] sm:$0xff]
      %v342 = vld [vmem:[%s327 + $0x48] sm:$0xff]
      %v343 = vld [vmem:[%s327 + $0x50] sm:$0xff]
      %v344 = vld [vmem:[%s327 + $0x58] sm:$0xff]
      %v345 = vld [vmem:[%s327 + $0x60] sm:$0xff]
      %v346 = vld [vmem:[%s327 + $0x68] sm:$0xff]
      %v347 = vld [vmem:[%s327 + $0x70] sm:$0xff]
      %v348 = vld [vmem:[%s327 + $0x78] sm:$0xff]
      %v349 = vld [vmem:[%s327 + $0x80] sm:$0xff]
      %v350 = vld [vmem:[%s327 + $0x88] sm:$0xff]
      %v351 = vld [vmem:[%s327 + $0x90] sm:$0xff]
      %v352 = vld [vmem:[%s327 + $0x98] sm:$0xff]
      %v353 = vld [vmem:[%s327 + $0xa0] sm:$0xff]
      %v354 = vld [vmem:[%s327 + $0xa8] sm:$0xff]
      %v355 = vld [vmem:[%s327 + $0xb0] sm:$0xff]
      %v356 = vld [vmem:[%s327 + $0xb8] sm:$0xff]
      %v357 = vld [vmem:[%s327 + $0xc0] sm:$0xff]
      %v358 = vld [vmem:[%s327 + $0xc8] sm:$0xff]
      %v359 = vld [vmem:[%s327 + $0xd0] sm:$0xff]
      %v360 = vld [vmem:[%s327 + $0xd8] sm:$0xff]
      %v361 = vld [vmem:[%s327 + $0xe0] sm:$0xff]
      %v362 = vld [vmem:[%s327 + $0xe8] sm:$0xff]
      %v363 = vld [vmem:[%s327 + $0xf0] sm:$0xff]
      %v364 = vld [vmem:[%s327 + $0xf8] sm:$0xff]
      %v365 = vld [vmem:[%s1] sm:$0xf]
      %v366 = vld [vmem:[%s2] sm:$0x1]
      %v368 = vperm.slane %v366, 0
      %vm370 = vcmask 31744
      %v372 = vsel %vm370, %v333, 0
      %v375 = vsel %vm370, %v334, 0
      %v378 = vsel %vm370, %v335, 0
      %v381 = vsel %vm370, %v336, 0
      %v384 = vsel %vm370, %v337, 0
      %v387 = vsel %vm370, %v338, 0
      %v390 = vsel %vm370, %v339, 0
      %v393 = vsel %vm370, %v340, 0
      %v396 = vsel %vm370, %v341, 0
      %v399 = vsel %vm370, %v342, 0
      %v402 = vsel %vm370, %v343, 0
      %v405 = vsel %vm370, %v344, 0
      %v408 = vsel %vm370, %v345, 0
      %v411 = vsel %vm370, %v346, 0
      %v414 = vsel %vm370, %v347, 0
      %v417 = vsel %vm370, %v348, 0
      %v420 = vsel %vm370, %v349, 0
      %v423 = vsel %vm370, %v350, 0
      %v426 = vsel %vm370, %v351, 0
      %v429 = vsel %vm370, %v352, 0
      %v432 = vsel %vm370, %v353, 0
      %v435 = vsel %vm370, %v354, 0
      %v438 = vsel %vm370, %v355, 0
      %v441 = vsel %vm370, %v356, 0
      %v444 = vsel %vm370, %v357, 0
      %v447 = vsel %vm370, %v358, 0
      %v450 = vsel %vm370, %v359, 0
      %v453 = vsel %vm370, %v360, 0
      %v456 = vsel %vm370, %v361, 0
      %v459 = vsel %vm370, %v362, 0
      %v462 = vsel %vm370, %v363, 0
      %v465 = vsel %vm370, %v364, 0
      %vm467 = vcmask 1043456
      %v469 = vsel %vm467, %v365, 0
      %471 = vmatpush.msra.mxu0 0.0
      %472 = vmatpush.msra.mxu0 0.0
      %473 = vmatpush.msra.mxu0 0.0
      %474 = vmatpush.msra.mxu0 0.0
      %475 = vmatpush.msra.mxu0 0.0
      %476 = vmatpush.msra.mxu0 0.0
      %477 = vmatpush.msra.mxu0 0.0
      %478 = vmatpush.msra.mxu0 0.0
      %479 = vmatpush.msra.mxu0 0.0
      %480 = vmatpush.msra.mxu0 0.0
      %481 = vmatpush.msra.mxu0 0.0
      %482 = vmatpush.msra.mxu0 0.0
      %483 = vmatpush.msra.mxu0 0.0
      %484 = vmatpush.msra.mxu0 0.0
      %485 = vmatpush.msra.mxu0 0.0
      %486 = vmatpush.msra.mxu0 %v469
      %487 = vmatmul.f32.gmra.mxu0 %v372
      %v488 = vpop.f32.mrf.mxu0
      %v489 = vadd.f32 %v368, %v488
      %490 = vmatmul.f32.gmra.mxu0 %v375
      %v491 = vpop.f32.mrf.mxu0
      %v492 = vadd.f32 %v368, %v491
      %493 = vmatmul.f32.gmra.mxu0 %v378
      %v494 = vpop.f32.mrf.mxu0
      %v495 = vadd.f32 %v368, %v494
      %496 = vmatmul.f32.gmra.mxu0 %v381
      %v497 = vpop.f32.mrf.mxu0
      %v498 = vadd.f32 %v368, %v497
      %499 = vmatmul.f32.gmra.mxu0 %v384
      %v500 = vpop.f32.mrf.mxu0
      %v501 = vadd.f32 %v368, %v500
      %502 = vmatmul.f32.gmra.mxu0 %v387
      %v503 = vpop.f32.mrf.mxu0
      %v504 = vadd.f32 %v368, %v503
      %505 = vmatmul.f32.gmra.mxu0 %v390
      %v506 = vpop.f32.mrf.mxu0
      %v507 = vadd.f32 %v368, %v506
      %508 = vmatmul.f32.gmra.mxu0 %v393
      %v509 = vpop.f32.mrf.mxu0
      %v510 = vadd.f32 %v368, %v509
      %511 = vmatmul.f32.gmra.mxu0 %v396
      %v512 = vpop.f32.mrf.mxu0
      %v513 = vadd.f32 %v368, %v512
      %514 = vmatmul.f32.gmra.mxu0 %v399
      %v515 = vpop.f32.mrf.mxu0
      %v516 = vadd.f32 %v368, %v515
      %517 = vmatmul.f32.gmra.mxu0 %v402
      %v518 = vpop.f32.mrf.mxu0
      %v519 = vadd.f32 %v368, %v518
      %520 = vmatmul.f32.gmra.mxu0 %v405
      %v521 = vpop.f32.mrf.mxu0
      %v522 = vadd.f32 %v368, %v521
      %523 = vmatmul.f32.gmra.mxu0 %v408
      %v524 = vpop.f32.mrf.mxu0
      %v525 = vadd.f32 %v368, %v524
      %526 = vmatmul.f32.gmra.mxu0 %v411
      %v527 = vpop.f32.mrf.mxu0
      %v528 = vadd.f32 %v368, %v527
      %529 = vmatmul.f32.gmra.mxu0 %v414
      %v530 = vpop.f32.mrf.mxu0
      %v531 = vadd.f32 %v368, %v530
      %532 = vmatmul.f32.gmra.mxu0 %v417
      %v533 = vpop.f32.mrf.mxu0
      %v534 = vadd.f32 %v368, %v533
      %535 = vmatmul.f32.gmra.mxu0 %v420
      %v536 = vpop.f32.mrf.mxu0
      %v537 = vadd.f32 %v368, %v536
      %538 = vmatmul.f32.gmra.mxu0 %v423
      %v539 = vpop.f32.mrf.mxu0
      %v540 = vadd.f32 %v368, %v539
      %541 = vmatmul.f32.gmra.mxu0 %v426
      %v542 = vpop.f32.mrf.mxu0
      %v543 = vadd.f32 %v368, %v542
      %544 = vmatmul.f32.gmra.mxu0 %v429
      %v545 = vpop.f32.mrf.mxu0
      %v546 = vadd.f32 %v368, %v545
      %547 = vmatmul.f32.gmra.mxu0 %v432
      %v548 = vpop.f32.mrf.mxu0
      %v549 = vadd.f32 %v368, %v548
      %550 = vmatmul.f32.gmra.mxu0 %v435
      %v551 = vpop.f32.mrf.mxu0
      %v552 = vadd.f32 %v368, %v551
      %553 = vmatmul.f32.gmra.mxu0 %v438
      %v554 = vpop.f32.mrf.mxu0
      %v555 = vadd.f32 %v368, %v554
      %556 = vmatmul.f32.gmra.mxu0 %v441
      %v557 = vpop.f32.mrf.mxu0
      %v558 = vadd.f32 %v368, %v557
      %559 = vmatmul.f32.gmra.mxu0 %v444
      %v560 = vpop.f32.mrf.mxu0
      %v561 = vadd.f32 %v368, %v560
      %562 = vmatmul.f32.gmra.mxu0 %v447
      %v563 = vpop.f32.mrf.mxu0
      %v564 = vadd.f32 %v368, %v563
      %565 = vmatmul.f32.gmra.mxu0 %v450
      %v566 = vpop.f32.mrf.mxu0
      %v567 = vadd.f32 %v368, %v566
      %568 = vmatmul.f32.gmra.mxu0 %v453
      %v569 = vpop.f32.mrf.mxu0
      %v570 = vadd.f32 %v368, %v569
      %571 = vmatmul.f32.gmra.mxu0 %v456
      %v572 = vpop.f32.mrf.mxu0
      %v573 = vadd.f32 %v368, %v572
      %574 = vmatmul.f32.gmra.mxu0 %v459
      %v575 = vpop.f32.mrf.mxu0
      %v576 = vadd.f32 %v368, %v575
      %577 = vmatmul.f32.gmra.mxu0 %v462
      %v578 = vpop.f32.mrf.mxu0
      %v579 = vadd.f32 %v368, %v578
      %580 = vmatmul.f32.gmra.mxu0 %v465
      %v581 = vpop.f32.mrf.mxu0
      %v582 = vadd.f32 %v368, %v581
      %583 = vdwg.mxu0
      %v584 = vmax.f32 %v489, 0.0
      %v585 = vmax.f32 %v492, 0.0
      %v586 = vmax.f32 %v495, 0.0
      %v587 = vmax.f32 %v498, 0.0
      %v588 = vmax.f32 %v501, 0.0
      %v589 = vmax.f32 %v504, 0.0
      %v590 = vmax.f32 %v507, 0.0
      %v591 = vmax.f32 %v510, 0.0
      %v592 = vmax.f32 %v513, 0.0
      %v593 = vmax.f32 %v516, 0.0
      %v594 = vmax.f32 %v519, 0.0
      %v595 = vmax.f32 %v522, 0.0
      %v596 = vmax.f32 %v525, 0.0
      %v597 = vmax.f32 %v528, 0.0
      %v598 = vmax.f32 %v531, 0.0
      %v599 = vmax.f32 %v534, 0.0
      %v600 = vmax.f32 %v537, 0.0
      %v601 = vmax.f32 %v540, 0.0
      %v602 = vmax.f32 %v543, 0.0
      %v603 = vmax.f32 %v546, 0.0
      %v604 = vmax.f32 %v549, 0.0
      %v605 = vmax.f32 %v552, 0.0
      %v606 = vmax.f32 %v555, 0.0
      %v607 = vmax.f32 %v558, 0.0
      %v608 = vmax.f32 %v561, 0.0
      %v609 = vmax.f32 %v564, 0.0
      %v610 = vmax.f32 %v567, 0.0
      %v611 = vmax.f32 %v570, 0.0
      %v612 = vmax.f32 %v573, 0.0
      %v613 = vmax.f32 %v576, 0.0
      %v614 = vmax.f32 %v579, 0.0
      %v615 = vmax.f32 %v582, 0.0
      %v616 = vlaneseq
      %v617 = vshrl.u32 %v616, 7
      %v618 = vadd.s32 %v617, 8
      %v619 = vadd.s32 %v617, 16
      %v620 = vadd.s32 %v617, 24
      %v621 = vadd.s32 %v617, 32
      %v622 = vadd.s32 %v617, 40
      %v623 = vadd.s32 %v617, 48
      %v624 = vadd.s32 %v617, 56
      %v625 = vadd.s32 %v617, 64
      %v626 = vadd.s32 %v617, 72
      %v627 = vadd.s32 %v617, 80
      %v628 = vadd.s32 %v617, 88
      %v629 = vadd.s32 %v617, 96
      %v630 = vadd.s32 %v617, 104
      %v631 = vadd.s32 %v617, 112
      %v632 = vadd.s32 %v617, 120
      %v633 = vadd.s32 %v617, 128
      %v634 = vadd.s32 %v617, 136
      %v635 = vadd.s32 %v617, 144
      %v636 = vadd.s32 %v617, 152
      %v637 = vadd.s32 %v617, 160
      %v638 = vadd.s32 %v617, 168
      %v639 = vadd.s32 %v617, 176
      %v640 = vadd.s32 %v617, 184
      %v641 = vadd.s32 %v617, 192
      %v642 = vadd.s32 %v617, 200
      %v643 = vadd.s32 %v617, 208
      %v644 = vadd.s32 %v617, 216
      %v645 = vadd.s32 %v617, 224
      %v646 = vadd.s32 %v617, 232
      %v647 = vadd.s32 %v617, 240
      %v648 = vadd.s32 %v617, 248
      %vm649 = vcmp.lt.s32.totalorder %v617, 0
      %v650 = vsub.s32 0, %v617
      %v651 = vsel %vm649, %v650, %v617
      %v652 = vshrl.u32 %v651, 4
      %v653 = vand.u32 %v651, 15
      %v654 = vsub.s32 0, %v653
      %v655 = vsel %vm649, %v654, %v653
      %vm656 = vcmp.lt.s32.totalorder %v618, 0
      %v657 = vsub.s32 0, %v618
      %v658 = vsel %vm656, %v657, %v618
      %v659 = vshrl.u32 %v658, 4
      %v660 = vand.u32 %v658, 15
      %v661 = vsub.s32 0, %v660
      %v662 = vsel %vm656, %v661, %v660
      %vm663 = vcmp.lt.s32.totalorder %v619, 0
      %v664 = vsub.s32 0, %v619
      %v665 = vsel %vm663, %v664, %v619
      %v666 = vshrl.u32 %v665, 4
      %v667 = vand.u32 %v665, 15
      %v668 = vsub.s32 0, %v667
      %v669 = vsel %vm663, %v668, %v667
      %vm670 = vcmp.lt.s32.totalorder %v620, 0
      %v671 = vsub.s32 0, %v620
      %v672 = vsel %vm670, %v671, %v620
      %v673 = vshrl.u32 %v672, 4
      %v674 = vand.u32 %v672, 15
      %v675 = vsub.s32 0, %v674
      %v676 = vsel %vm670, %v675, %v674
      %vm677 = vcmp.lt.s32.totalorder %v621, 0
      %v678 = vsub.s32 0, %v621
      %v679 = vsel %vm677, %v678, %v621
      %v680 = vshrl.u32 %v679, 4
      %v681 = vand.u32 %v679, 15
      %v682 = vsub.s32 0, %v681
      %v683 = vsel %vm677, %v682, %v681
      %vm684 = vcmp.lt.s32.totalorder %v622, 0
      %v685 = vsub.s32 0, %v622
      %v686 = vsel %vm684, %v685, %v622
      %v687 = vshrl.u32 %v686, 4
      %v688 = vand.u32 %v686, 15
      %v689 = vsub.s32 0, %v688
      %v690 = vsel %vm684, %v689, %v688
      %vm691 = vcmp.lt.s32.totalorder %v623, 0
      %v692 = vsub.s32 0, %v623
      %v693 = vsel %vm691, %v692, %v623
      %v694 = vshrl.u32 %v693, 4
      %v695 = vand.u32 %v693, 15
      %v696 = vsub.s32 0, %v695
      %v697 = vsel %vm691, %v696, %v695
      %vm698 = vcmp.lt.s32.totalorder %v624, 0
      %v699 = vsub.s32 0, %v624
      %v700 = vsel %vm698, %v699, %v624
      %v701 = vshrl.u32 %v700, 4
      %v702 = vand.u32 %v700, 15
      %v703 = vsub.s32 0, %v702
      %v704 = vsel %vm698, %v703, %v702
      %vm705 = vcmp.lt.s32.totalorder %v625, 0
      %v706 = vsub.s32 0, %v625
      %v707 = vsel %vm705, %v706, %v625
      %v708 = vshrl.u32 %v707, 4
      %v709 = vand.u32 %v707, 15
      %v710 = vsub.s32 0, %v709
      %v711 = vsel %vm705, %v710, %v709
      %vm712 = vcmp.lt.s32.totalorder %v626, 0
      %v713 = vsub.s32 0, %v626
      %v714 = vsel %vm712, %v713, %v626
      %v715 = vshrl.u32 %v714, 4
      %v716 = vand.u32 %v714, 15
      %v717 = vsub.s32 0, %v716
      %v718 = vsel %vm712, %v717, %v716
      %vm719 = vcmp.lt.s32.totalorder %v627, 0
      %v720 = vsub.s32 0, %v627
      %v721 = vsel %vm719, %v720, %v627
      %v722 = vshrl.u32 %v721, 4
      %v723 = vand.u32 %v721, 15
      %v724 = vsub.s32 0, %v723
      %v725 = vsel %vm719, %v724, %v723
      %vm726 = vcmp.lt.s32.totalorder %v628, 0
      %v727 = vsub.s32 0, %v628
      %v728 = vsel %vm726, %v727, %v628
      %v729 = vshrl.u32 %v728, 4
      %v730 = vand.u32 %v728, 15
      %v731 = vsub.s32 0, %v730
      %v732 = vsel %vm726, %v731, %v730
      %vm733 = vcmp.lt.s32.totalorder %v629, 0
      %v734 = vsub.s32 0, %v629
      %v735 = vsel %vm733, %v734, %v629
      %v736 = vshrl.u32 %v735, 4
      %v737 = vand.u32 %v735, 15
      %v738 = vsub.s32 0, %v737
      %v739 = vsel %vm733, %v738, %v737
      %vm740 = vcmp.lt.s32.totalorder %v630, 0
      %v741 = vsub.s32 0, %v630
      %v742 = vsel %vm740, %v741, %v630
      %v743 = vshrl.u32 %v742, 4
      %v744 = vand.u32 %v742, 15
      %v745 = vsub.s32 0, %v744
      %v746 = vsel %vm740, %v745, %v744
      %vm747 = vcmp.lt.s32.totalorder %v631, 0
      %v748 = vsub.s32 0, %v631
      %v749 = vsel %vm747, %v748, %v631
      %v750 = vshrl.u32 %v749, 4
      %v751 = vand.u32 %v749, 15
      %v752 = vsub.s32 0, %v751
      %v753 = vsel %vm747, %v752, %v751
      %vm754 = vcmp.lt.s32.totalorder %v632, 0
      %v755 = vsub.s32 0, %v632
      %v756 = vsel %vm754, %v755, %v632
      %v757 = vshrl.u32 %v756, 4
      %v758 = vand.u32 %v756, 15
      %v759 = vsub.s32 0, %v758
      %v760 = vsel %vm754, %v759, %v758
      %vm761 = vcmp.lt.s32.totalorder %v633, 0
      %v762 = vsub.s32 0, %v633
      %v763 = vsel %vm761, %v762, %v633
      %v764 = vshrl.u32 %v763, 4
      %v765 = vand.u32 %v763, 15
      %v766 = vsub.s32 0, %v765
      %v767 = vsel %vm761, %v766, %v765
      %vm768 = vcmp.lt.s32.totalorder %v634, 0
      %v769 = vsub.s32 0, %v634
      %v770 = vsel %vm768, %v769, %v634
      %v771 = vshrl.u32 %v770, 4
      %v772 = vand.u32 %v770, 15
      %v773 = vsub.s32 0, %v772
      %v774 = vsel %vm768, %v773, %v772
      %vm775 = vcmp.lt.s32.totalorder %v635, 0
      %v776 = vsub.s32 0, %v635
      %v777 = vsel %vm775, %v776, %v635
      %v778 = vshrl.u32 %v777, 4
      %v779 = vand.u32 %v777, 15
      %v780 = vsub.s32 0, %v779
      %v781 = vsel %vm775, %v780, %v779
      %vm782 = vcmp.lt.s32.totalorder %v636, 0
      %v783 = vsub.s32 0, %v636
      %v784 = vsel %vm782, %v783, %v636
      %v785 = vshrl.u32 %v784, 4
      %v786 = vand.u32 %v784, 15
      %v787 = vsub.s32 0, %v786
      %v788 = vsel %vm782, %v787, %v786
      %vm789 = vcmp.lt.s32.totalorder %v637, 0
      %v790 = vsub.s32 0, %v637
      %v791 = vsel %vm789, %v790, %v637
      %v792 = vshrl.u32 %v791, 4
      %v793 = vand.u32 %v791, 15
      %v794 = vsub.s32 0, %v793
      %v795 = vsel %vm789, %v794, %v793
      %vm796 = vcmp.lt.s32.totalorder %v638, 0
      %v797 = vsub.s32 0, %v638
      %v798 = vsel %vm796, %v797, %v638
      %v799 = vshrl.u32 %v798, 4
      %v800 = vand.u32 %v798, 15
      %v801 = vsub.s32 0, %v800
      %v802 = vsel %vm796, %v801, %v800
      %vm803 = vcmp.lt.s32.totalorder %v639, 0
      %v804 = vsub.s32 0, %v639
      %v805 = vsel %vm803, %v804, %v639
      %v806 = vshrl.u32 %v805, 4
      %v807 = vand.u32 %v805, 15
      %v808 = vsub.s32 0, %v807
      %v809 = vsel %vm803, %v808, %v807
      %vm810 = vcmp.lt.s32.totalorder %v640, 0
      %v811 = vsub.s32 0, %v640
      %v812 = vsel %vm810, %v811, %v640
      %v813 = vshrl.u32 %v812, 4
      %v814 = vand.u32 %v812, 15
      %v815 = vsub.s32 0, %v814
      %v816 = vsel %vm810, %v815, %v814
      %vm817 = vcmp.lt.s32.totalorder %v641, 0
      %v818 = vsub.s32 0, %v641
      %v819 = vsel %vm817, %v818, %v641
      %v820 = vshrl.u32 %v819, 4
      %v821 = vand.u32 %v819, 15
      %v822 = vsub.s32 0, %v821
      %v823 = vsel %vm817, %v822, %v821
      %vm824 = vcmp.lt.s32.totalorder %v642, 0
      %v825 = vsub.s32 0, %v642
      %v826 = vsel %vm824, %v825, %v642
      %v827 = vshrl.u32 %v826, 4
      %v828 = vand.u32 %v826, 15
      %v829 = vsub.s32 0, %v828
      %v830 = vsel %vm824, %v829, %v828
      %vm831 = vcmp.lt.s32.totalorder %v643, 0
      %v832 = vsub.s32 0, %v643
      %v833 = vsel %vm831, %v832, %v643
      %v834 = vshrl.u32 %v833, 4
      %v835 = vand.u32 %v833, 15
      %v836 = vsub.s32 0, %v835
      %v837 = vsel %vm831, %v836, %v835
      %vm838 = vcmp.lt.s32.totalorder %v644, 0
      %v839 = vsub.s32 0, %v644
      %v840 = vsel %vm838, %v839, %v644
      %v841 = vshrl.u32 %v840, 4
      %v842 = vand.u32 %v840, 15
      %v843 = vsub.s32 0, %v842
      %v844 = vsel %vm838, %v843, %v842
      %vm845 = vcmp.lt.s32.totalorder %v645, 0
      %v846 = vsub.s32 0, %v645
      %v847 = vsel %vm845, %v846, %v645
      %v848 = vshrl.u32 %v847, 4
      %v849 = vand.u32 %v847, 15
      %v850 = vsub.s32 0, %v849
      %v851 = vsel %vm845, %v850, %v849
      %vm852 = vcmp.lt.s32.totalorder %v646, 0
      %v853 = vsub.s32 0, %v646
      %v854 = vsel %vm852, %v853, %v646
      %v855 = vshrl.u32 %v854, 4
      %v856 = vand.u32 %v854, 15
      %v857 = vsub.s32 0, %v856
      %v858 = vsel %vm852, %v857, %v856
      %vm859 = vcmp.lt.s32.totalorder %v647, 0
      %v860 = vsub.s32 0, %v647
      %v861 = vsel %vm859, %v860, %v647
      %v862 = vshrl.u32 %v861, 4
      %v863 = vand.u32 %v861, 15
      %v864 = vsub.s32 0, %v863
      %v865 = vsel %vm859, %v864, %v863
      %vm866 = vcmp.lt.s32.totalorder %v648, 0
      %v867 = vsub.s32 0, %v648
      %v868 = vsel %vm866, %v867, %v648
      %v869 = vshrl.u32 %v868, 4
      %v870 = vand.u32 %v868, 15
      %v871 = vsub.s32 0, %v870
      %v872 = vsel %vm866, %v871, %v870
      %vm873 = vcmp.ne.s32.totalorder %v655, 0
      %vm874 = vcmp.ne.s32.totalorder %v662, 0
      %vm875 = vcmp.ne.s32.totalorder %v669, 0
      %vm876 = vcmp.ne.s32.totalorder %v676, 0
      %vm877 = vcmp.ne.s32.totalorder %v683, 0
      %vm878 = vcmp.ne.s32.totalorder %v690, 0
      %vm879 = vcmp.ne.s32.totalorder %v697, 0
      %vm880 = vcmp.ne.s32.totalorder %v704, 0
      %vm881 = vcmp.ne.s32.totalorder %v711, 0
      %vm882 = vcmp.ne.s32.totalorder %v718, 0
      %vm883 = vcmp.ne.s32.totalorder %v725, 0
      %vm884 = vcmp.ne.s32.totalorder %v732, 0
      %vm885 = vcmp.ne.s32.totalorder %v739, 0
      %vm886 = vcmp.ne.s32.totalorder %v746, 0
      %vm887 = vcmp.ne.s32.totalorder %v753, 0
      %vm888 = vcmp.ne.s32.totalorder %v760, 0
      %vm889 = vcmp.ne.s32.totalorder %v767, 0
      %vm890 = vcmp.ne.s32.totalorder %v774, 0
      %vm891 = vcmp.ne.s32.totalorder %v781, 0
      %vm892 = vcmp.ne.s32.totalorder %v788, 0
      %vm893 = vcmp.ne.s32.totalorder %v795, 0
      %vm894 = vcmp.ne.s32.totalorder %v802, 0
      %vm895 = vcmp.ne.s32.totalorder %v809, 0
      %vm896 = vcmp.ne.s32.totalorder %v816, 0
      %vm897 = vcmp.ne.s32.totalorder %v823, 0
      %vm898 = vcmp.ne.s32.totalorder %v830, 0
      %vm899 = vcmp.ne.s32.totalorder %v837, 0
      %vm900 = vcmp.ne.s32.totalorder %v844, 0
      %vm901 = vcmp.ne.s32.totalorder %v851, 0
      %vm902 = vcmp.ne.s32.totalorder %v858, 0
      %vm903 = vcmp.ne.s32.totalorder %v865, 0
      %vm904 = vcmp.ne.s32.totalorder %v872, 0
      %vm905 = vcmp.lt.s32.totalorder %v655, 0
      %vm906 = vcmp.lt.s32.totalorder %v662, 0
      %vm907 = vcmp.lt.s32.totalorder %v669, 0
      %vm908 = vcmp.lt.s32.totalorder %v676, 0
      %vm909 = vcmp.lt.s32.totalorder %v683, 0
      %vm910 = vcmp.lt.s32.totalorder %v690, 0
      %vm911 = vcmp.lt.s32.totalorder %v697, 0
      %vm912 = vcmp.lt.s32.totalorder %v704, 0
      %vm913 = vcmp.lt.s32.totalorder %v711, 0
      %vm914 = vcmp.lt.s32.totalorder %v718, 0
      %vm915 = vcmp.lt.s32.totalorder %v725, 0
      %vm916 = vcmp.lt.s32.totalorder %v732, 0
      %vm917 = vcmp.lt.s32.totalorder %v739, 0
      %vm918 = vcmp.lt.s32.totalorder %v746, 0
      %vm919 = vcmp.lt.s32.totalorder %v753, 0
      %vm920 = vcmp.lt.s32.totalorder %v760, 0
      %vm921 = vcmp.lt.s32.totalorder %v767, 0
      %vm922 = vcmp.lt.s32.totalorder %v774, 0
      %vm923 = vcmp.lt.s32.totalorder %v781, 0
      %vm924 = vcmp.lt.s32.totalorder %v788, 0
      %vm925 = vcmp.lt.s32.totalorder %v795, 0
      %vm926 = vcmp.lt.s32.totalorder %v802, 0
      %vm927 = vcmp.lt.s32.totalorder %v809, 0
      %vm928 = vcmp.lt.s32.totalorder %v816, 0
      %vm929 = vcmp.lt.s32.totalorder %v823, 0
      %vm930 = vcmp.lt.s32.totalorder %v830, 0
      %vm931 = vcmp.lt.s32.totalorder %v837, 0
      %vm932 = vcmp.lt.s32.totalorder %v844, 0
      %vm933 = vcmp.lt.s32.totalorder %v851, 0
      %vm934 = vcmp.lt.s32.totalorder %v858, 0
      %vm935 = vcmp.lt.s32.totalorder %v865, 0
      %vm936 = vcmp.lt.s32.totalorder %v872, 0
      %vm937 = vmand %vm905, %vm873
      %vm938 = vmand %vm906, %vm874
      %vm939 = vmand %vm907, %vm875
      %vm940 = vmand %vm908, %vm876
      %vm941 = vmand %vm909, %vm877
      %vm942 = vmand %vm910, %vm878
      %vm943 = vmand %vm911, %vm879
      %vm944 = vmand %vm912, %vm880
      %vm945 = vmand %vm913, %vm881
      %vm946 = vmand %vm914, %vm882
      %vm947 = vmand %vm915, %vm883
      %vm948 = vmand %vm916, %vm884
      %vm949 = vmand %vm917, %vm885
      %vm950 = vmand %vm918, %vm886
      %vm951 = vmand %vm919, %vm887
      %vm952 = vmand %vm920, %vm888
      %vm953 = vmand %vm921, %vm889
      %vm954 = vmand %vm922, %vm890
      %vm955 = vmand %vm923, %vm891
      %vm956 = vmand %vm924, %vm892
      %vm957 = vmand %vm925, %vm893
      %vm958 = vmand %vm926, %vm894
      %vm959 = vmand %vm927, %vm895
      %vm960 = vmand %vm928, %vm896
      %vm961 = vmand %vm929, %vm897
      %vm962 = vmand %vm930, %vm898
      %vm963 = vmand %vm931, %vm899
      %vm964 = vmand %vm932, %vm900
      %vm965 = vmand %vm933, %vm901
      %vm966 = vmand %vm934, %vm902
      %vm967 = vmand %vm935, %vm903
      %vm968 = vmand %vm936, %vm904
      %v969 = vadd.s32 %v655, 16
      %v970 = vadd.s32 %v662, 16
      %v971 = vadd.s32 %v669, 16
      %v972 = vadd.s32 %v676, 16
      %v973 = vadd.s32 %v683, 16
      %v974 = vadd.s32 %v690, 16
      %v975 = vadd.s32 %v697, 16
      %v976 = vadd.s32 %v704, 16
      %v977 = vadd.s32 %v711, 16
      %v978 = vadd.s32 %v718, 16
      %v979 = vadd.s32 %v725, 16
      %v980 = vadd.s32 %v732, 16
      %v981 = vadd.s32 %v739, 16
      %v982 = vadd.s32 %v746, 16
      %v983 = vadd.s32 %v753, 16
      %v984 = vadd.s32 %v760, 16
      %v985 = vadd.s32 %v767, 16
      %v986 = vadd.s32 %v774, 16
      %v987 = vadd.s32 %v781, 16
      %v988 = vadd.s32 %v788, 16
      %v989 = vadd.s32 %v795, 16
      %v990 = vadd.s32 %v802, 16
      %v991 = vadd.s32 %v809, 16
      %v992 = vadd.s32 %v816, 16
      %v993 = vadd.s32 %v823, 16
      %v994 = vadd.s32 %v830, 16
      %v995 = vadd.s32 %v837, 16
      %v996 = vadd.s32 %v844, 16
      %v997 = vadd.s32 %v851, 16
      %v998 = vadd.s32 %v858, 16
      %v999 = vadd.s32 %v865, 16
      %v1000 = vadd.s32 %v872, 16
      %v1001 = vsel %vm937, %v969, %v655
      %v1002 = vsel %vm938, %v970, %v662
      %v1003 = vsel %vm939, %v971, %v669
      %v1004 = vsel %vm940, %v972, %v676
      %v1005 = vsel %vm941, %v973, %v683
      %v1006 = vsel %vm942, %v974, %v690
      %v1007 = vsel %vm943, %v975, %v697
      %v1008 = vsel %vm944, %v976, %v704
      %v1009 = vsel %vm945, %v977, %v711
      %v1010 = vsel %vm946, %v978, %v718
      %v1011 = vsel %vm947, %v979, %v725
      %v1012 = vsel %vm948, %v980, %v732
      %v1013 = vsel %vm949, %v981, %v739
      %v1014 = vsel %vm950, %v982, %v746
      %v1015 = vsel %vm951, %v983, %v753
      %v1016 = vsel %vm952, %v984, %v760
      %v1017 = vsel %vm953, %v985, %v767
      %v1018 = vsel %vm954, %v986, %v774
      %v1019 = vsel %vm955, %v987, %v781
      %v1020 = vsel %vm956, %v988, %v788
      %v1021 = vsel %vm957, %v989, %v795
      %v1022 = vsel %vm958, %v990, %v802
      %v1023 = vsel %vm959, %v991, %v809
      %v1024 = vsel %vm960, %v992, %v816
      %v1025 = vsel %vm961, %v993, %v823
      %v1026 = vsel %vm962, %v994, %v830
      %v1027 = vsel %vm963, %v995, %v837
      %v1028 = vsel %vm964, %v996, %v844
      %v1029 = vsel %vm965, %v997, %v851
      %v1030 = vsel %vm966, %v998, %v858
      %v1031 = vsel %vm967, %v999, %v865
      %v1032 = vsel %vm968, %v1000, %v872
      %vm1063 = vcmask 1040384
      %v1064 = vrot.slane %v584, 7
      %v1065 = vrot.slane %v585, 7
      %v1066 = vsel %vm1063, %v1064, %v1065
      %v1067 = vrot.slane %v586, 7
      %v1068 = vsel %vm1063, %v1065, %v1067
      %v1069 = vrot.slane %v587, 7
      %v1070 = vsel %vm1063, %v1067, %v1069
      %v1071 = vrot.slane %v588, 7
      %v1072 = vsel %vm1063, %v1069, %v1071
      %v1073 = vrot.slane %v589, 7
      %v1074 = vsel %vm1063, %v1071, %v1073
      %v1075 = vrot.slane %v590, 7
      %v1076 = vsel %vm1063, %v1073, %v1075
      %v1077 = vrot.slane %v591, 7
      %v1078 = vsel %vm1063, %v1075, %v1077
      %v1079 = vrot.slane %v592, 7
      %v1080 = vsel %vm1063, %v1077, %v1079
      %v1081 = vrot.slane %v593, 7
      %v1082 = vsel %vm1063, %v1079, %v1081
      %v1083 = vrot.slane %v594, 7
      %v1084 = vsel %vm1063, %v1081, %v1083
      %v1085 = vrot.slane %v595, 7
      %v1086 = vsel %vm1063, %v1083, %v1085
      %v1087 = vrot.slane %v596, 7
      %v1088 = vsel %vm1063, %v1085, %v1087
      %v1089 = vrot.slane %v597, 7
      %v1090 = vsel %vm1063, %v1087, %v1089
      %v1091 = vrot.slane %v598, 7
      %v1092 = vsel %vm1063, %v1089, %v1091
      %v1093 = vrot.slane %v599, 7
      %v1094 = vsel %vm1063, %v1091, %v1093
      %v1095 = vrot.slane %v600, 7
      %v1096 = vsel %vm1063, %v1093, %v1095
      %v1097 = vrot.slane %v601, 7
      %v1098 = vsel %vm1063, %v1095, %v1097
      %v1099 = vrot.slane %v602, 7
      %v1100 = vsel %vm1063, %v1097, %v1099
      %v1101 = vrot.slane %v603, 7
      %v1102 = vsel %vm1063, %v1099, %v1101
      %v1103 = vrot.slane %v604, 7
      %v1104 = vsel %vm1063, %v1101, %v1103
      %v1105 = vrot.slane %v605, 7
      %v1106 = vsel %vm1063, %v1103, %v1105
      %v1107 = vrot.slane %v606, 7
      %v1108 = vsel %vm1063, %v1105, %v1107
      %v1109 = vrot.slane %v607, 7
      %v1110 = vsel %vm1063, %v1107, %v1109
      %v1111 = vrot.slane %v608, 7
      %v1112 = vsel %vm1063, %v1109, %v1111
      %v1113 = vrot.slane %v609, 7
      %v1114 = vsel %vm1063, %v1111, %v1113
      %v1115 = vrot.slane %v610, 7
      %v1116 = vsel %vm1063, %v1113, %v1115
      %v1117 = vrot.slane %v611, 7
      %v1118 = vsel %vm1063, %v1115, %v1117
      %v1119 = vrot.slane %v612, 7
      %v1120 = vsel %vm1063, %v1117, %v1119
      %v1121 = vrot.slane %v613, 7
      %v1122 = vsel %vm1063, %v1119, %v1121
      %v1153 = vsel %vm1063, 0.0, %v1064
      %v1154 = vadd.s32 %v1001, 4294967295
      %v1155 = vadd.s32 %v1002, 4294967295
      %v1156 = vadd.s32 %v1003, 4294967295
      %v1157 = vadd.s32 %v1004, 4294967295
      %v1158 = vadd.s32 %v1005, 4294967295
      %v1159 = vadd.s32 %v1006, 4294967295
      %v1160 = vadd.s32 %v1007, 4294967295
      %v1161 = vadd.s32 %v1008, 4294967295
      %v1162 = vadd.s32 %v1009, 4294967295
      %v1163 = vadd.s32 %v1010, 4294967295
      %v1164 = vadd.s32 %v1011, 4294967295
      %v1165 = vadd.s32 %v1012, 4294967295
      %v1166 = vadd.s32 %v1013, 4294967295
      %v1167 = vadd.s32 %v1014, 4294967295
      %v1168 = vadd.s32 %v1015, 4294967295
      %v1169 = vadd.s32 %v1016, 4294967295
      %v1170 = vadd.s32 %v1017, 4294967295
      %v1171 = vadd.s32 %v1018, 4294967295
      %v1172 = vadd.s32 %v1019, 4294967295
      %v1173 = vadd.s32 %v1020, 4294967295
      %v1174 = vadd.s32 %v1021, 4294967295
      %v1175 = vadd.s32 %v1022, 4294967295
      %v1176 = vadd.s32 %v1023, 4294967295
      %v1177 = vadd.s32 %v1024, 4294967295
      %v1178 = vadd.s32 %v1025, 4294967295
      %v1179 = vadd.s32 %v1026, 4294967295
      %v1180 = vadd.s32 %v1027, 4294967295
      %v1181 = vadd.s32 %v1028, 4294967295
      %v1182 = vadd.s32 %v1029, 4294967295
      %v1183 = vadd.s32 %v1030, 4294967295
      %v1184 = vadd.s32 %v1031, 4294967295
      %v1185 = vadd.s32 %v1032, 4294967295
      %vm1186 = vcmp.ge.s32.totalorder %v1154, 0
      %vm1187 = vcmp.ge.s32.totalorder %v1155, 0
      %vm1188 = vcmp.ge.s32.totalorder %v1156, 0
      %vm1189 = vcmp.ge.s32.totalorder %v1157, 0
      %vm1190 = vcmp.ge.s32.totalorder %v1158, 0
      %vm1191 = vcmp.ge.s32.totalorder %v1159, 0
      %vm1192 = vcmp.ge.s32.totalorder %v1160, 0
      %vm1193 = vcmp.ge.s32.totalorder %v1161, 0
      %vm1194 = vcmp.ge.s32.totalorder %v1162, 0
      %vm1195 = vcmp.ge.s32.totalorder %v1163, 0
      %vm1196 = vcmp.ge.s32.totalorder %v1164, 0
      %vm1197 = vcmp.ge.s32.totalorder %v1165, 0
      %vm1198 = vcmp.ge.s32.totalorder %v1166, 0
      %vm1199 = vcmp.ge.s32.totalorder %v1167, 0
      %vm1200 = vcmp.ge.s32.totalorder %v1168, 0
      %vm1201 = vcmp.ge.s32.totalorder %v1169, 0
      %vm1202 = vcmp.ge.s32.totalorder %v1170, 0
      %vm1203 = vcmp.ge.s32.totalorder %v1171, 0
      %vm1204 = vcmp.ge.s32.totalorder %v1172, 0
      %vm1205 = vcmp.ge.s32.totalorder %v1173, 0
      %vm1206 = vcmp.ge.s32.totalorder %v1174, 0
      %vm1207 = vcmp.ge.s32.totalorder %v1175, 0
      %vm1208 = vcmp.ge.s32.totalorder %v1176, 0
      %vm1209 = vcmp.ge.s32.totalorder %v1177, 0
      %vm1210 = vcmp.ge.s32.totalorder %v1178, 0
      %vm1211 = vcmp.ge.s32.totalorder %v1179, 0
      %vm1212 = vcmp.ge.s32.totalorder %v1180, 0
      %vm1213 = vcmp.ge.s32.totalorder %v1181, 0
      %vm1214 = vcmp.ge.s32.totalorder %v1182, 0
      %vm1215 = vcmp.ge.s32.totalorder %v1183, 0
      %vm1216 = vcmp.ge.s32.totalorder %v1184, 0
      %vm1217 = vcmp.ge.s32.totalorder %v1185, 0
      %vm1218 = vcmp.lt.s32.totalorder %v1154, 16
      %vm1219 = vcmp.lt.s32.totalorder %v1155, 16
      %vm1220 = vcmp.lt.s32.totalorder %v1156, 16
      %vm1221 = vcmp.lt.s32.totalorder %v1157, 16
      %vm1222 = vcmp.lt.s32.totalorder %v1158, 16
      %vm1223 = vcmp.lt.s32.totalorder %v1159, 16
      %vm1224 = vcmp.lt.s32.totalorder %v1160, 16
      %vm1225 = vcmp.lt.s32.totalorder %v1161, 16
      %vm1226 = vcmp.lt.s32.totalorder %v1162, 16
      %vm1227 = vcmp.lt.s32.totalorder %v1163, 16
      %vm1228 = vcmp.lt.s32.totalorder %v1164, 16
      %vm1229 = vcmp.lt.s32.totalorder %v1165, 16
      %vm1230 = vcmp.lt.s32.totalorder %v1166, 16
      %vm1231 = vcmp.lt.s32.totalorder %v1167, 16
      %vm1232 = vcmp.lt.s32.totalorder %v1168, 16
      %vm1233 = vcmp.lt.s32.totalorder %v1169, 16
      %vm1234 = vcmp.lt.s32.totalorder %v1170, 16
      %vm1235 = vcmp.lt.s32.totalorder %v1171, 16
      %vm1236 = vcmp.lt.s32.totalorder %v1172, 16
      %vm1237 = vcmp.lt.s32.totalorder %v1173, 16
      %vm1238 = vcmp.lt.s32.totalorder %v1174, 16
      %vm1239 = vcmp.lt.s32.totalorder %v1175, 16
      %vm1240 = vcmp.lt.s32.totalorder %v1176, 16
      %vm1241 = vcmp.lt.s32.totalorder %v1177, 16
      %vm1242 = vcmp.lt.s32.totalorder %v1178, 16
      %vm1243 = vcmp.lt.s32.totalorder %v1179, 16
      %vm1244 = vcmp.lt.s32.totalorder %v1180, 16
      %vm1245 = vcmp.lt.s32.totalorder %v1181, 16
      %vm1246 = vcmp.lt.s32.totalorder %v1182, 16
      %vm1247 = vcmp.lt.s32.totalorder %v1183, 16
      %vm1248 = vcmp.lt.s32.totalorder %v1184, 16
      %vm1249 = vcmp.lt.s32.totalorder %v1185, 16
      %vm1250 = vmand %vm1186, %vm1218
      %vm1251 = vmand %vm1187, %vm1219
      %vm1252 = vmand %vm1188, %vm1220
      %vm1253 = vmand %vm1189, %vm1221
      %vm1254 = vmand %vm1190, %vm1222
      %vm1255 = vmand %vm1191, %vm1223
      %vm1256 = vmand %vm1192, %vm1224
      %vm1257 = vmand %vm1193, %vm1225
      %vm1258 = vmand %vm1194, %vm1226
      %vm1259 = vmand %vm1195, %vm1227
      %vm1260 = vmand %vm1196, %vm1228
      %vm1261 = vmand %vm1197, %vm1229
      %vm1262 = vmand %vm1198, %vm1230
      %vm1263 = vmand %vm1199, %vm1231
      %vm1264 = vmand %vm1200, %vm1232
      %vm1265 = vmand %vm1201, %vm1233
      %vm1266 = vmand %vm1202, %vm1234
      %vm1267 = vmand %vm1203, %vm1235
      %vm1268 = vmand %vm1204, %vm1236
      %vm1269 = vmand %vm1205, %vm1237
      %vm1270 = vmand %vm1206, %vm1238
      %vm1271 = vmand %vm1207, %vm1239
      %vm1272 = vmand %vm1208, %vm1240
      %vm1273 = vmand %vm1209, %vm1241
      %vm1274 = vmand %vm1210, %vm1242
      %vm1275 = vmand %vm1211, %vm1243
      %vm1276 = vmand %vm1212, %vm1244
      %vm1277 = vmand %vm1213, %vm1245
      %vm1278 = vmand %vm1214, %vm1246
      %vm1279 = vmand %vm1215, %vm1247
      %vm1280 = vmand %vm1216, %vm1248
      %vm1281 = vmand %vm1217, %vm1249
      %v1282 = vsel %vm1250, 1, 0
      %v1283 = vsel %vm1251, 1, 0
      %v1284 = vsel %vm1252, 1, 0
      %v1285 = vsel %vm1253, 1, 0
      %v1286 = vsel %vm1254, 1, 0
      %v1287 = vsel %vm1255, 1, 0
      %v1288 = vsel %vm1256, 1, 0
      %v1289 = vsel %vm1257, 1, 0
      %v1290 = vsel %vm1258, 1, 0
      %v1291 = vsel %vm1259, 1, 0
      %v1292 = vsel %vm1260, 1, 0
      %v1293 = vsel %vm1261, 1, 0
      %v1294 = vsel %vm1262, 1, 0
      %v1295 = vsel %vm1263, 1, 0
      %v1296 = vsel %vm1264, 1, 0
      %v1297 = vsel %vm1265, 1, 0
      %v1298 = vsel %vm1266, 1, 0
      %v1299 = vsel %vm1267, 1, 0
      %v1300 = vsel %vm1268, 1, 0
      %v1301 = vsel %vm1269, 1, 0
      %v1302 = vsel %vm1270, 1, 0
      %v1303 = vsel %vm1271, 1, 0
      %v1304 = vsel %vm1272, 1, 0
      %v1305 = vsel %vm1273, 1, 0
      %v1306 = vsel %vm1274, 1, 0
      %v1307 = vsel %vm1275, 1, 0
      %v1308 = vsel %vm1276, 1, 0
      %v1309 = vsel %vm1277, 1, 0
      %v1310 = vsel %vm1278, 1, 0
      %v1311 = vsel %vm1279, 1, 0
      %v1312 = vsel %vm1280, 1, 0
      %v1313 = vsel %vm1281, 1, 0
      %vm1314 = vcmp.eq.s32.totalorder %v1282, 1
      %vm1315 = vcmp.eq.s32.totalorder %v1283, 1
      %vm1316 = vcmp.eq.s32.totalorder %v1284, 1
      %vm1317 = vcmp.eq.s32.totalorder %v1285, 1
      %vm1318 = vcmp.eq.s32.totalorder %v1286, 1
      %vm1319 = vcmp.eq.s32.totalorder %v1287, 1
      %vm1320 = vcmp.eq.s32.totalorder %v1288, 1
      %vm1321 = vcmp.eq.s32.totalorder %v1289, 1
      %vm1322 = vcmp.eq.s32.totalorder %v1290, 1
      %vm1323 = vcmp.eq.s32.totalorder %v1291, 1
      %vm1324 = vcmp.eq.s32.totalorder %v1292, 1
      %vm1325 = vcmp.eq.s32.totalorder %v1293, 1
      %vm1326 = vcmp.eq.s32.totalorder %v1294, 1
      %vm1327 = vcmp.eq.s32.totalorder %v1295, 1
      %vm1328 = vcmp.eq.s32.totalorder %v1296, 1
      %vm1329 = vcmp.eq.s32.totalorder %v1297, 1
      %vm1330 = vcmp.eq.s32.totalorder %v1298, 1
      %vm1331 = vcmp.eq.s32.totalorder %v1299, 1
      %vm1332 = vcmp.eq.s32.totalorder %v1300, 1
      %vm1333 = vcmp.eq.s32.totalorder %v1301, 1
      %vm1334 = vcmp.eq.s32.totalorder %v1302, 1
      %vm1335 = vcmp.eq.s32.totalorder %v1303, 1
      %vm1336 = vcmp.eq.s32.totalorder %v1304, 1
      %vm1337 = vcmp.eq.s32.totalorder %v1305, 1
      %vm1338 = vcmp.eq.s32.totalorder %v1306, 1
      %vm1339 = vcmp.eq.s32.totalorder %v1307, 1
      %vm1340 = vcmp.eq.s32.totalorder %v1308, 1
      %vm1341 = vcmp.eq.s32.totalorder %v1309, 1
      %vm1342 = vcmp.eq.s32.totalorder %v1310, 1
      %vm1343 = vcmp.eq.s32.totalorder %v1311, 1
      %vm1344 = vcmp.eq.s32.totalorder %v1312, 1
      %vm1345 = vcmp.eq.s32.totalorder %v1313, 1
      %v1346 = vsel %vm1316, %v1153, 0.0
      %v1347 = vsel %vm1317, %v1066, 0.0
      %v1348 = vsel %vm1318, %v1068, 0.0
      %v1349 = vsel %vm1319, %v1070, 0.0
      %v1350 = vsel %vm1320, %v1072, 0.0
      %v1351 = vsel %vm1321, %v1074, 0.0
      %v1352 = vsel %vm1322, %v1076, 0.0
      %v1353 = vsel %vm1323, %v1078, 0.0
      %v1354 = vsel %vm1324, %v1080, 0.0
      %v1355 = vsel %vm1325, %v1082, 0.0
      %v1356 = vsel %vm1326, %v1084, 0.0
      %v1357 = vsel %vm1327, %v1086, 0.0
      %v1358 = vsel %vm1328, %v1088, 0.0
      %v1359 = vsel %vm1329, %v1090, 0.0
      %v1360 = vsel %vm1330, %v1092, 0.0
      %v1361 = vsel %vm1331, %v1094, 0.0
      %v1362 = vsel %vm1332, %v1096, 0.0
      %v1363 = vsel %vm1333, %v1098, 0.0
      %v1364 = vsel %vm1334, %v1100, 0.0
      %v1365 = vsel %vm1335, %v1102, 0.0
      %v1366 = vsel %vm1336, %v1104, 0.0
      %v1367 = vsel %vm1337, %v1106, 0.0
      %v1368 = vsel %vm1338, %v1108, 0.0
      %v1369 = vsel %vm1339, %v1110, 0.0
      %v1370 = vsel %vm1340, %v1112, 0.0
      %v1371 = vsel %vm1341, %v1114, 0.0
      %v1372 = vsel %vm1342, %v1116, 0.0
      %v1373 = vsel %vm1343, %v1118, 0.0
      %v1374 = vsel %vm1344, %v1120, 0.0
      %v1375 = vsel %vm1345, %v1122, 0.0
      %vm1376 = vcmp.ge.s32.totalorder %v1001, 0
      %vm1377 = vcmp.ge.s32.totalorder %v1002, 0
      %vm1378 = vcmp.ge.s32.totalorder %v1003, 0
      %vm1379 = vcmp.ge.s32.totalorder %v1004, 0
      %vm1380 = vcmp.ge.s32.totalorder %v1005, 0
      %vm1381 = vcmp.ge.s32.totalorder %v1006, 0
      %vm1382 = vcmp.ge.s32.totalorder %v1007, 0
      %vm1383 = vcmp.ge.s32.totalorder %v1008, 0
      %vm1384 = vcmp.ge.s32.totalorder %v1009, 0
      %vm1385 = vcmp.ge.s32.totalorder %v1010, 0
      %vm1386 = vcmp.ge.s32.totalorder %v1011, 0
      %vm1387 = vcmp.ge.s32.totalorder %v1012, 0
      %vm1388 = vcmp.ge.s32.totalorder %v1013, 0
      %vm1389 = vcmp.ge.s32.totalorder %v1014, 0
      %vm1390 = vcmp.ge.s32.totalorder %v1015, 0
      %vm1391 = vcmp.ge.s32.totalorder %v1016, 0
      %vm1392 = vcmp.ge.s32.totalorder %v1017, 0
      %vm1393 = vcmp.ge.s32.totalorder %v1018, 0
      %vm1394 = vcmp.ge.s32.totalorder %v1019, 0
      %vm1395 = vcmp.ge.s32.totalorder %v1020, 0
      %vm1396 = vcmp.ge.s32.totalorder %v1021, 0
      %vm1397 = vcmp.ge.s32.totalorder %v1022, 0
      %vm1398 = vcmp.ge.s32.totalorder %v1023, 0
      %vm1399 = vcmp.ge.s32.totalorder %v1024, 0
      %vm1400 = vcmp.ge.s32.totalorder %v1025, 0
      %vm1401 = vcmp.ge.s32.totalorder %v1026, 0
      %vm1402 = vcmp.ge.s32.totalorder %v1027, 0
      %vm1403 = vcmp.ge.s32.totalorder %v1028, 0
      %vm1404 = vcmp.ge.s32.totalorder %v1029, 0
      %vm1405 = vcmp.ge.s32.totalorder %v1030, 0
      %vm1406 = vcmp.ge.s32.totalorder %v1031, 0
      %vm1407 = vcmp.ge.s32.totalorder %v1032, 0
      %vm1408 = vcmp.lt.s32.totalorder %v1001, 16
      %vm1409 = vcmp.lt.s32.totalorder %v1002, 16
      %vm1410 = vcmp.lt.s32.totalorder %v1003, 16
      %vm1411 = vcmp.lt.s32.totalorder %v1004, 16
      %vm1412 = vcmp.lt.s32.totalorder %v1005, 16
      %vm1413 = vcmp.lt.s32.totalorder %v1006, 16
      %vm1414 = vcmp.lt.s32.totalorder %v1007, 16
      %vm1415 = vcmp.lt.s32.totalorder %v1008, 16
      %vm1416 = vcmp.lt.s32.totalorder %v1009, 16
      %vm1417 = vcmp.lt.s32.totalorder %v1010, 16
      %vm1418 = vcmp.lt.s32.totalorder %v1011, 16
      %vm1419 = vcmp.lt.s32.totalorder %v1012, 16
      %vm1420 = vcmp.lt.s32.totalorder %v1013, 16
      %vm1421 = vcmp.lt.s32.totalorder %v1014, 16
      %vm1422 = vcmp.lt.s32.totalorder %v1015, 16
      %vm1423 = vcmp.lt.s32.totalorder %v1016, 16
      %vm1424 = vcmp.lt.s32.totalorder %v1017, 16
      %vm1425 = vcmp.lt.s32.totalorder %v1018, 16
      %vm1426 = vcmp.lt.s32.totalorder %v1019, 16
      %vm1427 = vcmp.lt.s32.totalorder %v1020, 16
      %vm1428 = vcmp.lt.s32.totalorder %v1021, 16
      %vm1429 = vcmp.lt.s32.totalorder %v1022, 16
      %vm1430 = vcmp.lt.s32.totalorder %v1023, 16
      %vm1431 = vcmp.lt.s32.totalorder %v1024, 16
      %vm1432 = vcmp.lt.s32.totalorder %v1025, 16
      %vm1433 = vcmp.lt.s32.totalorder %v1026, 16
      %vm1434 = vcmp.lt.s32.totalorder %v1027, 16
      %vm1435 = vcmp.lt.s32.totalorder %v1028, 16
      %vm1436 = vcmp.lt.s32.totalorder %v1029, 16
      %vm1437 = vcmp.lt.s32.totalorder %v1030, 16
      %vm1438 = vcmp.lt.s32.totalorder %v1031, 16
      %vm1439 = vcmp.lt.s32.totalorder %v1032, 16
      %vm1440 = vmand %vm1376, %vm1408
      %vm1441 = vmand %vm1377, %vm1409
      %vm1442 = vmand %vm1378, %vm1410
      %vm1443 = vmand %vm1379, %vm1411
      %vm1444 = vmand %vm1380, %vm1412
      %vm1445 = vmand %vm1381, %vm1413
      %vm1446 = vmand %vm1382, %vm1414
      %vm1447 = vmand %vm1383, %vm1415
      %vm1448 = vmand %vm1384, %vm1416
      %vm1449 = vmand %vm1385, %vm1417
      %vm1450 = vmand %vm1386, %vm1418
      %vm1451 = vmand %vm1387, %vm1419
      %vm1452 = vmand %vm1388, %vm1420
      %vm1453 = vmand %vm1389, %vm1421
      %vm1454 = vmand %vm1390, %vm1422
      %vm1455 = vmand %vm1391, %vm1423
      %vm1456 = vmand %vm1392, %vm1424
      %vm1457 = vmand %vm1393, %vm1425
      %vm1458 = vmand %vm1394, %vm1426
      %vm1459 = vmand %vm1395, %vm1427
      %vm1460 = vmand %vm1396, %vm1428
      %vm1461 = vmand %vm1397, %vm1429
      %vm1462 = vmand %vm1398, %vm1430
      %vm1463 = vmand %vm1399, %vm1431
      %vm1464 = vmand %vm1400, %vm1432
      %vm1465 = vmand %vm1401, %vm1433
      %vm1466 = vmand %vm1402, %vm1434
      %vm1467 = vmand %vm1403, %vm1435
      %vm1468 = vmand %vm1404, %vm1436
      %vm1469 = vmand %vm1405, %vm1437
      %vm1470 = vmand %vm1406, %vm1438
      %vm1471 = vmand %vm1407, %vm1439
      %v1472 = vsel %vm1440, 1, 0
      %v1473 = vsel %vm1441, 1, 0
      %v1474 = vsel %vm1442, 1, 0
      %v1475 = vsel %vm1443, 1, 0
      %v1476 = vsel %vm1444, 1, 0
      %v1477 = vsel %vm1445, 1, 0
      %v1478 = vsel %vm1446, 1, 0
      %v1479 = vsel %vm1447, 1, 0
      %v1480 = vsel %vm1448, 1, 0
      %v1481 = vsel %vm1449, 1, 0
      %v1482 = vsel %vm1450, 1, 0
      %v1483 = vsel %vm1451, 1, 0
      %v1484 = vsel %vm1452, 1, 0
      %v1485 = vsel %vm1453, 1, 0
      %v1486 = vsel %vm1454, 1, 0
      %v1487 = vsel %vm1455, 1, 0
      %v1488 = vsel %vm1456, 1, 0
      %v1489 = vsel %vm1457, 1, 0
      %v1490 = vsel %vm1458, 1, 0
      %v1491 = vsel %vm1459, 1, 0
      %v1492 = vsel %vm1460, 1, 0
      %v1493 = vsel %vm1461, 1, 0
      %v1494 = vsel %vm1462, 1, 0
      %v1495 = vsel %vm1463, 1, 0
      %v1496 = vsel %vm1464, 1, 0
      %v1497 = vsel %vm1465, 1, 0
      %v1498 = vsel %vm1466, 1, 0
      %v1499 = vsel %vm1467, 1, 0
      %v1500 = vsel %vm1468, 1, 0
      %v1501 = vsel %vm1469, 1, 0
      %v1502 = vsel %vm1470, 1, 0
      %v1503 = vsel %vm1471, 1, 0
      %vm1504 = vcmp.eq.s32.totalorder %v1472, 1
      %vm1505 = vcmp.eq.s32.totalorder %v1473, 1
      %vm1506 = vcmp.eq.s32.totalorder %v1474, 1
      %vm1507 = vcmp.eq.s32.totalorder %v1475, 1
      %vm1508 = vcmp.eq.s32.totalorder %v1476, 1
      %vm1509 = vcmp.eq.s32.totalorder %v1477, 1
      %vm1510 = vcmp.eq.s32.totalorder %v1478, 1
      %vm1511 = vcmp.eq.s32.totalorder %v1479, 1
      %vm1512 = vcmp.eq.s32.totalorder %v1480, 1
      %vm1513 = vcmp.eq.s32.totalorder %v1481, 1
      %vm1514 = vcmp.eq.s32.totalorder %v1482, 1
      %vm1515 = vcmp.eq.s32.totalorder %v1483, 1
      %vm1516 = vcmp.eq.s32.totalorder %v1484, 1
      %vm1517 = vcmp.eq.s32.totalorder %v1485, 1
      %vm1518 = vcmp.eq.s32.totalorder %v1486, 1
      %vm1519 = vcmp.eq.s32.totalorder %v1487, 1
      %vm1520 = vcmp.eq.s32.totalorder %v1488, 1
      %vm1521 = vcmp.eq.s32.totalorder %v1489, 1
      %vm1522 = vcmp.eq.s32.totalorder %v1490, 1
      %vm1523 = vcmp.eq.s32.totalorder %v1491, 1
      %vm1524 = vcmp.eq.s32.totalorder %v1492, 1
      %vm1525 = vcmp.eq.s32.totalorder %v1493, 1
      %vm1526 = vcmp.eq.s32.totalorder %v1494, 1
      %vm1527 = vcmp.eq.s32.totalorder %v1495, 1
      %vm1528 = vcmp.eq.s32.totalorder %v1496, 1
      %vm1529 = vcmp.eq.s32.totalorder %v1497, 1
      %vm1530 = vcmp.eq.s32.totalorder %v1498, 1
      %vm1531 = vcmp.eq.s32.totalorder %v1499, 1
      %vm1532 = vcmp.eq.s32.totalorder %v1500, 1
      %vm1533 = vcmp.eq.s32.totalorder %v1501, 1
      %vm1534 = vcmp.eq.s32.totalorder %v1502, 1
      %vm1535 = vcmp.eq.s32.totalorder %v1503, 1
      %v1536 = vsel %vm1506, %v584, 0.0
      %v1537 = vsel %vm1507, %v585, 0.0
      %v1538 = vsel %vm1508, %v586, 0.0
      %v1539 = vsel %vm1509, %v587, 0.0
      %v1540 = vsel %vm1510, %v588, 0.0
      %v1541 = vsel %vm1511, %v589, 0.0
      %v1542 = vsel %vm1512, %v590, 0.0
      %v1543 = vsel %vm1513, %v591, 0.0
      %v1544 = vsel %vm1514, %v592, 0.0
      %v1545 = vsel %vm1515, %v593, 0.0
      %v1546 = vsel %vm1516, %v594, 0.0
      %v1547 = vsel %vm1517, %v595, 0.0
      %v1548 = vsel %vm1518, %v596, 0.0
      %v1549 = vsel %vm1519, %v597, 0.0
      %v1550 = vsel %vm1520, %v598, 0.0
      %v1551 = vsel %vm1521, %v599, 0.0
      %v1552 = vsel %vm1522, %v600, 0.0
      %v1553 = vsel %vm1523, %v601, 0.0
      %v1554 = vsel %vm1524, %v602, 0.0
      %v1555 = vsel %vm1525, %v603, 0.0
      %v1556 = vsel %vm1526, %v604, 0.0
      %v1557 = vsel %vm1527, %v605, 0.0
      %v1558 = vsel %vm1528, %v606, 0.0
      %v1559 = vsel %vm1529, %v607, 0.0
      %v1560 = vsel %vm1530, %v608, 0.0
      %v1561 = vsel %vm1531, %v609, 0.0
      %v1562 = vsel %vm1532, %v610, 0.0
      %v1563 = vsel %vm1533, %v611, 0.0
      %v1564 = vsel %vm1534, %v612, 0.0
      %v1565 = vsel %vm1535, %v613, 0.0
      %vm1567 = vcmask 1046528
      %v1568 = vrot.slane %v584, 1
      %v1569 = vrot.slane %v585, 1
      %v1570 = vsel %vm1567, %v1568, %v1569
      %v1571 = vrot.slane %v586, 1
      %v1572 = vsel %vm1567, %v1569, %v1571
      %v1573 = vrot.slane %v587, 1
      %v1574 = vsel %vm1567, %v1571, %v1573
      %v1575 = vrot.slane %v588, 1
      %v1576 = vsel %vm1567, %v1573, %v1575
      %v1577 = vrot.slane %v589, 1
      %v1578 = vsel %vm1567, %v1575, %v1577
      %v1579 = vrot.slane %v590, 1
      %v1580 = vsel %vm1567, %v1577, %v1579
      %v1581 = vrot.slane %v591, 1
      %v1582 = vsel %vm1567, %v1579, %v1581
      %v1583 = vrot.slane %v592, 1
      %v1584 = vsel %vm1567, %v1581, %v1583
      %v1585 = vrot.slane %v593, 1
      %v1586 = vsel %vm1567, %v1583, %v1585
      %v1587 = vrot.slane %v594, 1
      %v1588 = vsel %vm1567, %v1585, %v1587
      %v1589 = vrot.slane %v595, 1
      %v1590 = vsel %vm1567, %v1587, %v1589
      %v1591 = vrot.slane %v596, 1
      %v1592 = vsel %vm1567, %v1589, %v1591
      %v1593 = vrot.slane %v597, 1
      %v1594 = vsel %vm1567, %v1591, %v1593
      %v1595 = vrot.slane %v598, 1
      %v1596 = vsel %vm1567, %v1593, %v1595
      %v1597 = vrot.slane %v599, 1
      %v1598 = vsel %vm1567, %v1595, %v1597
      %v1599 = vrot.slane %v600, 1
      %v1600 = vsel %vm1567, %v1597, %v1599
      %v1601 = vrot.slane %v601, 1
      %v1602 = vsel %vm1567, %v1599, %v1601
      %v1603 = vrot.slane %v602, 1
      %v1604 = vsel %vm1567, %v1601, %v1603
      %v1605 = vrot.slane %v603, 1
      %v1606 = vsel %vm1567, %v1603, %v1605
      %v1607 = vrot.slane %v604, 1
      %v1608 = vsel %vm1567, %v1605, %v1607
      %v1609 = vrot.slane %v605, 1
      %v1610 = vsel %vm1567, %v1607, %v1609
      %v1611 = vrot.slane %v606, 1
      %v1612 = vsel %vm1567, %v1609, %v1611
      %v1613 = vrot.slane %v607, 1
      %v1614 = vsel %vm1567, %v1611, %v1613
      %v1615 = vrot.slane %v608, 1
      %v1616 = vsel %vm1567, %v1613, %v1615
      %v1617 = vrot.slane %v609, 1
      %v1618 = vsel %vm1567, %v1615, %v1617
      %v1619 = vrot.slane %v610, 1
      %v1620 = vsel %vm1567, %v1617, %v1619
      %v1621 = vrot.slane %v611, 1
      %v1622 = vsel %vm1567, %v1619, %v1621
      %v1623 = vrot.slane %v612, 1
      %v1624 = vsel %vm1567, %v1621, %v1623
      %v1625 = vrot.slane %v613, 1
      %v1626 = vsel %vm1567, %v1623, %v1625
      %v1627 = vrot.slane %v614, 1
      %v1628 = vsel %vm1567, %v1625, %v1627
      %v1660 = vsel %vm1567, 0.0, %v1568
      %v1661 = vadd.s32 %v1001, 1
      %v1662 = vadd.s32 %v1002, 1
      %v1663 = vadd.s32 %v1003, 1
      %v1664 = vadd.s32 %v1004, 1
      %v1665 = vadd.s32 %v1005, 1
      %v1666 = vadd.s32 %v1006, 1
      %v1667 = vadd.s32 %v1007, 1
      %v1668 = vadd.s32 %v1008, 1
      %v1669 = vadd.s32 %v1009, 1
      %v1670 = vadd.s32 %v1010, 1
      %v1671 = vadd.s32 %v1011, 1
      %v1672 = vadd.s32 %v1012, 1
      %v1673 = vadd.s32 %v1013, 1
      %v1674 = vadd.s32 %v1014, 1
      %v1675 = vadd.s32 %v1015, 1
      %v1676 = vadd.s32 %v1016, 1
      %v1677 = vadd.s32 %v1017, 1
      %v1678 = vadd.s32 %v1018, 1
      %v1679 = vadd.s32 %v1019, 1
      %v1680 = vadd.s32 %v1020, 1
      %v1681 = vadd.s32 %v1021, 1
      %v1682 = vadd.s32 %v1022, 1
      %v1683 = vadd.s32 %v1023, 1
      %v1684 = vadd.s32 %v1024, 1
      %v1685 = vadd.s32 %v1025, 1
      %v1686 = vadd.s32 %v1026, 1
      %v1687 = vadd.s32 %v1027, 1
      %v1688 = vadd.s32 %v1028, 1
      %v1689 = vadd.s32 %v1029, 1
      %v1690 = vadd.s32 %v1030, 1
      %v1691 = vadd.s32 %v1031, 1
      %v1692 = vadd.s32 %v1032, 1
      %vm1693 = vcmp.ge.s32.totalorder %v1661, 0
      %vm1694 = vcmp.ge.s32.totalorder %v1662, 0
      %vm1695 = vcmp.ge.s32.totalorder %v1663, 0
      %vm1696 = vcmp.ge.s32.totalorder %v1664, 0
      %vm1697 = vcmp.ge.s32.totalorder %v1665, 0
      %vm1698 = vcmp.ge.s32.totalorder %v1666, 0
      %vm1699 = vcmp.ge.s32.totalorder %v1667, 0
      %vm1700 = vcmp.ge.s32.totalorder %v1668, 0
      %vm1701 = vcmp.ge.s32.totalorder %v1669, 0
      %vm1702 = vcmp.ge.s32.totalorder %v1670, 0
      %vm1703 = vcmp.ge.s32.totalorder %v1671, 0
      %vm1704 = vcmp.ge.s32.totalorder %v1672, 0
      %vm1705 = vcmp.ge.s32.totalorder %v1673, 0
      %vm1706 = vcmp.ge.s32.totalorder %v1674, 0
      %vm1707 = vcmp.ge.s32.totalorder %v1675, 0
      %vm1708 = vcmp.ge.s32.totalorder %v1676, 0
      %vm1709 = vcmp.ge.s32.totalorder %v1677, 0
      %vm1710 = vcmp.ge.s32.totalorder %v1678, 0
      %vm1711 = vcmp.ge.s32.totalorder %v1679, 0
      %vm1712 = vcmp.ge.s32.totalorder %v1680, 0
      %vm1713 = vcmp.ge.s32.totalorder %v1681, 0
      %vm1714 = vcmp.ge.s32.totalorder %v1682, 0
      %vm1715 = vcmp.ge.s32.totalorder %v1683, 0
      %vm1716 = vcmp.ge.s32.totalorder %v1684, 0
      %vm1717 = vcmp.ge.s32.totalorder %v1685, 0
      %vm1718 = vcmp.ge.s32.totalorder %v1686, 0
      %vm1719 = vcmp.ge.s32.totalorder %v1687, 0
      %vm1720 = vcmp.ge.s32.totalorder %v1688, 0
      %vm1721 = vcmp.ge.s32.totalorder %v1689, 0
      %vm1722 = vcmp.ge.s32.totalorder %v1690, 0
      %vm1723 = vcmp.ge.s32.totalorder %v1691, 0
      %vm1724 = vcmp.ge.s32.totalorder %v1692, 0
      %vm1725 = vcmp.lt.s32.totalorder %v1661, 16
      %vm1726 = vcmp.lt.s32.totalorder %v1662, 16
      %vm1727 = vcmp.lt.s32.totalorder %v1663, 16
      %vm1728 = vcmp.lt.s32.totalorder %v1664, 16
      %vm1729 = vcmp.lt.s32.totalorder %v1665, 16
      %vm1730 = vcmp.lt.s32.totalorder %v1666, 16
      %vm1731 = vcmp.lt.s32.totalorder %v1667, 16
      %vm1732 = vcmp.lt.s32.totalorder %v1668, 16
      %vm1733 = vcmp.lt.s32.totalorder %v1669, 16
      %vm1734 = vcmp.lt.s32.totalorder %v1670, 16
      %vm1735 = vcmp.lt.s32.totalorder %v1671, 16
      %vm1736 = vcmp.lt.s32.totalorder %v1672, 16
      %vm1737 = vcmp.lt.s32.totalorder %v1673, 16
      %vm1738 = vcmp.lt.s32.totalorder %v1674, 16
      %vm1739 = vcmp.lt.s32.totalorder %v1675, 16
      %vm1740 = vcmp.lt.s32.totalorder %v1676, 16
      %vm1741 = vcmp.lt.s32.totalorder %v1677, 16
      %vm1742 = vcmp.lt.s32.totalorder %v1678, 16
      %vm1743 = vcmp.lt.s32.totalorder %v1679, 16
      %vm1744 = vcmp.lt.s32.totalorder %v1680, 16
      %vm1745 = vcmp.lt.s32.totalorder %v1681, 16
      %vm1746 = vcmp.lt.s32.totalorder %v1682, 16
      %vm1747 = vcmp.lt.s32.totalorder %v1683, 16
      %vm1748 = vcmp.lt.s32.totalorder %v1684, 16
      %vm1749 = vcmp.lt.s32.totalorder %v1685, 16
      %vm1750 = vcmp.lt.s32.totalorder %v1686, 16
      %vm1751 = vcmp.lt.s32.totalorder %v1687, 16
      %vm1752 = vcmp.lt.s32.totalorder %v1688, 16
      %vm1753 = vcmp.lt.s32.totalorder %v1689, 16
      %vm1754 = vcmp.lt.s32.totalorder %v1690, 16
      %vm1755 = vcmp.lt.s32.totalorder %v1691, 16
      %vm1756 = vcmp.lt.s32.totalorder %v1692, 16
      %vm1757 = vmand %vm1693, %vm1725
      %vm1758 = vmand %vm1694, %vm1726
      %vm1759 = vmand %vm1695, %vm1727
      %vm1760 = vmand %vm1696, %vm1728
      %vm1761 = vmand %vm1697, %vm1729
      %vm1762 = vmand %vm1698, %vm1730
      %vm1763 = vmand %vm1699, %vm1731
      %vm1764 = vmand %vm1700, %vm1732
      %vm1765 = vmand %vm1701, %vm1733
      %vm1766 = vmand %vm1702, %vm1734
      %vm1767 = vmand %vm1703, %vm1735
      %vm1768 = vmand %vm1704, %vm1736
      %vm1769 = vmand %vm1705, %vm1737
      %vm1770 = vmand %vm1706, %vm1738
      %vm1771 = vmand %vm1707, %vm1739
      %vm1772 = vmand %vm1708, %vm1740
      %vm1773 = vmand %vm1709, %vm1741
      %vm1774 = vmand %vm1710, %vm1742
      %vm1775 = vmand %vm1711, %vm1743
      %vm1776 = vmand %vm1712, %vm1744
      %vm1777 = vmand %vm1713, %vm1745
      %vm1778 = vmand %vm1714, %vm1746
      %vm1779 = vmand %vm1715, %vm1747
      %vm1780 = vmand %vm1716, %vm1748
      %vm1781 = vmand %vm1717, %vm1749
      %vm1782 = vmand %vm1718, %vm1750
      %vm1783 = vmand %vm1719, %vm1751
      %vm1784 = vmand %vm1720, %vm1752
      %vm1785 = vmand %vm1721, %vm1753
      %vm1786 = vmand %vm1722, %vm1754
      %vm1787 = vmand %vm1723, %vm1755
      %vm1788 = vmand %vm1724, %vm1756
      %v1789 = vsel %vm1757, 1, 0
      %v1790 = vsel %vm1758, 1, 0
      %v1791 = vsel %vm1759, 1, 0
      %v1792 = vsel %vm1760, 1, 0
      %v1793 = vsel %vm1761, 1, 0
      %v1794 = vsel %vm1762, 1, 0
      %v1795 = vsel %vm1763, 1, 0
      %v1796 = vsel %vm1764, 1, 0
      %v1797 = vsel %vm1765, 1, 0
      %v1798 = vsel %vm1766, 1, 0
      %v1799 = vsel %vm1767, 1, 0
      %v1800 = vsel %vm1768, 1, 0
      %v1801 = vsel %vm1769, 1, 0
      %v1802 = vsel %vm1770, 1, 0
      %v1803 = vsel %vm1771, 1, 0
      %v1804 = vsel %vm1772, 1, 0
      %v1805 = vsel %vm1773, 1, 0
      %v1806 = vsel %vm1774, 1, 0
      %v1807 = vsel %vm1775, 1, 0
      %v1808 = vsel %vm1776, 1, 0
      %v1809 = vsel %vm1777, 1, 0
      %v1810 = vsel %vm1778, 1, 0
      %v1811 = vsel %vm1779, 1, 0
      %v1812 = vsel %vm1780, 1, 0
      %v1813 = vsel %vm1781, 1, 0
      %v1814 = vsel %vm1782, 1, 0
      %v1815 = vsel %vm1783, 1, 0
      %v1816 = vsel %vm1784, 1, 0
      %v1817 = vsel %vm1785, 1, 0
      %v1818 = vsel %vm1786, 1, 0
      %v1819 = vsel %vm1787, 1, 0
      %v1820 = vsel %vm1788, 1, 0
      %vm1821 = vcmp.eq.s32.totalorder %v1789, 1
      %vm1822 = vcmp.eq.s32.totalorder %v1790, 1
      %vm1823 = vcmp.eq.s32.totalorder %v1791, 1
      %vm1824 = vcmp.eq.s32.totalorder %v1792, 1
      %vm1825 = vcmp.eq.s32.totalorder %v1793, 1
      %vm1826 = vcmp.eq.s32.totalorder %v1794, 1
      %vm1827 = vcmp.eq.s32.totalorder %v1795, 1
      %vm1828 = vcmp.eq.s32.totalorder %v1796, 1
      %vm1829 = vcmp.eq.s32.totalorder %v1797, 1
      %vm1830 = vcmp.eq.s32.totalorder %v1798, 1
      %vm1831 = vcmp.eq.s32.totalorder %v1799, 1
      %vm1832 = vcmp.eq.s32.totalorder %v1800, 1
      %vm1833 = vcmp.eq.s32.totalorder %v1801, 1
      %vm1834 = vcmp.eq.s32.totalorder %v1802, 1
      %vm1835 = vcmp.eq.s32.totalorder %v1803, 1
      %vm1836 = vcmp.eq.s32.totalorder %v1804, 1
      %vm1837 = vcmp.eq.s32.totalorder %v1805, 1
      %vm1838 = vcmp.eq.s32.totalorder %v1806, 1
      %vm1839 = vcmp.eq.s32.totalorder %v1807, 1
      %vm1840 = vcmp.eq.s32.totalorder %v1808, 1
      %vm1841 = vcmp.eq.s32.totalorder %v1809, 1
      %vm1842 = vcmp.eq.s32.totalorder %v1810, 1
      %vm1843 = vcmp.eq.s32.totalorder %v1811, 1
      %vm1844 = vcmp.eq.s32.totalorder %v1812, 1
      %vm1845 = vcmp.eq.s32.totalorder %v1813, 1
      %vm1846 = vcmp.eq.s32.totalorder %v1814, 1
      %vm1847 = vcmp.eq.s32.totalorder %v1815, 1
      %vm1848 = vcmp.eq.s32.totalorder %v1816, 1
      %vm1849 = vcmp.eq.s32.totalorder %v1817, 1
      %vm1850 = vcmp.eq.s32.totalorder %v1818, 1
      %vm1851 = vcmp.eq.s32.totalorder %v1819, 1
      %vm1852 = vcmp.eq.s32.totalorder %v1820, 1
      %v1853 = vsel %vm1822, %v1660, 0.0
      %v1854 = vsel %vm1823, %v1570, 0.0
      %v1855 = vsel %vm1824, %v1572, 0.0
      %v1856 = vsel %vm1825, %v1574, 0.0
      %v1857 = vsel %vm1826, %v1576, 0.0
      %v1858 = vsel %vm1827, %v1578, 0.0
      %v1859 = vsel %vm1828, %v1580, 0.0
      %v1860 = vsel %vm1829, %v1582, 0.0
      %v1861 = vsel %vm1830, %v1584, 0.0
      %v1862 = vsel %vm1831, %v1586, 0.0
      %v1863 = vsel %vm1832, %v1588, 0.0
      %v1864 = vsel %vm1833, %v1590, 0.0
      %v1865 = vsel %vm1834, %v1592, 0.0
      %v1866 = vsel %vm1835, %v1594, 0.0
      %v1867 = vsel %vm1836, %v1596, 0.0
      %v1868 = vsel %vm1837, %v1598, 0.0
      %v1869 = vsel %vm1838, %v1600, 0.0
      %v1870 = vsel %vm1839, %v1602, 0.0
      %v1871 = vsel %vm1840, %v1604, 0.0
      %v1872 = vsel %vm1841, %v1606, 0.0
      %v1873 = vsel %vm1842, %v1608, 0.0
      %v1874 = vsel %vm1843, %v1610, 0.0
      %v1875 = vsel %vm1844, %v1612, 0.0
      %v1876 = vsel %vm1845, %v1614, 0.0
      %v1877 = vsel %vm1846, %v1616, 0.0
      %v1878 = vsel %vm1847, %v1618, 0.0
      %v1879 = vsel %vm1848, %v1620, 0.0
      %v1880 = vsel %vm1849, %v1622, 0.0
      %v1881 = vsel %vm1850, %v1624, 0.0
      %v1882 = vsel %vm1851, %v1626, 0.0
      %v1883 = vsel %vm1852, %v1628, 0.0
      %v1885 = vrot.slane %v614, 7
      %v1886 = vsel %vm1063, %v1121, %v1885
      %v1887 = vrot.slane %v615, 7
      %v1888 = vsel %vm1063, %v1885, %v1887
      %v1891 = vsel %vm1314, %v1153, 0.0
      %v1892 = vsel %vm1315, %v1066, 0.0
      %v1893 = vsel %vm1316, %v1068, 0.0
      %v1894 = vsel %vm1317, %v1070, 0.0
      %v1895 = vsel %vm1318, %v1072, 0.0
      %v1896 = vsel %vm1319, %v1074, 0.0
      %v1897 = vsel %vm1320, %v1076, 0.0
      %v1898 = vsel %vm1321, %v1078, 0.0
      %v1899 = vsel %vm1322, %v1080, 0.0
      %v1900 = vsel %vm1323, %v1082, 0.0
      %v1901 = vsel %vm1324, %v1084, 0.0
      %v1902 = vsel %vm1325, %v1086, 0.0
      %v1903 = vsel %vm1326, %v1088, 0.0
      %v1904 = vsel %vm1327, %v1090, 0.0
      %v1905 = vsel %vm1328, %v1092, 0.0
      %v1906 = vsel %vm1329, %v1094, 0.0
      %v1907 = vsel %vm1330, %v1096, 0.0
      %v1908 = vsel %vm1331, %v1098, 0.0
      %v1909 = vsel %vm1332, %v1100, 0.0
      %v1910 = vsel %vm1333, %v1102, 0.0
      %v1911 = vsel %vm1334, %v1104, 0.0
      %v1912 = vsel %vm1335, %v1106, 0.0
      %v1913 = vsel %vm1336, %v1108, 0.0
      %v1914 = vsel %vm1337, %v1110, 0.0
      %v1915 = vsel %vm1338, %v1112, 0.0
      %v1916 = vsel %vm1339, %v1114, 0.0
      %v1917 = vsel %vm1340, %v1116, 0.0
      %v1918 = vsel %vm1341, %v1118, 0.0
      %v1919 = vsel %vm1342, %v1120, 0.0
      %v1920 = vsel %vm1343, %v1122, 0.0
      %v1921 = vsel %vm1344, %v1886, 0.0
      %v1922 = vsel %vm1345, %v1888, 0.0
      %v1923 = vsel %vm1504, %v584, 0.0
      %v1924 = vsel %vm1505, %v585, 0.0
      %v1925 = vsel %vm1506, %v586, 0.0
      %v1926 = vsel %vm1507, %v587, 0.0
      %v1927 = vsel %vm1508, %v588, 0.0
      %v1928 = vsel %vm1509, %v589, 0.0
      %v1929 = vsel %vm1510, %v590, 0.0
      %v1930 = vsel %vm1511, %v591, 0.0
      %v1931 = vsel %vm1512, %v592, 0.0
      %v1932 = vsel %vm1513, %v593, 0.0
      %v1933 = vsel %vm1514, %v594, 0.0
      %v1934 = vsel %vm1515, %v595, 0.0
      %v1935 = vsel %vm1516, %v596, 0.0
      %v1936 = vsel %vm1517, %v597, 0.0
      %v1937 = vsel %vm1518, %v598, 0.0
      %v1938 = vsel %vm1519, %v599, 0.0
      %v1939 = vsel %vm1520, %v600, 0.0
      %v1940 = vsel %vm1521, %v601, 0.0
      %v1941 = vsel %vm1522, %v602, 0.0
      %v1942 = vsel %vm1523, %v603, 0.0
      %v1943 = vsel %vm1524, %v604, 0.0
      %v1944 = vsel %vm1525, %v605, 0.0
      %v1945 = vsel %vm1526, %v606, 0.0
      %v1946 = vsel %vm1527, %v607, 0.0
      %v1947 = vsel %vm1528, %v608, 0.0
      %v1948 = vsel %vm1529, %v609, 0.0
      %v1949 = vsel %vm1530, %v610, 0.0
      %v1950 = vsel %vm1531, %v611, 0.0
      %v1951 = vsel %vm1532, %v612, 0.0
      %v1952 = vsel %vm1533, %v613, 0.0
      %v1953 = vsel %vm1534, %v614, 0.0
      %v1954 = vsel %vm1535, %v615, 0.0
      %v1955 = vrot.slane %v615, 1
      %v1956 = vsel %vm1567, %v1627, %v1955
      %v1959 = vsel %vm1567, %v1955, 0.0
      %v1960 = vsel %vm1821, %v1570, 0.0
      %v1961 = vsel %vm1822, %v1572, 0.0
      %v1962 = vsel %vm1823, %v1574, 0.0
      %v1963 = vsel %vm1824, %v1576, 0.0
      %v1964 = vsel %vm1825, %v1578, 0.0
      %v1965 = vsel %vm1826, %v1580, 0.0
      %v1966 = vsel %vm1827, %v1582, 0.0
      %v1967 = vsel %vm1828, %v1584, 0.0
      %v1968 = vsel %vm1829, %v1586, 0.0
      %v1969 = vsel %vm1830, %v1588, 0.0
      %v1970 = vsel %vm1831, %v1590, 0.0
      %v1971 = vsel %vm1832, %v1592, 0.0
      %v1972 = vsel %vm1833, %v1594, 0.0
      %v1973 = vsel %vm1834, %v1596, 0.0
      %v1974 = vsel %vm1835, %v1598, 0.0
      %v1975 = vsel %vm1836, %v1600, 0.0
      %v1976 = vsel %vm1837, %v1602, 0.0
      %v1977 = vsel %vm1838, %v1604, 0.0
      %v1978 = vsel %vm1839, %v1606, 0.0
      %v1979 = vsel %vm1840, %v1608, 0.0
      %v1980 = vsel %vm1841, %v1610, 0.0
      %v1981 = vsel %vm1842, %v1612, 0.0
      %v1982 = vsel %vm1843, %v1614, 0.0
      %v1983 = vsel %vm1844, %v1616, 0.0
      %v1984 = vsel %vm1845, %v1618, 0.0
      %v1985 = vsel %vm1846, %v1620, 0.0
      %v1986 = vsel %vm1847, %v1622, 0.0
      %v1987 = vsel %vm1848, %v1624, 0.0
      %v1988 = vsel %vm1849, %v1626, 0.0
      %v1989 = vsel %vm1850, %v1628, 0.0
      %v1990 = vsel %vm1851, %v1956, 0.0
      %v1991 = vsel %vm1852, %v1959, 0.0
      %v1993 = vsel %vm1063, %v1887, 0.0
      %v1994 = vsel %vm1314, %v1068, 0.0
      %v1995 = vsel %vm1315, %v1070, 0.0
      %v1996 = vsel %vm1316, %v1072, 0.0
      %v1997 = vsel %vm1317, %v1074, 0.0
      %v1998 = vsel %vm1318, %v1076, 0.0
      %v1999 = vsel %vm1319, %v1078, 0.0
      %v2000 = vsel %vm1320, %v1080, 0.0
      %v2001 = vsel %vm1321, %v1082, 0.0
      %v2002 = vsel %vm1322, %v1084, 0.0
      %v2003 = vsel %vm1323, %v1086, 0.0
      %v2004 = vsel %vm1324, %v1088, 0.0
      %v2005 = vsel %vm1325, %v1090, 0.0
      %v2006 = vsel %vm1326, %v1092, 0.0
      %v2007 = vsel %vm1327, %v1094, 0.0
      %v2008 = vsel %vm1328, %v1096, 0.0
      %v2009 = vsel %vm1329, %v1098, 0.0
      %v2010 = vsel %vm1330, %v1100, 0.0
      %v2011 = vsel %vm1331, %v1102, 0.0
      %v2012 = vsel %vm1332, %v1104, 0.0
      %v2013 = vsel %vm1333, %v1106, 0.0
      %v2014 = vsel %vm1334, %v1108, 0.0
      %v2015 = vsel %vm1335, %v1110, 0.0
      %v2016 = vsel %vm1336, %v1112, 0.0
      %v2017 = vsel %vm1337, %v1114, 0.0
      %v2018 = vsel %vm1338, %v1116, 0.0
      %v2019 = vsel %vm1339, %v1118, 0.0
      %v2020 = vsel %vm1340, %v1120, 0.0
      %v2021 = vsel %vm1341, %v1122, 0.0
      %v2022 = vsel %vm1342, %v1886, 0.0
      %v2023 = vsel %vm1343, %v1888, 0.0
      %v2024 = vsel %vm1344, %v1993, 0.0
      %v2025 = vsel %vm1504, %v586, 0.0
      %v2026 = vsel %vm1505, %v587, 0.0
      %v2027 = vsel %vm1506, %v588, 0.0
      %v2028 = vsel %vm1507, %v589, 0.0
      %v2029 = vsel %vm1508, %v590, 0.0
      %v2030 = vsel %vm1509, %v591, 0.0
      %v2031 = vsel %vm1510, %v592, 0.0
      %v2032 = vsel %vm1511, %v593, 0.0
      %v2033 = vsel %vm1512, %v594, 0.0
      %v2034 = vsel %vm1513, %v595, 0.0
      %v2035 = vsel %vm1514, %v596, 0.0
      %v2036 = vsel %vm1515, %v597, 0.0
      %v2037 = vsel %vm1516, %v598, 0.0
      %v2038 = vsel %vm1517, %v599, 0.0
      %v2039 = vsel %vm1518, %v600, 0.0
      %v2040 = vsel %vm1519, %v601, 0.0
      %v2041 = vsel %vm1520, %v602, 0.0
      %v2042 = vsel %vm1521, %v603, 0.0
      %v2043 = vsel %vm1522, %v604, 0.0
      %v2044 = vsel %vm1523, %v605, 0.0
      %v2045 = vsel %vm1524, %v606, 0.0
      %v2046 = vsel %vm1525, %v607, 0.0
      %v2047 = vsel %vm1526, %v608, 0.0
      %v2048 = vsel %vm1527, %v609, 0.0
      %v2049 = vsel %vm1528, %v610, 0.0
      %v2050 = vsel %vm1529, %v611, 0.0
      %v2051 = vsel %vm1530, %v612, 0.0
      %v2052 = vsel %vm1531, %v613, 0.0
      %v2053 = vsel %vm1532, %v614, 0.0
      %v2054 = vsel %vm1533, %v615, 0.0
      %v2055 = vsel %vm1821, %v1574, 0.0
      %v2056 = vsel %vm1822, %v1576, 0.0
      %v2057 = vsel %vm1823, %v1578, 0.0
      %v2058 = vsel %vm1824, %v1580, 0.0
      %v2059 = vsel %vm1825, %v1582, 0.0
      %v2060 = vsel %vm1826, %v1584, 0.0
      %v2061 = vsel %vm1827, %v1586, 0.0
      %v2062 = vsel %vm1828, %v1588, 0.0
      %v2063 = vsel %vm1829, %v1590, 0.0
      %v2064 = vsel %vm1830, %v1592, 0.0
      %v2065 = vsel %vm1831, %v1594, 0.0
      %v2066 = vsel %vm1832, %v1596, 0.0
      %v2067 = vsel %vm1833, %v1598, 0.0
      %v2068 = vsel %vm1834, %v1600, 0.0
      %v2069 = vsel %vm1835, %v1602, 0.0
      %v2070 = vsel %vm1836, %v1604, 0.0
      %v2071 = vsel %vm1837, %v1606, 0.0
      %v2072 = vsel %vm1838, %v1608, 0.0
      %v2073 = vsel %vm1839, %v1610, 0.0
      %v2074 = vsel %vm1840, %v1612, 0.0
      %v2075 = vsel %vm1841, %v1614, 0.0
      %v2076 = vsel %vm1842, %v1616, 0.0
      %v2077 = vsel %vm1843, %v1618, 0.0
      %v2078 = vsel %vm1844, %v1620, 0.0
      %v2079 = vsel %vm1845, %v1622, 0.0
      %v2080 = vsel %vm1846, %v1624, 0.0
      %v2081 = vsel %vm1847, %v1626, 0.0
      %v2082 = vsel %vm1848, %v1628, 0.0
      %v2083 = vsel %vm1849, %v1956, 0.0
      %v2084 = vsel %vm1850, %v1959, 0.0
      %2116 = vrot.lane.b32.xlu0 0.0, 4
      %v2117 = vpop.permute.xlu0 %2116
      %2118 = vrot.lane.b32.xlu0 %v1536, 4
      %v2119 = vpop.permute.xlu0 %2118
      %2120 = vrot.lane.b32.xlu0 %v1537, 4
      %v2121 = vpop.permute.xlu0 %2120
      %2122 = vrot.lane.b32.xlu0 %v1538, 4
      %v2123 = vpop.permute.xlu0 %2122
      %2124 = vrot.lane.b32.xlu0 %v1539, 4
      %v2125 = vpop.permute.xlu0 %2124
      %2126 = vrot.lane.b32.xlu0 %v1540, 4
      %v2127 = vpop.permute.xlu0 %2126
      %2128 = vrot.lane.b32.xlu0 %v1541, 4
      %v2129 = vpop.permute.xlu0 %2128
      %2130 = vrot.lane.b32.xlu0 %v1542, 4
      %v2131 = vpop.permute.xlu0 %2130
      %2132 = vrot.lane.b32.xlu0 %v1543, 4
      %v2133 = vpop.permute.xlu0 %2132
      %2134 = vrot.lane.b32.xlu0 %v1544, 4
      %v2135 = vpop.permute.xlu0 %2134
      %2136 = vrot.lane.b32.xlu0 %v1545, 4
      %v2137 = vpop.permute.xlu0 %2136
      %2138 = vrot.lane.b32.xlu0 %v1546, 4
      %v2139 = vpop.permute.xlu0 %2138
      %2140 = vrot.lane.b32.xlu0 %v1547, 4
      %v2141 = vpop.permute.xlu0 %2140
      %2142 = vrot.lane.b32.xlu0 %v1548, 4
      %v2143 = vpop.permute.xlu0 %2142
      %2144 = vrot.lane.b32.xlu0 %v1549, 4
      %v2145 = vpop.permute.xlu0 %2144
      %2146 = vrot.lane.b32.xlu0 %v1550, 4
      %v2147 = vpop.permute.xlu0 %2146
      %2148 = vrot.lane.b32.xlu0 %v1551, 4
      %v2149 = vpop.permute.xlu0 %2148
      %2150 = vrot.lane.b32.xlu0 %v1552, 4
      %v2151 = vpop.permute.xlu0 %2150
      %2152 = vrot.lane.b32.xlu0 %v1553, 4
      %v2153 = vpop.permute.xlu0 %2152
      %2154 = vrot.lane.b32.xlu0 %v1554, 4
      %v2155 = vpop.permute.xlu0 %2154
      %2156 = vrot.lane.b32.xlu0 %v1555, 4
      %v2157 = vpop.permute.xlu0 %2156
      %2158 = vrot.lane.b32.xlu0 %v1556, 4
      %v2159 = vpop.permute.xlu0 %2158
      %2160 = vrot.lane.b32.xlu0 %v1557, 4
      %v2161 = vpop.permute.xlu0 %2160
      %2162 = vrot.lane.b32.xlu0 %v1558, 4
      %v2163 = vpop.permute.xlu0 %2162
      %2164 = vrot.lane.b32.xlu0 %v1559, 4
      %v2165 = vpop.permute.xlu0 %2164
      %2166 = vrot.lane.b32.xlu0 %v1560, 4
      %v2167 = vpop.permute.xlu0 %2166
      %2168 = vrot.lane.b32.xlu0 %v1561, 4
      %v2169 = vpop.permute.xlu0 %2168
      %2170 = vrot.lane.b32.xlu0 %v1562, 4
      %v2171 = vpop.permute.xlu0 %2170
      %2172 = vrot.lane.b32.xlu0 %v1563, 4
      %v2173 = vpop.permute.xlu0 %2172
      %2174 = vrot.lane.b32.xlu0 %v1564, 4
      %v2175 = vpop.permute.xlu0 %2174
      %2176 = vrot.lane.b32.xlu0 %v1565, 4
      %v2177 = vpop.permute.xlu0 %2176
      %2240 = vrot.lane.b32.xlu0 0.0, 8
      %v2241 = vpop.permute.xlu0 %2240
      %2242 = vrot.lane.b32.xlu0 %v1853, 8
      %v2243 = vpop.permute.xlu0 %2242
      %2244 = vrot.lane.b32.xlu0 %v1854, 8
      %v2245 = vpop.permute.xlu0 %2244
      %2246 = vrot.lane.b32.xlu0 %v1855, 8
      %v2247 = vpop.permute.xlu0 %2246
      %2248 = vrot.lane.b32.xlu0 %v1856, 8
      %v2249 = vpop.permute.xlu0 %2248
      %2250 = vrot.lane.b32.xlu0 %v1857, 8
      %v2251 = vpop.permute.xlu0 %2250
      %2252 = vrot.lane.b32.xlu0 %v1858, 8
      %v2253 = vpop.permute.xlu0 %2252
      %2254 = vrot.lane.b32.xlu0 %v1859, 8
      %v2255 = vpop.permute.xlu0 %2254
      %2256 = vrot.lane.b32.xlu0 %v1860, 8
      %v2257 = vpop.permute.xlu0 %2256
      %2258 = vrot.lane.b32.xlu0 %v1861, 8
      %v2259 = vpop.permute.xlu0 %2258
      %2260 = vrot.lane.b32.xlu0 %v1862, 8
      %v2261 = vpop.permute.xlu0 %2260
      %2262 = vrot.lane.b32.xlu0 %v1863, 8
      %v2263 = vpop.permute.xlu0 %2262
      %2264 = vrot.lane.b32.xlu0 %v1864, 8
      %v2265 = vpop.permute.xlu0 %2264
      %2266 = vrot.lane.b32.xlu0 %v1865, 8
      %v2267 = vpop.permute.xlu0 %2266
      %2268 = vrot.lane.b32.xlu0 %v1866, 8
      %v2269 = vpop.permute.xlu0 %2268
      %2270 = vrot.lane.b32.xlu0 %v1867, 8
      %v2271 = vpop.permute.xlu0 %2270
      %2272 = vrot.lane.b32.xlu0 %v1868, 8
      %v2273 = vpop.permute.xlu0 %2272
      %2274 = vrot.lane.b32.xlu0 %v1869, 8
      %v2275 = vpop.permute.xlu0 %2274
      %2276 = vrot.lane.b32.xlu0 %v1870, 8
      %v2277 = vpop.permute.xlu0 %2276
      %2278 = vrot.lane.b32.xlu0 %v1871, 8
      %v2279 = vpop.permute.xlu0 %2278
      %2280 = vrot.lane.b32.xlu0 %v1872, 8
      %v2281 = vpop.permute.xlu0 %2280
      %2282 = vrot.lane.b32.xlu0 %v1873, 8
      %v2283 = vpop.permute.xlu0 %2282
      %2284 = vrot.lane.b32.xlu0 %v1874, 8
      %v2285 = vpop.permute.xlu0 %2284
      %2286 = vrot.lane.b32.xlu0 %v1875, 8
      %v2287 = vpop.permute.xlu0 %2286
      %2288 = vrot.lane.b32.xlu0 %v1876, 8
      %v2289 = vpop.permute.xlu0 %2288
      %2290 = vrot.lane.b32.xlu0 %v1877, 8
      %v2291 = vpop.permute.xlu0 %2290
      %2292 = vrot.lane.b32.xlu0 %v1878, 8
      %v2293 = vpop.permute.xlu0 %2292
      %2294 = vrot.lane.b32.xlu0 %v1879, 8
      %v2295 = vpop.permute.xlu0 %2294
      %2296 = vrot.lane.b32.xlu0 %v1880, 8
      %v2297 = vpop.permute.xlu0 %2296
      %2298 = vrot.lane.b32.xlu0 %v1881, 8
      %v2299 = vpop.permute.xlu0 %2298
      %2300 = vrot.lane.b32.xlu0 %v1882, 8
      %v2301 = vpop.permute.xlu0 %2300
      %2302 = vrot.lane.b32.xlu0 %v1883, 8
      %v2303 = vpop.permute.xlu0 %2302
      %2368 = vrot.lane.b32.xlu0 %v1891, 12
      %v2369 = vpop.permute.xlu0 %2368
      %2370 = vrot.lane.b32.xlu0 %v1892, 12
      %v2371 = vpop.permute.xlu0 %2370
      %2372 = vrot.lane.b32.xlu0 %v1893, 12
      %v2373 = vpop.permute.xlu0 %2372
      %2374 = vrot.lane.b32.xlu0 %v1894, 12
      %v2375 = vpop.permute.xlu0 %2374
      %2376 = vrot.lane.b32.xlu0 %v1895, 12
      %v2377 = vpop.permute.xlu0 %2376
      %2378 = vrot.lane.b32.xlu0 %v1896, 12
      %v2379 = vpop.permute.xlu0 %2378
      %2380 = vrot.lane.b32.xlu0 %v1897, 12
      %v2381 = vpop.permute.xlu0 %2380
      %2382 = vrot.lane.b32.xlu0 %v1898, 12
      %v2383 = vpop.permute.xlu0 %2382
      %2384 = vrot.lane.b32.xlu0 %v1899, 12
      %v2385 = vpop.permute.xlu0 %2384
      %2386 = vrot.lane.b32.xlu0 %v1900, 12
      %v2387 = vpop.permute.xlu0 %2386
      %2388 = vrot.lane.b32.xlu0 %v1901, 12
      %v2389 = vpop.permute.xlu0 %2388
      %2390 = vrot.lane.b32.xlu0 %v1902, 12
      %v2391 = vpop.permute.xlu0 %2390
      %2392 = vrot.lane.b32.xlu0 %v1903, 12
      %v2393 = vpop.permute.xlu0 %2392
      %2394 = vrot.lane.b32.xlu0 %v1904, 12
      %v2395 = vpop.permute.xlu0 %2394
      %2396 = vrot.lane.b32.xlu0 %v1905, 12
      %v2397 = vpop.permute.xlu0 %2396
      %2398 = vrot.lane.b32.xlu0 %v1906, 12
      %v2399 = vpop.permute.xlu0 %2398
      %2400 = vrot.lane.b32.xlu0 %v1907, 12
      %v2401 = vpop.permute.xlu0 %2400
      %2402 = vrot.lane.b32.xlu0 %v1908, 12
      %v2403 = vpop.permute.xlu0 %2402
      %2404 = vrot.lane.b32.xlu0 %v1909, 12
      %v2405 = vpop.permute.xlu0 %2404
      %2406 = vrot.lane.b32.xlu0 %v1910, 12
      %v2407 = vpop.permute.xlu0 %2406
      %2408 = vrot.lane.b32.xlu0 %v1911, 12
      %v2409 = vpop.permute.xlu0 %2408
      %2410 = vrot.lane.b32.xlu0 %v1912, 12
      %v2411 = vpop.permute.xlu0 %2410
      %2412 = vrot.lane.b32.xlu0 %v1913, 12
      %v2413 = vpop.permute.xlu0 %2412
      %2414 = vrot.lane.b32.xlu0 %v1914, 12
      %v2415 = vpop.permute.xlu0 %2414
      %2416 = vrot.lane.b32.xlu0 %v1915, 12
      %v2417 = vpop.permute.xlu0 %2416
      %2418 = vrot.lane.b32.xlu0 %v1916, 12
      %v2419 = vpop.permute.xlu0 %2418
      %2420 = vrot.lane.b32.xlu0 %v1917, 12
      %v2421 = vpop.permute.xlu0 %2420
      %2422 = vrot.lane.b32.xlu0 %v1918, 12
      %v2423 = vpop.permute.xlu0 %2422
      %2424 = vrot.lane.b32.xlu0 %v1919, 12
      %v2425 = vpop.permute.xlu0 %2424
      %2426 = vrot.lane.b32.xlu0 %v1920, 12
      %v2427 = vpop.permute.xlu0 %2426
      %2428 = vrot.lane.b32.xlu0 %v1921, 12
      %v2429 = vpop.permute.xlu0 %2428
      %2430 = vrot.lane.b32.xlu0 %v1922, 12
      %v2431 = vpop.permute.xlu0 %2430
      %2496 = vrot.lane.b32.xlu0 %v1923, 16
      %v2497 = vpop.permute.xlu0 %2496
      %2498 = vrot.lane.b32.xlu0 %v1924, 16
      %v2499 = vpop.permute.xlu0 %2498
      %2500 = vrot.lane.b32.xlu0 %v1925, 16
      %v2501 = vpop.permute.xlu0 %2500
      %2502 = vrot.lane.b32.xlu0 %v1926, 16
      %v2503 = vpop.permute.xlu0 %2502
      %2504 = vrot.lane.b32.xlu0 %v1927, 16
      %v2505 = vpop.permute.xlu0 %2504
      %2506 = vrot.lane.b32.xlu0 %v1928, 16
      %v2507 = vpop.permute.xlu0 %2506
      %2508 = vrot.lane.b32.xlu0 %v1929, 16
      %v2509 = vpop.permute.xlu0 %2508
      %2510 = vrot.lane.b32.xlu0 %v1930, 16
      %v2511 = vpop.permute.xlu0 %2510
      %2512 = vrot.lane.b32.xlu0 %v1931, 16
      %v2513 = vpop.permute.xlu0 %2512
      %2514 = vrot.lane.b32.xlu0 %v1932, 16
      %v2515 = vpop.permute.xlu0 %2514
      %2516 = vrot.lane.b32.xlu0 %v1933, 16
      %v2517 = vpop.permute.xlu0 %2516
      %2518 = vrot.lane.b32.xlu0 %v1934, 16
      %v2519 = vpop.permute.xlu0 %2518
      %2520 = vrot.lane.b32.xlu0 %v1935, 16
      %v2521 = vpop.permute.xlu0 %2520
      %2522 = vrot.lane.b32.xlu0 %v1936, 16
      %v2523 = vpop.permute.xlu0 %2522
      %2524 = vrot.lane.b32.xlu0 %v1937, 16
      %v2525 = vpop.permute.xlu0 %2524
      %2526 = vrot.lane.b32.xlu0 %v1938, 16
      %v2527 = vpop.permute.xlu0 %2526
      %2528 = vrot.lane.b32.xlu0 %v1939, 16
      %v2529 = vpop.permute.xlu0 %2528
      %2530 = vrot.lane.b32.xlu0 %v1940, 16
      %v2531 = vpop.permute.xlu0 %2530
      %2532 = vrot.lane.b32.xlu0 %v1941, 16
      %v2533 = vpop.permute.xlu0 %2532
      %2534 = vrot.lane.b32.xlu0 %v1942, 16
      %v2535 = vpop.permute.xlu0 %2534
      %2536 = vrot.lane.b32.xlu0 %v1943, 16
      %v2537 = vpop.permute.xlu0 %2536
      %2538 = vrot.lane.b32.xlu0 %v1944, 16
      %v2539 = vpop.permute.xlu0 %2538
      %2540 = vrot.lane.b32.xlu0 %v1945, 16
      %v2541 = vpop.permute.xlu0 %2540
      %2542 = vrot.lane.b32.xlu0 %v1946, 16
      %v2543 = vpop.permute.xlu0 %2542
      %2544 = vrot.lane.b32.xlu0 %v1947, 16
      %v2545 = vpop.permute.xlu0 %2544
      %2546 = vrot.lane.b32.xlu0 %v1948, 16
      %v2547 = vpop.permute.xlu0 %2546
      %2548 = vrot.lane.b32.xlu0 %v1949, 16
      %v2549 = vpop.permute.xlu0 %2548
      %2550 = vrot.lane.b32.xlu0 %v1950, 16
      %v2551 = vpop.permute.xlu0 %2550
      %2552 = vrot.lane.b32.xlu0 %v1951, 16
      %v2553 = vpop.permute.xlu0 %2552
      %2554 = vrot.lane.b32.xlu0 %v1952, 16
      %v2555 = vpop.permute.xlu0 %2554
      %2556 = vrot.lane.b32.xlu0 %v1953, 16
      %v2557 = vpop.permute.xlu0 %2556
      %2558 = vrot.lane.b32.xlu0 %v1954, 16
      %v2559 = vpop.permute.xlu0 %2558
      %2624 = vrot.lane.b32.xlu0 %v1960, 20
      %v2625 = vpop.permute.xlu0 %2624
      %2626 = vrot.lane.b32.xlu0 %v1961, 20
      %v2627 = vpop.permute.xlu0 %2626
      %2628 = vrot.lane.b32.xlu0 %v1962, 20
      %v2629 = vpop.permute.xlu0 %2628
      %2630 = vrot.lane.b32.xlu0 %v1963, 20
      %v2631 = vpop.permute.xlu0 %2630
      %2632 = vrot.lane.b32.xlu0 %v1964, 20
      %v2633 = vpop.permute.xlu0 %2632
      %2634 = vrot.lane.b32.xlu0 %v1965, 20
      %v2635 = vpop.permute.xlu0 %2634
      %2636 = vrot.lane.b32.xlu0 %v1966, 20
      %v2637 = vpop.permute.xlu0 %2636
      %2638 = vrot.lane.b32.xlu0 %v1967, 20
      %v2639 = vpop.permute.xlu0 %2638
      %2640 = vrot.lane.b32.xlu0 %v1968, 20
      %v2641 = vpop.permute.xlu0 %2640
      %2642 = vrot.lane.b32.xlu0 %v1969, 20
      %v2643 = vpop.permute.xlu0 %2642
      %2644 = vrot.lane.b32.xlu0 %v1970, 20
      %v2645 = vpop.permute.xlu0 %2644
      %2646 = vrot.lane.b32.xlu0 %v1971, 20
      %v2647 = vpop.permute.xlu0 %2646
      %2648 = vrot.lane.b32.xlu0 %v1972, 20
      %v2649 = vpop.permute.xlu0 %2648
      %2650 = vrot.lane.b32.xlu0 %v1973, 20
      %v2651 = vpop.permute.xlu0 %2650
      %2652 = vrot.lane.b32.xlu0 %v1974, 20
      %v2653 = vpop.permute.xlu0 %2652
      %2654 = vrot.lane.b32.xlu0 %v1975, 20
      %v2655 = vpop.permute.xlu0 %2654
      %2656 = vrot.lane.b32.xlu0 %v1976, 20
      %v2657 = vpop.permute.xlu0 %2656
      %2658 = vrot.lane.b32.xlu0 %v1977, 20
      %v2659 = vpop.permute.xlu0 %2658
      %2660 = vrot.lane.b32.xlu0 %v1978, 20
      %v2661 = vpop.permute.xlu0 %2660
      %2662 = vrot.lane.b32.xlu0 %v1979, 20
      %v2663 = vpop.permute.xlu0 %2662
      %2664 = vrot.lane.b32.xlu0 %v1980, 20
      %v2665 = vpop.permute.xlu0 %2664
      %2666 = vrot.lane.b32.xlu0 %v1981, 20
      %v2667 = vpop.permute.xlu0 %2666
      %2668 = vrot.lane.b32.xlu0 %v1982, 20
      %v2669 = vpop.permute.xlu0 %2668
      %2670 = vrot.lane.b32.xlu0 %v1983, 20
      %v2671 = vpop.permute.xlu0 %2670
      %2672 = vrot.lane.b32.xlu0 %v1984, 20
      %v2673 = vpop.permute.xlu0 %2672
      %2674 = vrot.lane.b32.xlu0 %v1985, 20
      %v2675 = vpop.permute.xlu0 %2674
      %2676 = vrot.lane.b32.xlu0 %v1986, 20
      %v2677 = vpop.permute.xlu0 %2676
      %2678 = vrot.lane.b32.xlu0 %v1987, 20
      %v2679 = vpop.permute.xlu0 %2678
      %2680 = vrot.lane.b32.xlu0 %v1988, 20
      %v2681 = vpop.permute.xlu0 %2680
      %2682 = vrot.lane.b32.xlu0 %v1989, 20
      %v2683 = vpop.permute.xlu0 %2682
      %2684 = vrot.lane.b32.xlu0 %v1990, 20
      %v2685 = vpop.permute.xlu0 %2684
      %2686 = vrot.lane.b32.xlu0 %v1991, 20
      %v2687 = vpop.permute.xlu0 %2686
      %2751 = vrot.lane.b32.xlu0 %v1994, 24
      %v2752 = vpop.permute.xlu0 %2751
      %2753 = vrot.lane.b32.xlu0 %v1995, 24
      %v2754 = vpop.permute.xlu0 %2753
      %2755 = vrot.lane.b32.xlu0 %v1996, 24
      %v2756 = vpop.permute.xlu0 %2755
      %2757 = vrot.lane.b32.xlu0 %v1997, 24
      %v2758 = vpop.permute.xlu0 %2757
      %2759 = vrot.lane.b32.xlu0 %v1998, 24
      %v2760 = vpop.permute.xlu0 %2759
      %2761 = vrot.lane.b32.xlu0 %v1999, 24
      %v2762 = vpop.permute.xlu0 %2761
      %2763 = vrot.lane.b32.xlu0 %v2000, 24
      %v2764 = vpop.permute.xlu0 %2763
      %2765 = vrot.lane.b32.xlu0 %v2001, 24
      %v2766 = vpop.permute.xlu0 %2765
      %2767 = vrot.lane.b32.xlu0 %v2002, 24
      %v2768 = vpop.permute.xlu0 %2767
      %2769 = vrot.lane.b32.xlu0 %v2003, 24
      %v2770 = vpop.permute.xlu0 %2769
      %2771 = vrot.lane.b32.xlu0 %v2004, 24
      %v2772 = vpop.permute.xlu0 %2771
      %2773 = vrot.lane.b32.xlu0 %v2005, 24
      %v2774 = vpop.permute.xlu0 %2773
      %2775 = vrot.lane.b32.xlu0 %v2006, 24
      %v2776 = vpop.permute.xlu0 %2775
      %2777 = vrot.lane.b32.xlu0 %v2007, 24
      %v2778 = vpop.permute.xlu0 %2777
      %2779 = vrot.lane.b32.xlu0 %v2008, 24
      %v2780 = vpop.permute.xlu0 %2779
      %2781 = vrot.lane.b32.xlu0 %v2009, 24
      %v2782 = vpop.permute.xlu0 %2781
      %2783 = vrot.lane.b32.xlu0 %v2010, 24
      %v2784 = vpop.permute.xlu0 %2783
      %2785 = vrot.lane.b32.xlu0 %v2011, 24
      %v2786 = vpop.permute.xlu0 %2785
      %2787 = vrot.lane.b32.xlu0 %v2012, 24
      %v2788 = vpop.permute.xlu0 %2787
      %2789 = vrot.lane.b32.xlu0 %v2013, 24
      %v2790 = vpop.permute.xlu0 %2789
      %2791 = vrot.lane.b32.xlu0 %v2014, 24
      %v2792 = vpop.permute.xlu0 %2791
      %2793 = vrot.lane.b32.xlu0 %v2015, 24
      %v2794 = vpop.permute.xlu0 %2793
      %2795 = vrot.lane.b32.xlu0 %v2016, 24
      %v2796 = vpop.permute.xlu0 %2795
      %2797 = vrot.lane.b32.xlu0 %v2017, 24
      %v2798 = vpop.permute.xlu0 %2797
      %2799 = vrot.lane.b32.xlu0 %v2018, 24
      %v2800 = vpop.permute.xlu0 %2799
      %2801 = vrot.lane.b32.xlu0 %v2019, 24
      %v2802 = vpop.permute.xlu0 %2801
      %2803 = vrot.lane.b32.xlu0 %v2020, 24
      %v2804 = vpop.permute.xlu0 %2803
      %2805 = vrot.lane.b32.xlu0 %v2021, 24
      %v2806 = vpop.permute.xlu0 %2805
      %2807 = vrot.lane.b32.xlu0 %v2022, 24
      %v2808 = vpop.permute.xlu0 %2807
      %2809 = vrot.lane.b32.xlu0 %v2023, 24
      %v2810 = vpop.permute.xlu0 %2809
      %2811 = vrot.lane.b32.xlu0 %v2024, 24
      %v2812 = vpop.permute.xlu0 %2811
      %2813 = vrot.lane.b32.xlu0 0.0, 24
      %v2814 = vpop.permute.xlu0 %2813
      %2877 = vrot.lane.b32.xlu0 %v2025, 28
      %v2878 = vpop.permute.xlu0 %2877
      %2879 = vrot.lane.b32.xlu0 %v2026, 28
      %v2880 = vpop.permute.xlu0 %2879
      %2881 = vrot.lane.b32.xlu0 %v2027, 28
      %v2882 = vpop.permute.xlu0 %2881
      %2883 = vrot.lane.b32.xlu0 %v2028, 28
      %v2884 = vpop.permute.xlu0 %2883
      %2885 = vrot.lane.b32.xlu0 %v2029, 28
      %v2886 = vpop.permute.xlu0 %2885
      %2887 = vrot.lane.b32.xlu0 %v2030, 28
      %v2888 = vpop.permute.xlu0 %2887
      %2889 = vrot.lane.b32.xlu0 %v2031, 28
      %v2890 = vpop.permute.xlu0 %2889
      %2891 = vrot.lane.b32.xlu0 %v2032, 28
      %v2892 = vpop.permute.xlu0 %2891
      %2893 = vrot.lane.b32.xlu0 %v2033, 28
      %v2894 = vpop.permute.xlu0 %2893
      %2895 = vrot.lane.b32.xlu0 %v2034, 28
      %v2896 = vpop.permute.xlu0 %2895
      %2897 = vrot.lane.b32.xlu0 %v2035, 28
      %v2898 = vpop.permute.xlu0 %2897
      %2899 = vrot.lane.b32.xlu0 %v2036, 28
      %v2900 = vpop.permute.xlu0 %2899
      %2901 = vrot.lane.b32.xlu0 %v2037, 28
      %v2902 = vpop.permute.xlu0 %2901
      %2903 = vrot.lane.b32.xlu0 %v2038, 28
      %v2904 = vpop.permute.xlu0 %2903
      %2905 = vrot.lane.b32.xlu0 %v2039, 28
      %v2906 = vpop.permute.xlu0 %2905
      %2907 = vrot.lane.b32.xlu0 %v2040, 28
      %v2908 = vpop.permute.xlu0 %2907
      %2909 = vrot.lane.b32.xlu0 %v2041, 28
      %v2910 = vpop.permute.xlu0 %2909
      %2911 = vrot.lane.b32.xlu0 %v2042, 28
      %v2912 = vpop.permute.xlu0 %2911
      %2913 = vrot.lane.b32.xlu0 %v2043, 28
      %v2914 = vpop.permute.xlu0 %2913
      %2915 = vrot.lane.b32.xlu0 %v2044, 28
      %v2916 = vpop.permute.xlu0 %2915
      %2917 = vrot.lane.b32.xlu0 %v2045, 28
      %v2918 = vpop.permute.xlu0 %2917
      %2919 = vrot.lane.b32.xlu0 %v2046, 28
      %v2920 = vpop.permute.xlu0 %2919
      %2921 = vrot.lane.b32.xlu0 %v2047, 28
      %v2922 = vpop.permute.xlu0 %2921
      %2923 = vrot.lane.b32.xlu0 %v2048, 28
      %v2924 = vpop.permute.xlu0 %2923
      %2925 = vrot.lane.b32.xlu0 %v2049, 28
      %v2926 = vpop.permute.xlu0 %2925
      %2927 = vrot.lane.b32.xlu0 %v2050, 28
      %v2928 = vpop.permute.xlu0 %2927
      %2929 = vrot.lane.b32.xlu0 %v2051, 28
      %v2930 = vpop.permute.xlu0 %2929
      %2931 = vrot.lane.b32.xlu0 %v2052, 28
      %v2932 = vpop.permute.xlu0 %2931
      %2933 = vrot.lane.b32.xlu0 %v2053, 28
      %v2934 = vpop.permute.xlu0 %2933
      %2935 = vrot.lane.b32.xlu0 %v2054, 28
      %v2936 = vpop.permute.xlu0 %2935
      %2937 = vrot.lane.b32.xlu0 0.0, 28
      %v2938 = vpop.permute.xlu0 %2937
      %3000 = vrot.lane.b32.xlu0 %v2055, 32
      %v3001 = vpop.permute.xlu0 %3000
      %3002 = vrot.lane.b32.xlu0 %v2056, 32
      %v3003 = vpop.permute.xlu0 %3002
      %3004 = vrot.lane.b32.xlu0 %v2057, 32
      %v3005 = vpop.permute.xlu0 %3004
      %3006 = vrot.lane.b32.xlu0 %v2058, 32
      %v3007 = vpop.permute.xlu0 %3006
      %3008 = vrot.lane.b32.xlu0 %v2059, 32
      %v3009 = vpop.permute.xlu0 %3008
      %3010 = vrot.lane.b32.xlu0 %v2060, 32
      %v3011 = vpop.permute.xlu0 %3010
      %3012 = vrot.lane.b32.xlu0 %v2061, 32
      %v3013 = vpop.permute.xlu0 %3012
      %3014 = vrot.lane.b32.xlu0 %v2062, 32
      %v3015 = vpop.permute.xlu0 %3014
      %3016 = vrot.lane.b32.xlu0 %v2063, 32
      %v3017 = vpop.permute.xlu0 %3016
      %3018 = vrot.lane.b32.xlu0 %v2064, 32
      %v3019 = vpop.permute.xlu0 %3018
      %3020 = vrot.lane.b32.xlu0 %v2065, 32
      %v3021 = vpop.permute.xlu0 %3020
      %3022 = vrot.lane.b32.xlu0 %v2066, 32
      %v3023 = vpop.permute.xlu0 %3022
      %3024 = vrot.lane.b32.xlu0 %v2067, 32
      %v3025 = vpop.permute.xlu0 %3024
      %3026 = vrot.lane.b32.xlu0 %v2068, 32
      %v3027 = vpop.permute.xlu0 %3026
      %3028 = vrot.lane.b32.xlu0 %v2069, 32
      %v3029 = vpop.permute.xlu0 %3028
      %3030 = vrot.lane.b32.xlu0 %v2070, 32
      %v3031 = vpop.permute.xlu0 %3030
      %3032 = vrot.lane.b32.xlu0 %v2071, 32
      %v3033 = vpop.permute.xlu0 %3032
      %3034 = vrot.lane.b32.xlu0 %v2072, 32
      %v3035 = vpop.permute.xlu0 %3034
      %3036 = vrot.lane.b32.xlu0 %v2073, 32
      %v3037 = vpop.permute.xlu0 %3036
      %3038 = vrot.lane.b32.xlu0 %v2074, 32
      %v3039 = vpop.permute.xlu0 %3038
      %3040 = vrot.lane.b32.xlu0 %v2075, 32
      %v3041 = vpop.permute.xlu0 %3040
      %3042 = vrot.lane.b32.xlu0 %v2076, 32
      %v3043 = vpop.permute.xlu0 %3042
      %3044 = vrot.lane.b32.xlu0 %v2077, 32
      %v3045 = vpop.permute.xlu0 %3044
      %3046 = vrot.lane.b32.xlu0 %v2078, 32
      %v3047 = vpop.permute.xlu0 %3046
      %3048 = vrot.lane.b32.xlu0 %v2079, 32
      %v3049 = vpop.permute.xlu0 %3048
      %3050 = vrot.lane.b32.xlu0 %v2080, 32
      %v3051 = vpop.permute.xlu0 %3050
      %3052 = vrot.lane.b32.xlu0 %v2081, 32
      %v3053 = vpop.permute.xlu0 %3052
      %3054 = vrot.lane.b32.xlu0 %v2082, 32
      %v3055 = vpop.permute.xlu0 %3054
      %3056 = vrot.lane.b32.xlu0 %v2083, 32
      %v3057 = vpop.permute.xlu0 %3056
      %3058 = vrot.lane.b32.xlu0 %v2084, 32
      %v3059 = vpop.permute.xlu0 %3058
      %3060 = vrot.lane.b32.xlu0 0.0, 32
      %v3061 = vpop.permute.xlu0 %3060
      %v3093 = vsel %vm370, 0.0, %v2117
      %v3094 = vsel %vm370, %v1346, %v2119
      %v3095 = vsel %vm370, %v1347, %v2121
      %v3096 = vsel %vm370, %v1348, %v2123
      %v3097 = vsel %vm370, %v1349, %v2125
      %v3098 = vsel %vm370, %v1350, %v2127
      %v3099 = vsel %vm370, %v1351, %v2129
      %v3100 = vsel %vm370, %v1352, %v2131
      %v3101 = vsel %vm370, %v1353, %v2133
      %v3102 = vsel %vm370, %v1354, %v2135
      %v3103 = vsel %vm370, %v1355, %v2137
      %v3104 = vsel %vm370, %v1356, %v2139
      %v3105 = vsel %vm370, %v1357, %v2141
      %v3106 = vsel %vm370, %v1358, %v2143
      %v3107 = vsel %vm370, %v1359, %v2145
      %v3108 = vsel %vm370, %v1360, %v2147
      %v3109 = vsel %vm370, %v1361, %v2149
      %v3110 = vsel %vm370, %v1362, %v2151
      %v3111 = vsel %vm370, %v1363, %v2153
      %v3112 = vsel %vm370, %v1364, %v2155
      %v3113 = vsel %vm370, %v1365, %v2157
      %v3114 = vsel %vm370, %v1366, %v2159
      %v3115 = vsel %vm370, %v1367, %v2161
      %v3116 = vsel %vm370, %v1368, %v2163
      %v3117 = vsel %vm370, %v1369, %v2165
      %v3118 = vsel %vm370, %v1370, %v2167
      %v3119 = vsel %vm370, %v1371, %v2169
      %v3120 = vsel %vm370, %v1372, %v2171
      %v3121 = vsel %vm370, %v1373, %v2173
      %v3122 = vsel %vm370, %v1374, %v2175
      %v3123 = vsel %vm370, %v1375, %v2177
      %vm3124 = vcmask 64512
      %v3125 = vsel %vm3124, %v3093, %v2241
      %v3126 = vsel %vm3124, %v3093, %v2243
      %v3127 = vsel %vm3124, %v3094, %v2245
      %v3128 = vsel %vm3124, %v3095, %v2247
      %v3129 = vsel %vm3124, %v3096, %v2249
      %v3130 = vsel %vm3124, %v3097, %v2251
      %v3131 = vsel %vm3124, %v3098, %v2253
      %v3132 = vsel %vm3124, %v3099, %v2255
      %v3133 = vsel %vm3124, %v3100, %v2257
      %v3134 = vsel %vm3124, %v3101, %v2259
      %v3135 = vsel %vm3124, %v3102, %v2261
      %v3136 = vsel %vm3124, %v3103, %v2263
      %v3137 = vsel %vm3124, %v3104, %v2265
      %v3138 = vsel %vm3124, %v3105, %v2267
      %v3139 = vsel %vm3124, %v3106, %v2269
      %v3140 = vsel %vm3124, %v3107, %v2271
      %v3141 = vsel %vm3124, %v3108, %v2273
      %v3142 = vsel %vm3124, %v3109, %v2275
      %v3143 = vsel %vm3124, %v3110, %v2277
      %v3144 = vsel %vm3124, %v3111, %v2279
      %v3145 = vsel %vm3124, %v3112, %v2281
      %v3146 = vsel %vm3124, %v3113, %v2283
      %v3147 = vsel %vm3124, %v3114, %v2285
      %v3148 = vsel %vm3124, %v3115, %v2287
      %v3149 = vsel %vm3124, %v3116, %v2289
      %v3150 = vsel %vm3124, %v3117, %v2291
      %v3151 = vsel %vm3124, %v3118, %v2293
      %v3152 = vsel %vm3124, %v3119, %v2295
      %v3153 = vsel %vm3124, %v3120, %v2297
      %v3154 = vsel %vm3124, %v3121, %v2299
      %v3155 = vsel %vm3124, %v3122, %v2301
      %v3156 = vsel %vm3124, %v3123, %v2303
      %vm3157 = vcmask 97280
      %v3158 = vsel %vm3157, %v3125, %v2369
      %v3159 = vsel %vm3157, %v3126, %v2371
      %v3160 = vsel %vm3157, %v3127, %v2373
      %v3161 = vsel %vm3157, %v3128, %v2375
      %v3162 = vsel %vm3157, %v3129, %v2377
      %v3163 = vsel %vm3157, %v3130, %v2379
      %v3164 = vsel %vm3157, %v3131, %v2381
      %v3165 = vsel %vm3157, %v3132, %v2383
      %v3166 = vsel %vm3157, %v3133, %v2385
      %v3167 = vsel %vm3157, %v3134, %v2387
      %v3168 = vsel %vm3157, %v3135, %v2389
      %v3169 = vsel %vm3157, %v3136, %v2391
      %v3170 = vsel %vm3157, %v3137, %v2393
      %v3171 = vsel %vm3157, %v3138, %v2395
      %v3172 = vsel %vm3157, %v3139, %v2397
      %v3173 = vsel %vm3157, %v3140, %v2399
      %v3174 = vsel %vm3157, %v3141, %v2401
      %v3175 = vsel %vm3157, %v3142, %v2403
      %v3176 = vsel %vm3157, %v3143, %v2405
      %v3177 = vsel %vm3157, %v3144, %v2407
      %v3178 = vsel %vm3157, %v3145, %v2409
      %v3179 = vsel %vm3157, %v3146, %v2411
      %v3180 = vsel %vm3157, %v3147, %v2413
      %v3181 = vsel %vm3157, %v3148, %v2415
      %v3182 = vsel %vm3157, %v3149, %v2417
      %v3183 = vsel %vm3157, %v3150, %v2419
      %v3184 = vsel %vm3157, %v3151, %v2421
      %v3185 = vsel %vm3157, %v3152, %v2423
      %v3186 = vsel %vm3157, %v3153, %v2425
      %v3187 = vsel %vm3157, %v3154, %v2427
      %v3188 = vsel %vm3157, %v3155, %v2429
      %v3189 = vsel %vm3157, %v3156, %v2431
      %vm3190 = vcmask 130048
      %v3191 = vsel %vm3190, %v3158, %v2497
      %v3192 = vsel %vm3190, %v3159, %v2499
      %v3193 = vsel %vm3190, %v3160, %v2501
      %v3194 = vsel %vm3190, %v3161, %v2503
      %v3195 = vsel %vm3190, %v3162, %v2505
      %v3196 = vsel %vm3190, %v3163, %v2507
      %v3197 = vsel %vm3190, %v3164, %v2509
      %v3198 = vsel %vm3190, %v3165, %v2511
      %v3199 = vsel %vm3190, %v3166, %v2513
      %v3200 = vsel %vm3190, %v3167, %v2515
      %v3201 = vsel %vm3190, %v3168, %v2517
      %v3202 = vsel %vm3190, %v3169, %v2519
      %v3203 = vsel %vm3190, %v3170, %v2521
      %v3204 = vsel %vm3190, %v3171, %v2523
      %v3205 = vsel %vm3190, %v3172, %v2525
      %v3206 = vsel %vm3190, %v3173, %v2527
      %v3207 = vsel %vm3190, %v3174, %v2529
      %v3208 = vsel %vm3190, %v3175, %v2531
      %v3209 = vsel %vm3190, %v3176, %v2533
      %v3210 = vsel %vm3190, %v3177, %v2535
      %v3211 = vsel %vm3190, %v3178, %v2537
      %v3212 = vsel %vm3190, %v3179, %v2539
      %v3213 = vsel %vm3190, %v3180, %v2541
      %v3214 = vsel %vm3190, %v3181, %v2543
      %v3215 = vsel %vm3190, %v3182, %v2545
      %v3216 = vsel %vm3190, %v3183, %v2547
      %v3217 = vsel %vm3190, %v3184, %v2549
      %v3218 = vsel %vm3190, %v3185, %v2551
      %v3219 = vsel %vm3190, %v3186, %v2553
      %v3220 = vsel %vm3190, %v3187, %v2555
      %v3221 = vsel %vm3190, %v3188, %v2557
      %v3222 = vsel %vm3190, %v3189, %v2559
      %vm3223 = vcmask 162816
      %v3224 = vsel %vm3223, %v3191, %v2625
      %v3225 = vsel %vm3223, %v3192, %v2627
      %v3226 = vsel %vm3223, %v3193, %v2629
      %v3227 = vsel %vm3223, %v3194, %v2631
      %v3228 = vsel %vm3223, %v3195, %v2633
      %v3229 = vsel %vm3223, %v3196, %v2635
      %v3230 = vsel %vm3223, %v3197, %v2637
      %v3231 = vsel %vm3223, %v3198, %v2639
      %v3232 = vsel %vm3223, %v3199, %v2641
      %v3233 = vsel %vm3223, %v3200, %v2643
      %v3234 = vsel %vm3223, %v3201, %v2645
      %v3235 = vsel %vm3223, %v3202, %v2647
      %v3236 = vsel %vm3223, %v3203, %v2649
      %v3237 = vsel %vm3223, %v3204, %v2651
      %v3238 = vsel %vm3223, %v3205, %v2653
      %v3239 = vsel %vm3223, %v3206, %v2655
      %v3240 = vsel %vm3223, %v3207, %v2657
      %v3241 = vsel %vm3223, %v3208, %v2659
      %v3242 = vsel %vm3223, %v3209, %v2661
      %v3243 = vsel %vm3223, %v3210, %v2663
      %v3244 = vsel %vm3223, %v3211, %v2665
      %v3245 = vsel %vm3223, %v3212, %v2667
      %v3246 = vsel %vm3223, %v3213, %v2669
      %v3247 = vsel %vm3223, %v3214, %v2671
      %v3248 = vsel %vm3223, %v3215, %v2673
      %v3249 = vsel %vm3223, %v3216, %v2675
      %v3250 = vsel %vm3223, %v3217, %v2677
      %v3251 = vsel %vm3223, %v3218, %v2679
      %v3252 = vsel %vm3223, %v3219, %v2681
      %v3253 = vsel %vm3223, %v3220, %v2683
      %v3254 = vsel %vm3223, %v3221, %v2685
      %v3255 = vsel %vm3223, %v3222, %v2687
      %vm3256 = vcmask 195584
      %v3257 = vsel %vm3256, %v3224, %v2752
      %v3258 = vsel %vm3256, %v3225, %v2754
      %v3259 = vsel %vm3256, %v3226, %v2756
      %v3260 = vsel %vm3256, %v3227, %v2758
      %v3261 = vsel %vm3256, %v3228, %v2760
      %v3262 = vsel %vm3256, %v3229, %v2762
      %v3263 = vsel %vm3256, %v3230, %v2764
      %v3264 = vsel %vm3256, %v3231, %v2766
      %v3265 = vsel %vm3256, %v3232, %v2768
      %v3266 = vsel %vm3256, %v3233, %v2770
      %v3267 = vsel %vm3256, %v3234, %v2772
      %v3268 = vsel %vm3256, %v3235, %v2774
      %v3269 = vsel %vm3256, %v3236, %v2776
      %v3270 = vsel %vm3256, %v3237, %v2778
      %v3271 = vsel %vm3256, %v3238, %v2780
      %v3272 = vsel %vm3256, %v3239, %v2782
      %v3273 = vsel %vm3256, %v3240, %v2784
      %v3274 = vsel %vm3256, %v3241, %v2786
      %v3275 = vsel %vm3256, %v3242, %v2788
      %v3276 = vsel %vm3256, %v3243, %v2790
      %v3277 = vsel %vm3256, %v3244, %v2792
      %v3278 = vsel %vm3256, %v3245, %v2794
      %v3279 = vsel %vm3256, %v3246, %v2796
      %v3280 = vsel %vm3256, %v3247, %v2798
      %v3281 = vsel %vm3256, %v3248, %v2800
      %v3282 = vsel %vm3256, %v3249, %v2802
      %v3283 = vsel %vm3256, %v3250, %v2804
      %v3284 = vsel %vm3256, %v3251, %v2806
      %v3285 = vsel %vm3256, %v3252, %v2808
      %v3286 = vsel %vm3256, %v3253, %v2810
      %v3287 = vsel %vm3256, %v3254, %v2812
      %v3288 = vsel %vm3256, %v3255, %v2814
      %vm3289 = vcmask 228352
      %v3290 = vsel %vm3289, %v3257, %v2878
      %v3291 = vsel %vm3289, %v3258, %v2880
      %v3292 = vsel %vm3289, %v3259, %v2882
      %v3293 = vsel %vm3289, %v3260, %v2884
      %v3294 = vsel %vm3289, %v3261, %v2886
      %v3295 = vsel %vm3289, %v3262, %v2888
      %v3296 = vsel %vm3289, %v3263, %v2890
      %v3297 = vsel %vm3289, %v3264, %v2892
      %v3298 = vsel %vm3289, %v3265, %v2894
      %v3299 = vsel %vm3289, %v3266, %v2896
      %v3300 = vsel %vm3289, %v3267, %v2898
      %v3301 = vsel %vm3289, %v3268, %v2900
      %v3302 = vsel %vm3289, %v3269, %v2902
      %v3303 = vsel %vm3289, %v3270, %v2904
      %v3304 = vsel %vm3289, %v3271, %v2906
      %v3305 = vsel %vm3289, %v3272, %v2908
      %v3306 = vsel %vm3289, %v3273, %v2910
      %v3307 = vsel %vm3289, %v3274, %v2912
      %v3308 = vsel %vm3289, %v3275, %v2914
      %v3309 = vsel %vm3289, %v3276, %v2916
      %v3310 = vsel %vm3289, %v3277, %v2918
      %v3311 = vsel %vm3289, %v3278, %v2920
      %v3312 = vsel %vm3289, %v3279, %v2922
      %v3313 = vsel %vm3289, %v3280, %v2924
      %v3314 = vsel %vm3289, %v3281, %v2926
      %v3315 = vsel %vm3289, %v3282, %v2928
      %v3316 = vsel %vm3289, %v3283, %v2930
      %v3317 = vsel %vm3289, %v3284, %v2932
      %v3318 = vsel %vm3289, %v3285, %v2934
      %v3319 = vsel %vm3289, %v3286, %v2936
      %v3320 = vsel %vm3289, %v3287, %v2938
      %v3321 = vsel %vm3289, %v3288, %v2938
      %vm3322 = vcmask 261120
      %v3323 = vsel %vm3322, %v3290, %v3001
      %v3324 = vsel %vm3322, %v3291, %v3003
      %v3325 = vsel %vm3322, %v3292, %v3005
      %v3326 = vsel %vm3322, %v3293, %v3007
      %v3327 = vsel %vm3322, %v3294, %v3009
      %v3328 = vsel %vm3322, %v3295, %v3011
      %v3329 = vsel %vm3322, %v3296, %v3013
      %v3330 = vsel %vm3322, %v3297, %v3015
      %v3331 = vsel %vm3322, %v3298, %v3017
      %v3332 = vsel %vm3322, %v3299, %v3019
      %v3333 = vsel %vm3322, %v3300, %v3021
      %v3334 = vsel %vm3322, %v3301, %v3023
      %v3335 = vsel %vm3322, %v3302, %v3025
      %v3336 = vsel %vm3322, %v3303, %v3027
      %v3337 = vsel %vm3322, %v3304, %v3029
      %v3338 = vsel %vm3322, %v3305, %v3031
      %v3339 = vsel %vm3322, %v3306, %v3033
      %v3340 = vsel %vm3322, %v3307, %v3035
      %v3341 = vsel %vm3322, %v3308, %v3037
      %v3342 = vsel %vm3322, %v3309, %v3039
      %v3343 = vsel %vm3322, %v3310, %v3041
      %v3344 = vsel %vm3322, %v3311, %v3043
      %v3345 = vsel %vm3322, %v3312, %v3045
      %v3346 = vsel %vm3322, %v3313, %v3047
      %v3347 = vsel %vm3322, %v3314, %v3049
      %v3348 = vsel %vm3322, %v3315, %v3051
      %v3349 = vsel %vm3322, %v3316, %v3053
      %v3350 = vsel %vm3322, %v3317, %v3055
      %v3351 = vsel %vm3322, %v3318, %v3057
      %v3352 = vsel %vm3322, %v3319, %v3059
      %v3353 = vsel %vm3322, %v3320, %v3061
      %v3354 = vsel %vm3322, %v3321, %v3061
      %v3355 = vld [vmem:[%s3] sm:$0xff]
      %v3356 = vld [vmem:[%s3 + $0x8] sm:$0xff]
      %v3357 = vld [vmem:[%s3 + $0x10] sm:$0xff]
      %v3358 = vld [vmem:[%s3 + $0x18] sm:$0xff]
      %v3359 = vld [vmem:[%s3 + $0x20] sm:$0xf]
      %v3360 = vld [vmem:[%s4] sm:$0x1]
      %v3362 = vperm.slane %v3360, 0
      %vm3364 = vcmask 293888
      %v3366 = vsel %vm3364, %v3323, 0
      %v3369 = vsel %vm3364, %v3324, 0
      %v3372 = vsel %vm3364, %v3325, 0
      %v3375 = vsel %vm3364, %v3326, 0
      %v3378 = vsel %vm3364, %v3327, 0
      %v3381 = vsel %vm3364, %v3328, 0
      %v3384 = vsel %vm3364, %v3329, 0
      %v3387 = vsel %vm3364, %v3330, 0
      %v3390 = vsel %vm3364, %v3331, 0
      %v3393 = vsel %vm3364, %v3332, 0
      %v3396 = vsel %vm3364, %v3333, 0
      %v3399 = vsel %vm3364, %v3334, 0
      %v3402 = vsel %vm3364, %v3335, 0
      %v3405 = vsel %vm3364, %v3336, 0
      %v3408 = vsel %vm3364, %v3337, 0
      %v3411 = vsel %vm3364, %v3338, 0
      %v3414 = vsel %vm3364, %v3339, 0
      %v3417 = vsel %vm3364, %v3340, 0
      %v3420 = vsel %vm3364, %v3341, 0
      %v3423 = vsel %vm3364, %v3342, 0
      %v3426 = vsel %vm3364, %v3343, 0
      %v3429 = vsel %vm3364, %v3344, 0
      %v3432 = vsel %vm3364, %v3345, 0
      %v3435 = vsel %vm3364, %v3346, 0
      %v3438 = vsel %vm3364, %v3347, 0
      %v3441 = vsel %vm3364, %v3348, 0
      %v3444 = vsel %vm3364, %v3349, 0
      %v3447 = vsel %vm3364, %v3350, 0
      %v3450 = vsel %vm3364, %v3351, 0
      %v3453 = vsel %vm3364, %v3352, 0
      %v3456 = vsel %vm3364, %v3353, 0
      %v3459 = vsel %vm3364, %v3354, 0
      %v3462 = vsel %vm467, %v3359, 0
      %3464 = vmatpush.msra.mxu0 0.0
      %3465 = vmatpush.msra.mxu0 0.0
      %3466 = vmatpush.msra.mxu0 0.0
      %3467 = vmatpush.msra.mxu0 0.0
      %3468 = vmatpush.msra.mxu0 0.0
      %3469 = vmatpush.msra.mxu0 0.0
      %3470 = vmatpush.msra.mxu0 0.0
      %3471 = vmatpush.msra.mxu0 0.0
      %3472 = vmatpush.msra.mxu0 0.0
      %3473 = vmatpush.msra.mxu0 0.0
      %3474 = vmatpush.msra.mxu0 0.0
      %3475 = vmatpush.msra.mxu0 %v3462
      %3476 = vmatpush.msra.mxu0 %v3358
      %3477 = vmatpush.msra.mxu0 %v3357
      %3478 = vmatpush.msra.mxu0 %v3356
      %3479 = vmatpush.msra.mxu0 %v3355
      %3480 = vmatmul.f32.gmra.mxu0 %v3366
      %v3481 = vpop.f32.mrf.mxu0
      %v3482 = vadd.f32 %v3362, %v3481
      %3483 = vmatmul.f32.gmra.mxu0 %v3369
      %v3484 = vpop.f32.mrf.mxu0
      %v3485 = vadd.f32 %v3362, %v3484
      %3486 = vmatmul.f32.gmra.mxu0 %v3372
      %v3487 = vpop.f32.mrf.mxu0
      %v3488 = vadd.f32 %v3362, %v3487
      %3489 = vmatmul.f32.gmra.mxu0 %v3375
      %v3490 = vpop.f32.mrf.mxu0
      %v3491 = vadd.f32 %v3362, %v3490
      %3492 = vmatmul.f32.gmra.mxu0 %v3378
      %v3493 = vpop.f32.mrf.mxu0
      %v3494 = vadd.f32 %v3362, %v3493
      %3495 = vmatmul.f32.gmra.mxu0 %v3381
      %v3496 = vpop.f32.mrf.mxu0
      %v3497 = vadd.f32 %v3362, %v3496
      %3498 = vmatmul.f32.gmra.mxu0 %v3384
      %v3499 = vpop.f32.mrf.mxu0
      %v3500 = vadd.f32 %v3362, %v3499
      %3501 = vmatmul.f32.gmra.mxu0 %v3387
      %v3502 = vpop.f32.mrf.mxu0
      %v3503 = vadd.f32 %v3362, %v3502
      %3504 = vmatmul.f32.gmra.mxu0 %v3390
      %v3505 = vpop.f32.mrf.mxu0
      %v3506 = vadd.f32 %v3362, %v3505
      %3507 = vmatmul.f32.gmra.mxu0 %v3393
      %v3508 = vpop.f32.mrf.mxu0
      %v3509 = vadd.f32 %v3362, %v3508
      %3510 = vmatmul.f32.gmra.mxu0 %v3396
      %v3511 = vpop.f32.mrf.mxu0
      %v3512 = vadd.f32 %v3362, %v3511
      %3513 = vmatmul.f32.gmra.mxu0 %v3399
      %v3514 = vpop.f32.mrf.mxu0
      %v3515 = vadd.f32 %v3362, %v3514
      %3516 = vmatmul.f32.gmra.mxu0 %v3402
      %v3517 = vpop.f32.mrf.mxu0
      %v3518 = vadd.f32 %v3362, %v3517
      %3519 = vmatmul.f32.gmra.mxu0 %v3405
      %v3520 = vpop.f32.mrf.mxu0
      %v3521 = vadd.f32 %v3362, %v3520
      %3522 = vmatmul.f32.gmra.mxu0 %v3408
      %v3523 = vpop.f32.mrf.mxu0
      %v3524 = vadd.f32 %v3362, %v3523
      %3525 = vmatmul.f32.gmra.mxu0 %v3411
      %v3526 = vpop.f32.mrf.mxu0
      %v3527 = vadd.f32 %v3362, %v3526
      %3528 = vmatmul.f32.gmra.mxu0 %v3414
      %v3529 = vpop.f32.mrf.mxu0
      %v3530 = vadd.f32 %v3362, %v3529
      %3531 = vmatmul.f32.gmra.mxu0 %v3417
      %v3532 = vpop.f32.mrf.mxu0
      %v3533 = vadd.f32 %v3362, %v3532
      %3534 = vmatmul.f32.gmra.mxu0 %v3420
      %v3535 = vpop.f32.mrf.mxu0
      %v3536 = vadd.f32 %v3362, %v3535
      %3537 = vmatmul.f32.gmra.mxu0 %v3423
      %v3538 = vpop.f32.mrf.mxu0
      %v3539 = vadd.f32 %v3362, %v3538
      %3540 = vmatmul.f32.gmra.mxu0 %v3426
      %v3541 = vpop.f32.mrf.mxu0
      %v3542 = vadd.f32 %v3362, %v3541
      %3543 = vmatmul.f32.gmra.mxu0 %v3429
      %v3544 = vpop.f32.mrf.mxu0
      %v3545 = vadd.f32 %v3362, %v3544
      %3546 = vmatmul.f32.gmra.mxu0 %v3432
      %v3547 = vpop.f32.mrf.mxu0
      %v3548 = vadd.f32 %v3362, %v3547
      %3549 = vmatmul.f32.gmra.mxu0 %v3435
      %v3550 = vpop.f32.mrf.mxu0
      %v3551 = vadd.f32 %v3362, %v3550
      %3552 = vmatmul.f32.gmra.mxu0 %v3438
      %v3553 = vpop.f32.mrf.mxu0
      %v3554 = vadd.f32 %v3362, %v3553
      %3555 = vmatmul.f32.gmra.mxu0 %v3441
      %v3556 = vpop.f32.mrf.mxu0
      %v3557 = vadd.f32 %v3362, %v3556
      %3558 = vmatmul.f32.gmra.mxu0 %v3444
      %v3559 = vpop.f32.mrf.mxu0
      %v3560 = vadd.f32 %v3362, %v3559
      %3561 = vmatmul.f32.gmra.mxu0 %v3447
      %v3562 = vpop.f32.mrf.mxu0
      %v3563 = vadd.f32 %v3362, %v3562
      %3564 = vmatmul.f32.gmra.mxu0 %v3450
      %v3565 = vpop.f32.mrf.mxu0
      %v3566 = vadd.f32 %v3362, %v3565
      %3567 = vmatmul.f32.gmra.mxu0 %v3453
      %v3568 = vpop.f32.mrf.mxu0
      %v3569 = vadd.f32 %v3362, %v3568
      %3570 = vmatmul.f32.gmra.mxu0 %v3456
      %v3571 = vpop.f32.mrf.mxu0
      %v3572 = vadd.f32 %v3362, %v3571
      %3573 = vmatmul.f32.gmra.mxu0 %v3459
      %v3574 = vpop.f32.mrf.mxu0
      %v3575 = vadd.f32 %v3362, %v3574
      %3576 = vdwg.mxu0
      %v3577 = vmax.f32 %v3482, 0.0
      %v3578 = vmax.f32 %v3485, 0.0
      %v3579 = vmax.f32 %v3488, 0.0
      %v3580 = vmax.f32 %v3491, 0.0
      %v3581 = vmax.f32 %v3494, 0.0
      %v3582 = vmax.f32 %v3497, 0.0
      %v3583 = vmax.f32 %v3500, 0.0
      %v3584 = vmax.f32 %v3503, 0.0
      %v3585 = vmax.f32 %v3506, 0.0
      %v3586 = vmax.f32 %v3509, 0.0
      %v3587 = vmax.f32 %v3512, 0.0
      %v3588 = vmax.f32 %v3515, 0.0
      %v3589 = vmax.f32 %v3518, 0.0
      %v3590 = vmax.f32 %v3521, 0.0
      %v3591 = vmax.f32 %v3524, 0.0
      %v3592 = vmax.f32 %v3527, 0.0
      %v3593 = vmax.f32 %v3530, 0.0
      %v3594 = vmax.f32 %v3533, 0.0
      %v3595 = vmax.f32 %v3536, 0.0
      %v3596 = vmax.f32 %v3539, 0.0
      %v3597 = vmax.f32 %v3542, 0.0
      %v3598 = vmax.f32 %v3545, 0.0
      %v3599 = vmax.f32 %v3548, 0.0
      %v3600 = vmax.f32 %v3551, 0.0
      %v3601 = vmax.f32 %v3554, 0.0
      %v3602 = vmax.f32 %v3557, 0.0
      %v3603 = vmax.f32 %v3560, 0.0
      %v3604 = vmax.f32 %v3563, 0.0
      %v3605 = vmax.f32 %v3566, 0.0
      %v3606 = vmax.f32 %v3569, 0.0
      %v3607 = vmax.f32 %v3572, 0.0
      %v3608 = vmax.f32 %v3575, 0.0
      %v3609 = vld [vmem:[%s5] sm:$0xf]
      %v3610 = vld [vmem:[%s6] sm:$0x1]
      %v3612 = vperm.slane %v3610, 0
      %v3615 = vsel %vm370, %v3577, 0
      %v3618 = vsel %vm370, %v3578, 0
      %v3621 = vsel %vm370, %v3579, 0
      %v3624 = vsel %vm370, %v3580, 0
      %v3627 = vsel %vm370, %v3581, 0
      %v3630 = vsel %vm370, %v3582, 0
      %v3633 = vsel %vm370, %v3583, 0
      %v3636 = vsel %vm370, %v3584, 0
      %v3639 = vsel %vm370, %v3585, 0
      %v3642 = vsel %vm370, %v3586, 0
      %v3645 = vsel %vm370, %v3587, 0
      %v3648 = vsel %vm370, %v3588, 0
      %v3651 = vsel %vm370, %v3589, 0
      %v3654 = vsel %vm370, %v3590, 0
      %v3657 = vsel %vm370, %v3591, 0
      %v3660 = vsel %vm370, %v3592, 0
      %v3663 = vsel %vm370, %v3593, 0
      %v3666 = vsel %vm370, %v3594, 0
      %v3669 = vsel %vm370, %v3595, 0
      %v3672 = vsel %vm370, %v3596, 0
      %v3675 = vsel %vm370, %v3597, 0
      %v3678 = vsel %vm370, %v3598, 0
      %v3681 = vsel %vm370, %v3599, 0
      %v3684 = vsel %vm370, %v3600, 0
      %v3687 = vsel %vm370, %v3601, 0
      %v3690 = vsel %vm370, %v3602, 0
      %v3693 = vsel %vm370, %v3603, 0
      %v3696 = vsel %vm370, %v3604, 0
      %v3699 = vsel %vm370, %v3605, 0
      %v3702 = vsel %vm370, %v3606, 0
      %v3705 = vsel %vm370, %v3607, 0
      %v3708 = vsel %vm370, %v3608, 0
      %v3711 = vsel %vm467, %v3609, 0
      %3713 = vmatpush.msra.mxu0 0.0
      %3714 = vmatpush.msra.mxu0 0.0
      %3715 = vmatpush.msra.mxu0 0.0
      %3716 = vmatpush.msra.mxu0 0.0
      %3717 = vmatpush.msra.mxu0 0.0
      %3718 = vmatpush.msra.mxu0 0.0
      %3719 = vmatpush.msra.mxu0 0.0
      %3720 = vmatpush.msra.mxu0 0.0
      %3721 = vmatpush.msra.mxu0 0.0
      %3722 = vmatpush.msra.mxu0 0.0
      %3723 = vmatpush.msra.mxu0 0.0
      %3724 = vmatpush.msra.mxu0 0.0
      %3725 = vmatpush.msra.mxu0 0.0
      %3726 = vmatpush.msra.mxu0 0.0
      %3727 = vmatpush.msra.mxu0 0.0
      %3728 = vmatpush.msra.mxu0 %v3711
      %3729 = vmatmul.f32.gmra.mxu0 %v3615
      %v3730 = vpop.f32.mrf.mxu0
      %v3731 = vadd.f32 %v3612, %v3730
      %3732 = vmatmul.f32.gmra.mxu0 %v3618
      %v3733 = vpop.f32.mrf.mxu0
      %v3734 = vadd.f32 %v3612, %v3733
      %3735 = vmatmul.f32.gmra.mxu0 %v3621
      %v3736 = vpop.f32.mrf.mxu0
      %v3737 = vadd.f32 %v3612, %v3736
      %3738 = vmatmul.f32.gmra.mxu0 %v3624
      %v3739 = vpop.f32.mrf.mxu0
      %v3740 = vadd.f32 %v3612, %v3739
      %3741 = vmatmul.f32.gmra.mxu0 %v3627
      %v3742 = vpop.f32.mrf.mxu0
      %v3743 = vadd.f32 %v3612, %v3742
      %3744 = vmatmul.f32.gmra.mxu0 %v3630
      %v3745 = vpop.f32.mrf.mxu0
      %v3746 = vadd.f32 %v3612, %v3745
      %3747 = vmatmul.f32.gmra.mxu0 %v3633
      %v3748 = vpop.f32.mrf.mxu0
      %v3749 = vadd.f32 %v3612, %v3748
      %3750 = vmatmul.f32.gmra.mxu0 %v3636
      %v3751 = vpop.f32.mrf.mxu0
      %v3752 = vadd.f32 %v3612, %v3751
      %3753 = vmatmul.f32.gmra.mxu0 %v3639
      %v3754 = vpop.f32.mrf.mxu0
      %v3755 = vadd.f32 %v3612, %v3754
      %3756 = vmatmul.f32.gmra.mxu0 %v3642
      %v3757 = vpop.f32.mrf.mxu0
      %v3758 = vadd.f32 %v3612, %v3757
      %3759 = vmatmul.f32.gmra.mxu0 %v3645
      %v3760 = vpop.f32.mrf.mxu0
      %v3761 = vadd.f32 %v3612, %v3760
      %3762 = vmatmul.f32.gmra.mxu0 %v3648
      %v3763 = vpop.f32.mrf.mxu0
      %v3764 = vadd.f32 %v3612, %v3763
      %3765 = vmatmul.f32.gmra.mxu0 %v3651
      %v3766 = vpop.f32.mrf.mxu0
      %v3767 = vadd.f32 %v3612, %v3766
      %3768 = vmatmul.f32.gmra.mxu0 %v3654
      %v3769 = vpop.f32.mrf.mxu0
      %v3770 = vadd.f32 %v3612, %v3769
      %3771 = vmatmul.f32.gmra.mxu0 %v3657
      %v3772 = vpop.f32.mrf.mxu0
      %v3773 = vadd.f32 %v3612, %v3772
      %3774 = vmatmul.f32.gmra.mxu0 %v3660
      %v3775 = vpop.f32.mrf.mxu0
      %v3776 = vadd.f32 %v3612, %v3775
      %3777 = vmatmul.f32.gmra.mxu0 %v3663
      %v3778 = vpop.f32.mrf.mxu0
      %v3779 = vadd.f32 %v3612, %v3778
      %3780 = vmatmul.f32.gmra.mxu0 %v3666
      %v3781 = vpop.f32.mrf.mxu0
      %v3782 = vadd.f32 %v3612, %v3781
      %3783 = vmatmul.f32.gmra.mxu0 %v3669
      %v3784 = vpop.f32.mrf.mxu0
      %v3785 = vadd.f32 %v3612, %v3784
      %3786 = vmatmul.f32.gmra.mxu0 %v3672
      %v3787 = vpop.f32.mrf.mxu0
      %v3788 = vadd.f32 %v3612, %v3787
      %3789 = vmatmul.f32.gmra.mxu0 %v3675
      %v3790 = vpop.f32.mrf.mxu0
      %v3791 = vadd.f32 %v3612, %v3790
      %3792 = vmatmul.f32.gmra.mxu0 %v3678
      %v3793 = vpop.f32.mrf.mxu0
      %v3794 = vadd.f32 %v3612, %v3793
      %3795 = vmatmul.f32.gmra.mxu0 %v3681
      %v3796 = vpop.f32.mrf.mxu0
      %v3797 = vadd.f32 %v3612, %v3796
      %3798 = vmatmul.f32.gmra.mxu0 %v3684
      %v3799 = vpop.f32.mrf.mxu0
      %v3800 = vadd.f32 %v3612, %v3799
      %3801 = vmatmul.f32.gmra.mxu0 %v3687
      %v3802 = vpop.f32.mrf.mxu0
      %v3803 = vadd.f32 %v3612, %v3802
      %3804 = vmatmul.f32.gmra.mxu0 %v3690
      %v3805 = vpop.f32.mrf.mxu0
      %v3806 = vadd.f32 %v3612, %v3805
      %3807 = vmatmul.f32.gmra.mxu0 %v3693
      %v3808 = vpop.f32.mrf.mxu0
      %v3809 = vadd.f32 %v3612, %v3808
      %3810 = vmatmul.f32.gmra.mxu0 %v3696
      %v3811 = vpop.f32.mrf.mxu0
      %v3812 = vadd.f32 %v3612, %v3811
      %3813 = vmatmul.f32.gmra.mxu0 %v3699
      %v3814 = vpop.f32.mrf.mxu0
      %v3815 = vadd.f32 %v3612, %v3814
      %3816 = vmatmul.f32.gmra.mxu0 %v3702
      %v3817 = vpop.f32.mrf.mxu0
      %v3818 = vadd.f32 %v3612, %v3817
      %3819 = vmatmul.f32.gmra.mxu0 %v3705
      %v3820 = vpop.f32.mrf.mxu0
      %v3821 = vadd.f32 %v3612, %v3820
      %3822 = vmatmul.f32.gmra.mxu0 %v3708
      %v3823 = vpop.f32.mrf.mxu0
      %v3824 = vadd.f32 %v3612, %v3823
      %3825 = vdwg.mxu0
      %v3826 = vld [vmem:[%s7] sm:$0xf]
      %v3827 = vld [vmem:[%s8] sm:$0x1]
      %v3829 = vperm.slane %v3827, 0
      %v3832 = vsel %vm467, %v3826, 0
      %3834 = vmatpush.msra.mxu0 0.0
      %3835 = vmatpush.msra.mxu0 0.0
      %3836 = vmatpush.msra.mxu0 0.0
      %3837 = vmatpush.msra.mxu0 0.0
      %3838 = vmatpush.msra.mxu0 0.0
      %3839 = vmatpush.msra.mxu0 0.0
      %3840 = vmatpush.msra.mxu0 0.0
      %3841 = vmatpush.msra.mxu0 0.0
      %3842 = vmatpush.msra.mxu0 0.0
      %3843 = vmatpush.msra.mxu0 0.0
      %3844 = vmatpush.msra.mxu0 0.0
      %3845 = vmatpush.msra.mxu0 0.0
      %3846 = vmatpush.msra.mxu0 0.0
      %3847 = vmatpush.msra.mxu0 0.0
      %3848 = vmatpush.msra.mxu0 0.0
      %3849 = vmatpush.msra.mxu0 %v3832
      %3850 = vmatmul.f32.gmra.mxu0 %v372
      %v3851 = vpop.f32.mrf.mxu0
      %v3852 = vadd.f32 %v3829, %v3851
      %3853 = vmatmul.f32.gmra.mxu0 %v375
      %v3854 = vpop.f32.mrf.mxu0
      %v3855 = vadd.f32 %v3829, %v3854
      %3856 = vmatmul.f32.gmra.mxu0 %v378
      %v3857 = vpop.f32.mrf.mxu0
      %v3858 = vadd.f32 %v3829, %v3857
      %3859 = vmatmul.f32.gmra.mxu0 %v381
      %v3860 = vpop.f32.mrf.mxu0
      %v3861 = vadd.f32 %v3829, %v3860
      %3862 = vmatmul.f32.gmra.mxu0 %v384
      %v3863 = vpop.f32.mrf.mxu0
      %v3864 = vadd.f32 %v3829, %v3863
      %3865 = vmatmul.f32.gmra.mxu0 %v387
      %v3866 = vpop.f32.mrf.mxu0
      %v3867 = vadd.f32 %v3829, %v3866
      %3868 = vmatmul.f32.gmra.mxu0 %v390
      %v3869 = vpop.f32.mrf.mxu0
      %v3870 = vadd.f32 %v3829, %v3869
      %3871 = vmatmul.f32.gmra.mxu0 %v393
      %v3872 = vpop.f32.mrf.mxu0
      %v3873 = vadd.f32 %v3829, %v3872
      %3874 = vmatmul.f32.gmra.mxu0 %v396
      %v3875 = vpop.f32.mrf.mxu0
      %v3876 = vadd.f32 %v3829, %v3875
      %3877 = vmatmul.f32.gmra.mxu0 %v399
      %v3878 = vpop.f32.mrf.mxu0
      %v3879 = vadd.f32 %v3829, %v3878
      %3880 = vmatmul.f32.gmra.mxu0 %v402
      %v3881 = vpop.f32.mrf.mxu0
      %v3882 = vadd.f32 %v3829, %v3881
      %3883 = vmatmul.f32.gmra.mxu0 %v405
      %v3884 = vpop.f32.mrf.mxu0
      %v3885 = vadd.f32 %v3829, %v3884
      %3886 = vmatmul.f32.gmra.mxu0 %v408
      %v3887 = vpop.f32.mrf.mxu0
      %v3888 = vadd.f32 %v3829, %v3887
      %3889 = vmatmul.f32.gmra.mxu0 %v411
      %v3890 = vpop.f32.mrf.mxu0
      %v3891 = vadd.f32 %v3829, %v3890
      %3892 = vmatmul.f32.gmra.mxu0 %v414
      %v3893 = vpop.f32.mrf.mxu0
      %v3894 = vadd.f32 %v3829, %v3893
      %3895 = vmatmul.f32.gmra.mxu0 %v417
      %v3896 = vpop.f32.mrf.mxu0
      %v3897 = vadd.f32 %v3829, %v3896
      %3898 = vmatmul.f32.gmra.mxu0 %v420
      %v3899 = vpop.f32.mrf.mxu0
      %v3900 = vadd.f32 %v3829, %v3899
      %3901 = vmatmul.f32.gmra.mxu0 %v423
      %v3902 = vpop.f32.mrf.mxu0
      %v3903 = vadd.f32 %v3829, %v3902
      %3904 = vmatmul.f32.gmra.mxu0 %v426
      %v3905 = vpop.f32.mrf.mxu0
      %v3906 = vadd.f32 %v3829, %v3905
      %3907 = vmatmul.f32.gmra.mxu0 %v429
      %v3908 = vpop.f32.mrf.mxu0
      %v3909 = vadd.f32 %v3829, %v3908
      %3910 = vmatmul.f32.gmra.mxu0 %v432
      %v3911 = vpop.f32.mrf.mxu0
      %v3912 = vadd.f32 %v3829, %v3911
      %3913 = vmatmul.f32.gmra.mxu0 %v435
      %v3914 = vpop.f32.mrf.mxu0
      %v3915 = vadd.f32 %v3829, %v3914
      %3916 = vmatmul.f32.gmra.mxu0 %v438
      %v3917 = vpop.f32.mrf.mxu0
      %v3918 = vadd.f32 %v3829, %v3917
      %3919 = vmatmul.f32.gmra.mxu0 %v441
      %v3920 = vpop.f32.mrf.mxu0
      %v3921 = vadd.f32 %v3829, %v3920
      %3922 = vmatmul.f32.gmra.mxu0 %v444
      %v3923 = vpop.f32.mrf.mxu0
      %v3924 = vadd.f32 %v3829, %v3923
      %3925 = vmatmul.f32.gmra.mxu0 %v447
      %v3926 = vpop.f32.mrf.mxu0
      %v3927 = vadd.f32 %v3829, %v3926
      %3928 = vmatmul.f32.gmra.mxu0 %v450
      %v3929 = vpop.f32.mrf.mxu0
      %v3930 = vadd.f32 %v3829, %v3929
      %3931 = vmatmul.f32.gmra.mxu0 %v453
      %v3932 = vpop.f32.mrf.mxu0
      %v3933 = vadd.f32 %v3829, %v3932
      %3934 = vmatmul.f32.gmra.mxu0 %v456
      %v3935 = vpop.f32.mrf.mxu0
      %v3936 = vadd.f32 %v3829, %v3935
      %3937 = vmatmul.f32.gmra.mxu0 %v459
      %v3938 = vpop.f32.mrf.mxu0
      %v3939 = vadd.f32 %v3829, %v3938
      %3940 = vmatmul.f32.gmra.mxu0 %v462
      %v3941 = vpop.f32.mrf.mxu0
      %v3942 = vadd.f32 %v3829, %v3941
      %3943 = vmatmul.f32.gmra.mxu0 %v465
      %v3944 = vpop.f32.mrf.mxu0
      %v3945 = vadd.f32 %v3829, %v3944
      %3946 = vdwg.mxu0
      %v3947 = vadd.f32 %v3731, %v3852
      %v3948 = vadd.f32 %v3734, %v3855
      %v3949 = vadd.f32 %v3737, %v3858
      %v3950 = vadd.f32 %v3740, %v3861
      %v3951 = vadd.f32 %v3743, %v3864
      %v3952 = vadd.f32 %v3746, %v3867
      %v3953 = vadd.f32 %v3749, %v3870
      %v3954 = vadd.f32 %v3752, %v3873
      %v3955 = vadd.f32 %v3755, %v3876
      %v3956 = vadd.f32 %v3758, %v3879
      %v3957 = vadd.f32 %v3761, %v3882
      %v3958 = vadd.f32 %v3764, %v3885
      %v3959 = vadd.f32 %v3767, %v3888
      %v3960 = vadd.f32 %v3770, %v3891
      %v3961 = vadd.f32 %v3773, %v3894
      %v3962 = vadd.f32 %v3776, %v3897
      %v3963 = vadd.f32 %v3779, %v3900
      %v3964 = vadd.f32 %v3782, %v3903
      %v3965 = vadd.f32 %v3785, %v3906
      %v3966 = vadd.f32 %v3788, %v3909
      %v3967 = vadd.f32 %v3791, %v3912
      %v3968 = vadd.f32 %v3794, %v3915
      %v3969 = vadd.f32 %v3797, %v3918
      %v3970 = vadd.f32 %v3800, %v3921
      %v3971 = vadd.f32 %v3803, %v3924
      %v3972 = vadd.f32 %v3806, %v3927
      %v3973 = vadd.f32 %v3809, %v3930
      %v3974 = vadd.f32 %v3812, %v3933
      %v3975 = vadd.f32 %v3815, %v3936
      %v3976 = vadd.f32 %v3818, %v3939
      %v3977 = vadd.f32 %v3821, %v3942
      %v3978 = vadd.f32 %v3824, %v3945
      %v3979 = vmax.f32 %v3947, 0.0
      %v3980 = vmax.f32 %v3948, 0.0
      %v3981 = vmax.f32 %v3949, 0.0
      %v3982 = vmax.f32 %v3950, 0.0
      %v3983 = vmax.f32 %v3951, 0.0
      %v3984 = vmax.f32 %v3952, 0.0
      %v3985 = vmax.f32 %v3953, 0.0
      %v3986 = vmax.f32 %v3954, 0.0
      %v3987 = vmax.f32 %v3955, 0.0
      %v3988 = vmax.f32 %v3956, 0.0
      %v3989 = vmax.f32 %v3957, 0.0
      %v3990 = vmax.f32 %v3958, 0.0
      %v3991 = vmax.f32 %v3959, 0.0
      %v3992 = vmax.f32 %v3960, 0.0
      %v3993 = vmax.f32 %v3961, 0.0
      %v3994 = vmax.f32 %v3962, 0.0
      %v3995 = vmax.f32 %v3963, 0.0
      %v3996 = vmax.f32 %v3964, 0.0
      %v3997 = vmax.f32 %v3965, 0.0
      %v3998 = vmax.f32 %v3966, 0.0
      %v3999 = vmax.f32 %v3967, 0.0
      %v4000 = vmax.f32 %v3968, 0.0
      %v4001 = vmax.f32 %v3969, 0.0
      %v4002 = vmax.f32 %v3970, 0.0
      %v4003 = vmax.f32 %v3971, 0.0
      %v4004 = vmax.f32 %v3972, 0.0
      %v4005 = vmax.f32 %v3973, 0.0
      %v4006 = vmax.f32 %v3974, 0.0
      %v4007 = vmax.f32 %v3975, 0.0
      %v4008 = vmax.f32 %v3976, 0.0
      %v4009 = vmax.f32 %v3977, 0.0
      %v4010 = vmax.f32 %v3978, 0.0
      %4011 = vst.msk [vmem:[%s332] sm:$0xff] %vm3190, %v3979
      %4012 = vst.msk [vmem:[%s332 + $0x8] sm:$0xff] %vm3190, %v3980
      %4013 = vst.msk [vmem:[%s332 + $0x10] sm:$0xff] %vm3190, %v3981
      %4014 = vst.msk [vmem:[%s332 + $0x18] sm:$0xff] %vm3190, %v3982
      %4015 = vst.msk [vmem:[%s332 + $0x20] sm:$0xff] %vm3190, %v3983
      %4016 = vst.msk [vmem:[%s332 + $0x28] sm:$0xff] %vm3190, %v3984
      %4017 = vst.msk [vmem:[%s332 + $0x30] sm:$0xff] %vm3190, %v3985
      %4018 = vst.msk [vmem:[%s332 + $0x38] sm:$0xff] %vm3190, %v3986
      %4019 = vst.msk [vmem:[%s332 + $0x40] sm:$0xff] %vm3190, %v3987
      %4020 = vst.msk [vmem:[%s332 + $0x48] sm:$0xff] %vm3190, %v3988
      %4021 = vst.msk [vmem:[%s332 + $0x50] sm:$0xff] %vm3190, %v3989
      %4022 = vst.msk [vmem:[%s332 + $0x58] sm:$0xff] %vm3190, %v3990
      %4023 = vst.msk [vmem:[%s332 + $0x60] sm:$0xff] %vm3190, %v3991
      %4024 = vst.msk [vmem:[%s332 + $0x68] sm:$0xff] %vm3190, %v3992
      %4025 = vst.msk [vmem:[%s332 + $0x70] sm:$0xff] %vm3190, %v3993
      %4026 = vst.msk [vmem:[%s332 + $0x78] sm:$0xff] %vm3190, %v3994
      %4027 = vst.msk [vmem:[%s332 + $0x80] sm:$0xff] %vm3190, %v3995
      %4028 = vst.msk [vmem:[%s332 + $0x88] sm:$0xff] %vm3190, %v3996
      %4029 = vst.msk [vmem:[%s332 + $0x90] sm:$0xff] %vm3190, %v3997
      %4030 = vst.msk [vmem:[%s332 + $0x98] sm:$0xff] %vm3190, %v3998
      %4031 = vst.msk [vmem:[%s332 + $0xa0] sm:$0xff] %vm3190, %v3999
      %4032 = vst.msk [vmem:[%s332 + $0xa8] sm:$0xff] %vm3190, %v4000
      %4033 = vst.msk [vmem:[%s332 + $0xb0] sm:$0xff] %vm3190, %v4001
      %4034 = vst.msk [vmem:[%s332 + $0xb8] sm:$0xff] %vm3190, %v4002
      %4035 = vst.msk [vmem:[%s332 + $0xc0] sm:$0xff] %vm3190, %v4003
      %4036 = vst.msk [vmem:[%s332 + $0xc8] sm:$0xff] %vm3190, %v4004
      %4037 = vst.msk [vmem:[%s332 + $0xd0] sm:$0xff] %vm3190, %v4005
      %4038 = vst.msk [vmem:[%s332 + $0xd8] sm:$0xff] %vm3190, %v4006
      %4039 = vst.msk [vmem:[%s332 + $0xe0] sm:$0xff] %vm3190, %v4007
      %4040 = vst.msk [vmem:[%s332 + $0xe8] sm:$0xff] %vm3190, %v4008
      %4041 = vst.msk [vmem:[%s332 + $0xf0] sm:$0xff] %vm3190, %v4009
      %4042 = vst.msk [vmem:[%s332 + $0xf8] sm:$0xff] %vm3190, %v4010
      %p4043 = scmp.lt.s32.totalorder %s20, 1
      %s4044 = scalar_select %p4043, %s20, 1
      %s4045 = smul.addr %s4044, 32
      %s4046 = smul.addr %s4045, 8
      %s4047 = scalar_lea.vmem %s9, %s4046
      // Predicated region
      $region57: #{residual_block_forward.1} parent=55 // pred_check
        %p4048 = pneg %p232
      $region58: #{residual_block_forward.1} parent=55 // pred_check_branch
        %4050 = sbr.rel (%p4048) target = $region60
      $region59: #{residual_block_forward.1} parent=55 // pred_region
        _
      $region60: #{residual_block_forward.1} parent=55 // pred_fallthru
        _
    $region56: #{residual_block_forward.1} parent=5 // pred_fallthru
      _
    %p4051 = scmp.le.s32.totalorder 2, %s15
    // Predicated region
    $region61: #{residual_block_forward.1} parent=5 // pred_check
      %p4052 = pneg %p4051
    $region62: #{residual_block_forward.1} parent=5 // pred_check_branch
      %4054 = sbr.rel (%p4052) target = $region64
    $region63: #{residual_block_forward.1} parent=5 // pred_region
      %s4055 = ssub.s32 %s15, 2
      // Predicated region
      $region65: #{residual_block_forward.1} parent=63 // pred_check
        %p4056 = pneg %p238
      $region66: #{residual_block_forward.1} parent=63 // pred_check_branch
        %4058 = sbr.rel (%p4056) target = $region68
      $region67: #{residual_block_forward.1} parent=63 // pred_region
        %p4059 = scmp.lt.s32.totalorder %s21, 1
        %s4060 = scalar_select %p4059, %s21, 1
        %s4061 = smul.addr %s4060, 32
        %s4062 = smul.addr %s4061, 8
        %s4063 = scalar_lea.vmem %s9, %s4062
      $region68: #{residual_block_forward.1} parent=63 // pred_fallthru
        _
    $region64: #{residual_block_forward.1} parent=5 // pred_fallthru
      _
  $region6: #{residual_block_forward.1} parent=0 // loop_footer
    %s19 = sadd.s32 1, %s15
  $region7: #{residual_block_forward.1} parent=0 // loop_footer_branch
    %14 = sbr.rel target = $region3
  $region8: #{residual_block_forward.1} parent=0 // loop_exit
    _

</llo_original>
